<compile_context>
chip_gen: v6e
topology: v6e:2x2x1
jax: 0.10.0
libtpu: 0.0.40
codegen_flags: <defaults>
</compile_context>

<pallas_src>
import numpy as np
import jax
import jax.numpy as jnp
from jax.experimental import pallas as pl
from jax.experimental.pallas import tpu as pltpu


def _bilinear_interp_matrix(out_size: int, in_size: int) -> np.ndarray:
    """Interpolation matrix matching F.interpolate(mode='bilinear', align_corners=False)."""
    m = np.zeros((out_size, in_size), dtype=np.float32)
    if in_size == 1:
        m[:, 0] = 1.0
        return m
    scale = in_size / out_size
    for o in range(out_size):
        src = (o + 0.5) * scale - 0.5
        if src < 0.0:
            src = 0.0
        i0 = int(np.floor(src))
        if i0 > in_size - 1:
            i0 = in_size - 1
        i1 = min(i0 + 1, in_size - 1)
        frac = src - i0
        m[o, i0] += 1.0 - frac
        m[o, i1] += frac
    return m


def _make_head_kernel(C, HID, H, W, TH, TWP):
    HW = H * W
    OFF7, L7 = 3 * W + 3, HW + 6 * W + 6     # row-padded flat buffer for the 7x7 taps
    OFF3, L3 = W + 1, HW + 2 * W + 2         # row-padded flat buffer for the 3x3 taps
    inv_hw = 1.0 / float(HW)

    def kernel(x_ref, w1_ref, b1_ref, w2_ref, b2_ref,
               w7t_ref, b7_ref, mask7_ref,
               wdep_ref, bdep_ref, mask3_ref,
               wp1_ref, bp1_ref, wp2_ref, bp2_ref,
               rmat_ref, cmat_ref,
               out_ref,
               mrow_ref, xsrow_ref, dsp_ref):
        f32 = jnp.float32
        x = x_ref[...]                                                  # (C, HW) lane-dense

        # ---- channel attention (squeeze-excite) ----
        avg = jnp.sum(x, axis=1, keepdims=True) * inv_hw                # (C, 1)
        h1 = jnp.maximum(
            jnp.dot(w1_ref[...], avg, preferred_element_type=f32) + b1_ref[...], 0.0)
        cw = jax.nn.sigmoid(
            jnp.dot(w2_ref[...], h1, preferred_element_type=f32) + b2_ref[...])   # (C, 1)
        xc = x * cw                                                     # (C, HW)

        # ---- spatial attention: 7x7 conv (C -> 1), channel-mix on the MXU ----
        mtaps = jnp.dot(w7t_ref[...], xc, preferred_element_type=f32)   # (49, HW)
        mrow_ref[:, 0:OFF7] = jnp.zeros((49, OFF7), f32)                 # zero halo strips only
        mrow_ref[:, OFF7 + HW:L7] = jnp.zeros((49, L7 - OFF7 - HW), f32)
        mrow_ref[:, OFF7:OFF7 + HW] = mtaps
        sacc = jnp.broadcast_to(b7_ref[...], (1, HW))                    # bias-initialised
        for k in range(49):
            dh, dw = divmod(k, 7)
            s = OFF7 + (dh - 3) * W + (dw - 3)
            row = mrow_ref[k:k + 1, s:s + HW]                            # (1, HW)
            if dw != 3:                                                  # horizontal OOB mask
                row = row * mask7_ref[dw:dw + 1, :]
            sacc = sacc + row
        sw = jax.nn.sigmoid(sacc)                                        # (1, HW)
        xs = xc * sw                                                     # (C, HW)

        # ---- depthwise 3x3 (+ folded BN1) + ReLU, flat layout ----
        xsrow_ref[:, 0:OFF3] = jnp.zeros((C, OFF3), f32)
        xsrow_ref[:, OFF3 + HW:L3] = jnp.zeros((C, L3 - OFF3 - HW), f32)
        xsrow_ref[:, OFF3:OFF3 + HW] = xs
        wdep = wdep_ref[...]                                             # (C, 9)
        acc3 = jnp.broadcast_to(bdep_ref[...], (C, HW))                  # bias-initialised
        for k in range(9):
            dh, dw = divmod(k, 3)
            s = OFF3 + (dh - 1) * W + (dw - 1)
            tap = xsrow_ref[:, s:s + HW]                                 # (C, HW)
            if dw != 1:
                tap = tap * mask3_ref[dw:dw + 1, :]
            acc3 = acc3 + wdep[:, k:k + 1] * tap
        y1 = jnp.maximum(acc3, 0.0)                                      # (C, HW)

        # ---- 1x1 convs on the MXU (BN2 folded into wp1/bp1) ----
        z = jnp.maximum(
            jnp.dot(wp1_ref[...], y1, preferred_element_type=f32) + bp1_ref[...], 0.0)   # (HID, HW)
        dmap = jnp.dot(wp2_ref[...], z, preferred_element_type=f32) + bp2_ref[...]       # (1, HW)

        # ---- bilinear resize: un-flatten rows, lane-dense matmul first ----
        for h in range(H):   # explicit (1,HW)->(H,W) unflatten via tiny row copies (compile-safe)
            dsp_ref[h:h + 1, :] = dmap[:, h * W:(h + 1) * W]
        t = jnp.dot(dsp_ref[...], cmat_ref[...], preferred_element_type=f32)     # (H, TWP) dense
        out_ref[...] = jnp.dot(rmat_ref[...], t, preferred_element_type=f32)     # (TH, TWP)

    return kernel


def light_density_prediction_head(x, params, target_size=(384, 512)):
    x = x.astype(jnp.float32)
    B, C, H, W = x.shape
    HW = H * W
    HID = params['ca_w1'].shape[0]
    TH, TW = int(target_size[0]), int(target_size[1])
    TWP = ((TW + 127) // 128) * 128          # lane-dense output block; sliced back below
    eps = 1e-5

    # Fold eval-mode BatchNorm into the adjacent convs.
    s1 = params['bn1_gamma'] / jnp.sqrt(params['bn1_var'] + eps)
    t1 = params['bn1_beta'] - params['bn1_mean'] * s1
    s2 = params['bn2_gamma'] / jnp.sqrt(params['bn2_var'] + eps)
    t2 = params['bn2_beta'] - params['bn2_mean'] * s2

    w1 = params['ca_w1'].reshape(HID, C).astype(jnp.float32)
    b1 = params['ca_b1'].reshape(HID, 1).astype(jnp.float32)
    w2 = params['ca_w2'].reshape(C, HID).astype(jnp.float32)
    b2 = params['ca_b2'].reshape(C, 1).astype(jnp.float32)
    w7t = params['sa_w'].reshape(C, 49).T.astype(jnp.float32)            # (49, C)
    b7 = params['sa_b'].reshape(1, 1).astype(jnp.float32)
    wdep = (params['dw_w'].reshape(C, 9) * s1[:, None]).astype(jnp.float32)
    bdep = (params['dw_b'] * s1 + t1).reshape(C, 1).astype(jnp.float32)
    wp1 = (params['pw1_w'].reshape(HID, C) * s2[:, None]).astype(jnp.float32)
    bp1 = (params['pw1_b'] * s2 + t2).reshape(HID, 1).astype(jnp.float32)
    wp2 = params['pw2_w'].reshape(1, HID).astype(jnp.float32)
    bp2 = params['pw2_b'].reshape(1, 1).astype(jnp.float32)

    # Column-validity masks for horizontal taps in the flat (row-major) layout.
    col = np.arange(HW) % W
    mask7 = jnp.asarray(np.stack(
        [((col + (j - 3) >= 0) & (col + (j - 3) < W)).astype(np.float32) for j in range(7)]))
    mask3 = jnp.asarray(np.stack(
        [((col + (j - 1) >= 0) & (col + (j - 1) < W)).astype(np.float32) for j in range(3)]))

    rmat = jnp.asarray(_bilinear_interp_matrix(TH, H))                   # (TH, H)
    cmat_np = np.zeros((W, TWP), np.float32)
    cmat_np[:, :TW] = _bilinear_interp_matrix(TW, W).T
    cmat = jnp.asarray(cmat_np)                                          # (W, TWP)

    x_flat = x.reshape(B, C, HW)

    kernel = _make_head_kernel(C, HID, H, W, TH, TWP)
    rep = lambda b: (0, 0)
    L7 = HW + 6 * W + 6
    L3 = HW + 2 * W + 2

    out = pl.pallas_call(
        kernel,
        out_shape=jax.ShapeDtypeStruct((B, 1, TH, TWP), jnp.float32),
        grid=(B,),
        in_specs=[
            pl.BlockSpec((None, C, HW), lambda b: (b, 0, 0)),            # x (one image, flattened)
            pl.BlockSpec((HID, C), rep), pl.BlockSpec((HID, 1), rep),    # channel-attn fc1
            pl.BlockSpec((C, HID), rep), pl.BlockSpec((C, 1), rep),      # channel-attn fc2
            pl.BlockSpec((49, C), rep), pl.BlockSpec((1, 1), rep),       # 7x7 tap weights / bias
            pl.BlockSpec((7, HW), rep),                                  # 7x7 column masks
            pl.BlockSpec((C, 9), rep), pl.BlockSpec((C, 1), rep),        # depthwise (BN1 folded)
            pl.BlockSpec((3, HW), rep),                                  # 3x3 column masks
            pl.BlockSpec((HID, C), rep), pl.BlockSpec((HID, 1), rep),    # pointwise1 (BN2 folded)
            pl.BlockSpec((1, HID), rep), pl.BlockSpec((1, 1), rep),      # pointwise2
            pl.BlockSpec((TH, H), rep), pl.BlockSpec((W, TWP), rep),     # resize matrices
        ],
        out_specs=pl.BlockSpec((None, None, TH, TWP), lambda b: (b, 0, 0, 0)),
        scratch_shapes=[pltpu.VMEM((49, L7), jnp.float32),               # row-padded 7x7 tap maps
                        pltpu.VMEM((C, L3), jnp.float32),                # row-padded xs
                        pltpu.VMEM((H, W), jnp.float32)],                # un-flattened density map
        compiler_params=pltpu.CompilerParams(
            dimension_semantics=("parallel",),
            vmem_limit_bytes=32 * 1024 * 1024),
    )(x_flat, w1, b1, w2, b2, w7t, b7, mask7, wdep, bdep, mask3,
      wp1, bp1, wp2, bp2, rmat, cmat)
    return out[..., :TW]


def init_params(key, in_channels, hidden_channels):
    C, HID = in_channels, hidden_channels
    ks = jax.random.split(key, 20)
    u = lambda k, shape, s: jax.random.uniform(k, shape, jnp.float32, -s, s)
    return {
        'ca_w1': u(ks[0], (HID, C, 1, 1), 1.0 / np.sqrt(C)),
        'ca_b1': u(ks[1], (HID,), 1.0 / np.sqrt(C)),
        'ca_w2': u(ks[2], (C, HID, 1, 1), 1.0 / np.sqrt(HID)),
        'ca_b2': u(ks[3], (C,), 1.0 / np.sqrt(HID)),
        'sa_w': u(ks[4], (1, C, 7, 7), 1.0 / np.sqrt(C * 49)),
        'sa_b': u(ks[5], (1,), 1.0 / np.sqrt(C * 49)),
        'dw_w': u(ks[6], (C, 1, 3, 3), 1.0 / 3.0),
        'dw_b': u(ks[7], (C,), 1.0 / 3.0),
        'bn1_gamma': jax.random.uniform(ks[8], (C,), jnp.float32, 0.5, 1.5),
        'bn1_beta': 0.1 * jax.random.normal(ks[9], (C,), jnp.float32),
        'bn1_mean': 0.1 * jax.random.normal(ks[10], (C,), jnp.float32),
        'bn1_var': jax.random.uniform(ks[11], (C,), jnp.float32, 0.5, 1.5),
        'pw1_w': u(ks[12], (HID, C, 1, 1), 1.0 / np.sqrt(C)),
        'pw1_b': u(ks[13], (HID,), 1.0 / np.sqrt(C)),
        'bn2_gamma': jax.random.uniform(ks[14], (HID,), jnp.float32, 0.5, 1.5),
        'bn2_beta': 0.1 * jax.random.normal(ks[15], (HID,), jnp.float32),
        'bn2_mean': 0.1 * jax.random.normal(ks[16], (HID,), jnp.float32),
        'bn2_var': jax.random.uniform(ks[17], (HID,), jnp.float32, 0.5, 1.5),
        'pw2_w': u(ks[18], (1, HID, 1, 1), 1.0 / np.sqrt(HID)),
        'pw2_b': u(ks[19], (1,), 1.0 / np.sqrt(HID)),
    }


if __name__ == "__main__":
    key = jax.random.PRNGKey(0)
    kx, kp = jax.random.split(key)

    B, C, HID, H, W = 2, 16, 32, 16, 16
    target_size = (24, 32)

    x = jax.random.normal(kx, (B, C, H, W), jnp.float32)
    params = init_params(kp, C, HID)

    out = light_density_prediction_head(x, params, target_size=target_size)
    out = jax.block_until_ready(out)

    assert out.shape == (B, 1, target_size[0], target_size[1]), out.shape
    assert bool(jnp.all(jnp.isfinite(out)))
    print("KERNEL_OK")
</pallas_src>

<mosaic_0001>
module attributes {stable_mosaic.version = 11 : i64} {
  func.func @kernel(%arg0: i32, %arg1: memref<1x16x256xf32, #tpu.memory_space<vmem>>, %arg2: memref<32x16xf32, #tpu.memory_space<vmem>>, %arg3: memref<32x1xf32, #tpu.memory_space<vmem>>, %arg4: memref<16x32xf32, #tpu.memory_space<vmem>>, %arg5: memref<16x1xf32, #tpu.memory_space<vmem>>, %arg6: memref<49x16xf32, #tpu.memory_space<vmem>>, %arg7: memref<1x1xf32, #tpu.memory_space<vmem>>, %arg8: memref<7x256xf32, #tpu.memory_space<vmem>>, %arg9: memref<16x9xf32, #tpu.memory_space<vmem>>, %arg10: memref<16x1xf32, #tpu.memory_space<vmem>>, %arg11: memref<3x256xf32, #tpu.memory_space<vmem>>, %arg12: memref<32x16xf32, #tpu.memory_space<vmem>>, %arg13: memref<32x1xf32, #tpu.memory_space<vmem>>, %arg14: memref<1x32xf32, #tpu.memory_space<vmem>>, %arg15: memref<1x1xf32, #tpu.memory_space<vmem>>, %arg16: memref<24x16xf32, #tpu.memory_space<vmem>>, %arg17: memref<16x128xf32, #tpu.memory_space<vmem>>, %arg18: memref<1x1x24x128xf32, #tpu.memory_space<vmem>>, %arg19: memref<49x358xf32, #tpu.memory_space<vmem>>, %arg20: memref<16x290xf32, #tpu.memory_space<vmem>>, %arg21: memref<16x16xf32, #tpu.memory_space<vmem>>) attributes {dimension_semantics = [#tpu.dimension_semantics<parallel>], iteration_bounds = array<i64: 2>, scalar_prefetch = 0 : i64, scratch_operands = 3 : i64, tpu.core_type = #tpu.core_type<tc>, window_params = [{transform_indices = @transform_0, window_bounds = array<i64: 1, 16, 256>}, {pipeline_mode = #tpu.pipeline_mode<synchronous>, transform_indices = @transform_1, window_bounds = array<i64: 32, 16>}, {pipeline_mode = #tpu.pipeline_mode<synchronous>, transform_indices = @transform_2, window_bounds = array<i64: 32, 1>}, {pipeline_mode = #tpu.pipeline_mode<synchronous>, transform_indices = @transform_3, window_bounds = array<i64: 16, 32>}, {pipeline_mode = #tpu.pipeline_mode<synchronous>, transform_indices = @transform_4, window_bounds = array<i64: 16, 1>}, {pipeline_mode = #tpu.pipeline_mode<synchronous>, transform_indices = @transform_5, window_bounds = array<i64: 49, 16>}, {pipeline_mode = #tpu.pipeline_mode<synchronous>, transform_indices = @transform_6, window_bounds = array<i64: 1, 1>}, {pipeline_mode = #tpu.pipeline_mode<synchronous>, transform_indices = @transform_7, window_bounds = array<i64: 7, 256>}, {pipeline_mode = #tpu.pipeline_mode<synchronous>, transform_indices = @transform_8, window_bounds = array<i64: 16, 9>}, {pipeline_mode = #tpu.pipeline_mode<synchronous>, transform_indices = @transform_9, window_bounds = array<i64: 16, 1>}, {pipeline_mode = #tpu.pipeline_mode<synchronous>, transform_indices = @transform_10, window_bounds = array<i64: 3, 256>}, {pipeline_mode = #tpu.pipeline_mode<synchronous>, transform_indices = @transform_11, window_bounds = array<i64: 32, 16>}, {pipeline_mode = #tpu.pipeline_mode<synchronous>, transform_indices = @transform_12, window_bounds = array<i64: 32, 1>}, {pipeline_mode = #tpu.pipeline_mode<synchronous>, transform_indices = @transform_13, window_bounds = array<i64: 1, 32>}, {pipeline_mode = #tpu.pipeline_mode<synchronous>, transform_indices = @transform_14, window_bounds = array<i64: 1, 1>}, {pipeline_mode = #tpu.pipeline_mode<synchronous>, transform_indices = @transform_15, window_bounds = array<i64: 24, 16>}, {pipeline_mode = #tpu.pipeline_mode<synchronous>, transform_indices = @transform_16, window_bounds = array<i64: 16, 128>}, {transform_indices = @transform_17, window_bounds = array<i64: 1, 1, 24, 128>}]} {
    %c0 = arith.constant 0 : index
    %c0_0 = arith.constant 0 : index
    %c0_1 = arith.constant 0 : index
    %0 = vector.load %arg1[%c0, %c0_0, %c0_1] : memref<1x16x256xf32, #tpu.memory_space<vmem>>, vector<1x16x256xf32>
    %1 = vector.shape_cast %0 : vector<1x16x256xf32> to vector<16x256xf32>
    %cst = arith.constant dense<0.000000e+00> : vector<16xf32>
    %2 = vector.multi_reduction <add>, %1, %cst [1] : vector<16x256xf32> to vector<16xf32>
    %3 = vector.shape_cast %2 : vector<16xf32> to vector<16x1xf32>
    %cst_2 = arith.constant 3.906250e-03 : f32
    %4 = vector.broadcast %cst_2 : f32 to vector<16x1xf32>
    %5 = arith.mulf %3, %4 : vector<16x1xf32>
    %c0_3 = arith.constant 0 : index
    %c0_4 = arith.constant 0 : index
    %6 = vector.load %arg2[%c0_3, %c0_4] : memref<32x16xf32, #tpu.memory_space<vmem>>, vector<32x16xf32>
    %cst_5 = arith.constant dense<0.000000e+00> : vector<32x1xf32>
    %7 = tpu.matmul %6, %5, %cst_5 {dimension_numbers = #tpu.dot_dimension_numbers<[1], [0], [0], [1], [0, 0, 1, 1], [], []>} : vector<32x16xf32>, vector<16x1xf32>, vector<32x1xf32> -> vector<32x1xf32>
    %c0_6 = arith.constant 0 : index
    %c0_7 = arith.constant 0 : index
    %8 = vector.load %arg3[%c0_6, %c0_7] : memref<32x1xf32, #tpu.memory_space<vmem>>, vector<32x1xf32>
    %9 = arith.addf %7, %8 : vector<32x1xf32>
    %cst_8 = arith.constant 0.000000e+00 : f32
    %10 = vector.broadcast %cst_8 : f32 to vector<32x1xf32>
    %11 = arith.maximumf %9, %10 : vector<32x1xf32>
    %c0_9 = arith.constant 0 : index
    %c0_10 = arith.constant 0 : index
    %12 = vector.load %arg4[%c0_9, %c0_10] : memref<16x32xf32, #tpu.memory_space<vmem>>, vector<16x32xf32>
    %cst_11 = arith.constant dense<0.000000e+00> : vector<16x1xf32>
    %13 = tpu.matmul %12, %11, %cst_11 {dimension_numbers = #tpu.dot_dimension_numbers<[1], [0], [0], [1], [0, 0, 1, 1], [], []>} : vector<16x32xf32>, vector<32x1xf32>, vector<16x1xf32> -> vector<16x1xf32>
    %c0_12 = arith.constant 0 : index
    %c0_13 = arith.constant 0 : index
    %14 = vector.load %arg5[%c0_12, %c0_13] : memref<16x1xf32, #tpu.memory_space<vmem>>, vector<16x1xf32>
    %15 = arith.addf %13, %14 : vector<16x1xf32>
    %16 = arith.negf %15 : vector<16x1xf32>
    %17 = math.exp %16 : vector<16x1xf32>
    %cst_14 = arith.constant 1.000000e+00 : f32
    %18 = vector.broadcast %cst_14 : f32 to vector<16x1xf32>
    %19 = arith.addf %18, %17 : vector<16x1xf32>
    %20 = arith.divf %18, %19 : vector<16x1xf32>
    %21 = vector.broadcast %20 : vector<16x1xf32> to vector<16x256xf32>
    %22 = arith.mulf %1, %21 : vector<16x256xf32>
    %c0_15 = arith.constant 0 : index
    %c0_16 = arith.constant 0 : index
    %23 = vector.load %arg6[%c0_15, %c0_16] : memref<49x16xf32, #tpu.memory_space<vmem>>, vector<49x16xf32>
    %cst_17 = arith.constant dense<0.000000e+00> : vector<49x256xf32>
    %24 = tpu.matmul %23, %22, %cst_17 {dimension_numbers = #tpu.dot_dimension_numbers<[1], [0], [0], [1], [0, 0, 1, 1], [], []>} : vector<49x16xf32>, vector<16x256xf32>, vector<49x256xf32> -> vector<49x256xf32>
    %cst_18 = arith.constant 0.000000e+00 : f32
    %25 = vector.broadcast %cst_18 : f32 to vector<49x51xf32>
    %c0_19 = arith.constant 0 : index
    %c0_20 = arith.constant 0 : index
    %26 = vector.load %arg19[%c0_19, %c0_20] : memref<49x358xf32, #tpu.memory_space<vmem>>, vector<49x51xf32>
    tpu.vector_store %arg19[%c0_19, %c0_20], %25 {strides = array<i32>} : memref<49x358xf32, #tpu.memory_space<vmem>>, vector<49x51xf32>,
    %cst_21 = arith.constant 0.000000e+00 : f32
    %27 = vector.broadcast %cst_21 : f32 to vector<49x51xf32>
    %c0_22 = arith.constant 0 : index
    %c307 = arith.constant 307 : index
    %28 = vector.load %arg19[%c0_22, %c307] : memref<49x358xf32, #tpu.memory_space<vmem>>, vector<49x51xf32>
    tpu.vector_store %arg19[%c0_22, %c307], %27 {strides = array<i32>} : memref<49x358xf32, #tpu.memory_space<vmem>>, vector<49x51xf32>,
    %c0_23 = arith.constant 0 : index
    %c51 = arith.constant 51 : index
    %29 = vector.load %arg19[%c0_23, %c51] : memref<49x358xf32, #tpu.memory_space<vmem>>, vector<49x256xf32>
    tpu.vector_store %arg19[%c0_23, %c51], %24 {strides = array<i32>} : memref<49x358xf32, #tpu.memory_space<vmem>>, vector<49x256xf32>,
    %c0_24 = arith.constant 0 : index
    %c0_25 = arith.constant 0 : index
    %30 = vector.load %arg7[%c0_24, %c0_25] : memref<1x1xf32, #tpu.memory_space<vmem>>, vector<1x1xf32>
    %31 = vector.shape_cast %30 : vector<1x1xf32> to vector<1x1xf32>
    %32 = vector.broadcast %31 : vector<1x1xf32> to vector<1x256xf32>
    %c0_26 = arith.constant 0 : index
    %c0_27 = arith.constant 0 : index
    %33 = vector.load %arg19[%c0_26, %c0_27] : memref<49x358xf32, #tpu.memory_space<vmem>>, vector<1x256xf32>
    %c0_28 = arith.constant 0 : index
    %c0_29 = arith.constant 0 : index
    %34 = vector.load %arg8[%c0_28, %c0_29] : memref<7x256xf32, #tpu.memory_space<vmem>>, vector<1x256xf32>
    %35 = arith.mulf %33, %34 : vector<1x256xf32>
    %36 = arith.addf %32, %35 : vector<1x256xf32>
    %c1 = arith.constant 1 : index
    %c1_30 = arith.constant 1 : index
    %37 = vector.load %arg19[%c1, %c1_30] : memref<49x358xf32, #tpu.memory_space<vmem>>, vector<1x256xf32>
    %c1_31 = arith.constant 1 : index
    %c0_32 = arith.constant 0 : index
    %38 = vector.load %arg8[%c1_31, %c0_32] : memref<7x256xf32, #tpu.memory_space<vmem>>, vector<1x256xf32>
    %39 = arith.mulf %37, %38 : vector<1x256xf32>
    %40 = arith.addf %36, %39 : vector<1x256xf32>
    %c2 = arith.constant 2 : index
    %c2_33 = arith.constant 2 : index
    %41 = vector.load %arg19[%c2, %c2_33] : memref<49x358xf32, #tpu.memory_space<vmem>>, vector<1x256xf32>
    %c2_34 = arith.constant 2 : index
    %c0_35 = arith.constant 0 : index
    %42 = vector.load %arg8[%c2_34, %c0_35] : memref<7x256xf32, #tpu.memory_space<vmem>>, vector<1x256xf32>
    %43 = arith.mulf %41, %42 : vector<1x256xf32>
    %44 = arith.addf %40, %43 : vector<1x256xf32>
    %c3 = arith.constant 3 : index
    %c3_36 = arith.constant 3 : index
    %45 = vector.load %arg19[%c3, %c3_36] : memref<49x358xf32, #tpu.memory_space<vmem>>, vector<1x256xf32>
    %46 = arith.addf %44, %45 : vector<1x256xf32>
    %c4 = arith.constant 4 : index
    %c4_37 = arith.constant 4 : index
    %47 = vector.load %arg19[%c4, %c4_37] : memref<49x358xf32, #tpu.memory_space<vmem>>, vector<1x256xf32>
    %c4_38 = arith.constant 4 : index
    %c0_39 = arith.constant 0 : index
    %48 = vector.load %arg8[%c4_38, %c0_39] : memref<7x256xf32, #tpu.memory_space<vmem>>, vector<1x256xf32>
    %49 = arith.mulf %47, %48 : vector<1x256xf32>
    %50 = arith.addf %46, %49 : vector<1x256xf32>
    %c5 = arith.constant 5 : index
    %c5_40 = arith.constant 5 : index
    %51 = vector.load %arg19[%c5, %c5_40] : memref<49x358xf32, #tpu.memory_space<vmem>>, vector<1x256xf32>
    %c5_41 = arith.constant 5 : index
    %c0_42 = arith.constant 0 : index
    %52 = vector.load %arg8[%c5_41, %c0_42] : memref<7x256xf32, #tpu.memory_space<vmem>>, vector<1x256xf32>
    %53 = arith.mulf %51, %52 : vector<1x256xf32>
    %54 = arith.addf %50, %53 : vector<1x256xf32>
    %c6 = arith.constant 6 : index
    %c6_43 = arith.constant 6 : index
    %55 = vector.load %arg19[%c6, %c6_43] : memref<49x358xf32, #tpu.memory_space<vmem>>, vector<1x256xf32>
    %c6_44 = arith.constant 6 : index
    %c0_45 = arith.constant 0 : index
    %56 = vector.load %arg8[%c6_44, %c0_45] : memref<7x256xf32, #tpu.memory_space<vmem>>, vector<1x256xf32>
    %57 = arith.mulf %55, %56 : vector<1x256xf32>
    %58 = arith.addf %54, %57 : vector<1x256xf32>
    %c7 = arith.constant 7 : index
    %c16 = arith.constant 16 : index
    %59 = vector.load %arg19[%c7, %c16] : memref<49x358xf32, #tpu.memory_space<vmem>>, vector<1x256xf32>
    %c0_46 = arith.constant 0 : index
    %c0_47 = arith.constant 0 : index
    %60 = vector.load %arg8[%c0_46, %c0_47] : memref<7x256xf32, #tpu.memory_space<vmem>>, vector<1x256xf32>
    %61 = arith.mulf %59, %60 : vector<1x256xf32>
    %62 = arith.addf %58, %61 : vector<1x256xf32>
    %c8 = arith.constant 8 : index
    %c17 = arith.constant 17 : index
    %63 = vector.load %arg19[%c8, %c17] : memref<49x358xf32, #tpu.memory_space<vmem>>, vector<1x256xf32>
    %c1_48 = arith.constant 1 : index
    %c0_49 = arith.constant 0 : index
    %64 = vector.load %arg8[%c1_48, %c0_49] : memref<7x256xf32, #tpu.memory_space<vmem>>, vector<1x256xf32>
    %65 = arith.mulf %63, %64 : vector<1x256xf32>
    %66 = arith.addf %62, %65 : vector<1x256xf32>
    %c9 = arith.constant 9 : index
    %c18 = arith.constant 18 : index
    %67 = vector.load %arg19[%c9, %c18] : memref<49x358xf32, #tpu.memory_space<vmem>>, vector<1x256xf32>
    %c2_50 = arith.constant 2 : index
    %c0_51 = arith.constant 0 : index
    %68 = vector.load %arg8[%c2_50, %c0_51] : memref<7x256xf32, #tpu.memory_space<vmem>>, vector<1x256xf32>
    %69 = arith.mulf %67, %68 : vector<1x256xf32>
    %70 = arith.addf %66, %69 : vector<1x256xf32>
    %c10 = arith.constant 10 : index
    %c19 = arith.constant 19 : index
    %71 = vector.load %arg19[%c10, %c19] : memref<49x358xf32, #tpu.memory_space<vmem>>, vector<1x256xf32>
    %72 = arith.addf %70, %71 : vector<1x256xf32>
    %c11 = arith.constant 11 : index
    %c20 = arith.constant 20 : index
    %73 = vector.load %arg19[%c11, %c20] : memref<49x358xf32, #tpu.memory_space<vmem>>, vector<1x256xf32>
    %c4_52 = arith.constant 4 : index
    %c0_53 = arith.constant 0 : index
    %74 = vector.load %arg8[%c4_52, %c0_53] : memref<7x256xf32, #tpu.memory_space<vmem>>, vector<1x256xf32>
    %75 = arith.mulf %73, %74 : vector<1x256xf32>
    %76 = arith.addf %72, %75 : vector<1x256xf32>
    %c12 = arith.constant 12 : index
    %c21 = arith.constant 21 : index
    %77 = vector.load %arg19[%c12, %c21] : memref<49x358xf32, #tpu.memory_space<vmem>>, vector<1x256xf32>
    %c5_54 = arith.constant 5 : index
    %c0_55 = arith.constant 0 : index
    %78 = vector.load %arg8[%c5_54, %c0_55] : memref<7x256xf32, #tpu.memory_space<vmem>>, vector<1x256xf32>
    %79 = arith.mulf %77, %78 : vector<1x256xf32>
    %80 = arith.addf %76, %79 : vector<1x256xf32>
    %c13 = arith.constant 13 : index
    %c22 = arith.constant 22 : index
    %81 = vector.load %arg19[%c13, %c22] : memref<49x358xf32, #tpu.memory_space<vmem>>, vector<1x256xf32>
    %c6_56 = arith.constant 6 : index
    %c0_57 = arith.constant 0 : index
    %82 = vector.load %arg8[%c6_56, %c0_57] : memref<7x256xf32, #tpu.memory_space<vmem>>, vector<1x256xf32>
    %83 = arith.mulf %81, %82 : vector<1x256xf32>
    %84 = arith.addf %80, %83 : vector<1x256xf32>
    %c14 = arith.constant 14 : index
    %c32 = arith.constant 32 : index
    %85 = vector.load %arg19[%c14, %c32] : memref<49x358xf32, #tpu.memory_space<vmem>>, vector<1x256xf32>
    %c0_58 = arith.constant 0 : index
    %c0_59 = arith.constant 0 : index
    %86 = vector.load %arg8[%c0_58, %c0_59] : memref<7x256xf32, #tpu.memory_space<vmem>>, vector<1x256xf32>
    %87 = arith.mulf %85, %86 : vector<1x256xf32>
    %88 = arith.addf %84, %87 : vector<1x256xf32>
    %c15 = arith.constant 15 : index
    %c33 = arith.constant 33 : index
    %89 = vector.load %arg19[%c15, %c33] : memref<49x358xf32, #tpu.memory_space<vmem>>, vector<1x256xf32>
    %c1_60 = arith.constant 1 : index
    %c0_61 = arith.constant 0 : index
    %90 = vector.load %arg8[%c1_60, %c0_61] : memref<7x256xf32, #tpu.memory_space<vmem>>, vector<1x256xf32>
    %91 = arith.mulf %89, %90 : vector<1x256xf32>
    %92 = arith.addf %88, %91 : vector<1x256xf32>
    %c16_62 = arith.constant 16 : index
    %c34 = arith.constant 34 : index
    %93 = vector.load %arg19[%c16_62, %c34] : memref<49x358xf32, #tpu.memory_space<vmem>>, vector<1x256xf32>
    %c2_63 = arith.constant 2 : index
    %c0_64 = arith.constant 0 : index
    %94 = vector.load %arg8[%c2_63, %c0_64] : memref<7x256xf32, #tpu.memory_space<vmem>>, vector<1x256xf32>
    %95 = arith.mulf %93, %94 : vector<1x256xf32>
    %96 = arith.addf %92, %95 : vector<1x256xf32>
    %c17_65 = arith.constant 17 : index
    %c35 = arith.constant 35 : index
    %97 = vector.load %arg19[%c17_65, %c35] : memref<49x358xf32, #tpu.memory_space<vmem>>, vector<1x256xf32>
    %98 = arith.addf %96, %97 : vector<1x256xf32>
    %c18_66 = arith.constant 18 : index
    %c36 = arith.constant 36 : index
    %99 = vector.load %arg19[%c18_66, %c36] : memref<49x358xf32, #tpu.memory_space<vmem>>, vector<1x256xf32>
    %c4_67 = arith.constant 4 : index
    %c0_68 = arith.constant 0 : index
    %100 = vector.load %arg8[%c4_67, %c0_68] : memref<7x256xf32, #tpu.memory_space<vmem>>, vector<1x256xf32>
    %101 = arith.mulf %99, %100 : vector<1x256xf32>
    %102 = arith.addf %98, %101 : vector<1x256xf32>
    %c19_69 = arith.constant 19 : index
    %c37 = arith.constant 37 : index
    %103 = vector.load %arg19[%c19_69, %c37] : memref<49x358xf32, #tpu.memory_space<vmem>>, vector<1x256xf32>
    %c5_70 = arith.constant 5 : index
    %c0_71 = arith.constant 0 : index
    %104 = vector.load %arg8[%c5_70, %c0_71] : memref<7x256xf32, #tpu.memory_space<vmem>>, vector<1x256xf32>
    %105 = arith.mulf %103, %104 : vector<1x256xf32>
    %106 = arith.addf %102, %105 : vector<1x256xf32>
    %c20_72 = arith.constant 20 : index
    %c38 = arith.constant 38 : index
    %107 = vector.load %arg19[%c20_72, %c38] : memref<49x358xf32, #tpu.memory_space<vmem>>, vector<1x256xf32>
    %c6_73 = arith.constant 6 : index
    %c0_74 = arith.constant 0 : index
    %108 = vector.load %arg8[%c6_73, %c0_74] : memref<7x256xf32, #tpu.memory_space<vmem>>, vector<1x256xf32>
    %109 = arith.mulf %107, %108 : vector<1x256xf32>
    %110 = arith.addf %106, %109 : vector<1x256xf32>
    %c21_75 = arith.constant 21 : index
    %c48 = arith.constant 48 : index
    %111 = vector.load %arg19[%c21_75, %c48] : memref<49x358xf32, #tpu.memory_space<vmem>>, vector<1x256xf32>
    %c0_76 = arith.constant 0 : index
    %c0_77 = arith.constant 0 : index
    %112 = vector.load %arg8[%c0_76, %c0_77] : memref<7x256xf32, #tpu.memory_space<vmem>>, vector<1x256xf32>
    %113 = arith.mulf %111, %112 : vector<1x256xf32>
    %114 = arith.addf %110, %113 : vector<1x256xf32>
    %c22_78 = arith.constant 22 : index
    %c49 = arith.constant 49 : index
    %115 = vector.load %arg19[%c22_78, %c49] : memref<49x358xf32, #tpu.memory_space<vmem>>, vector<1x256xf32>
    %c1_79 = arith.constant 1 : index
    %c0_80 = arith.constant 0 : index
    %116 = vector.load %arg8[%c1_79, %c0_80] : memref<7x256xf32, #tpu.memory_space<vmem>>, vector<1x256xf32>
    %117 = arith.mulf %115, %116 : vector<1x256xf32>
    %118 = arith.addf %114, %117 : vector<1x256xf32>
    %c23 = arith.constant 23 : index
    %c50 = arith.constant 50 : index
    %119 = vector.load %arg19[%c23, %c50] : memref<49x358xf32, #tpu.memory_space<vmem>>, vector<1x256xf32>
    %c2_81 = arith.constant 2 : index
    %c0_82 = arith.constant 0 : index
    %120 = vector.load %arg8[%c2_81, %c0_82] : memref<7x256xf32, #tpu.memory_space<vmem>>, vector<1x256xf32>
    %121 = arith.mulf %119, %120 : vector<1x256xf32>
    %122 = arith.addf %118, %121 : vector<1x256xf32>
    %c24 = arith.constant 24 : index
    %c51_83 = arith.constant 51 : index
    %123 = vector.load %arg19[%c24, %c51_83] : memref<49x358xf32, #tpu.memory_space<vmem>>, vector<1x256xf32>
    %124 = arith.addf %122, %123 : vector<1x256xf32>
    %c25 = arith.constant 25 : index
    %c52 = arith.constant 52 : index
    %125 = vector.load %arg19[%c25, %c52] : memref<49x358xf32, #tpu.memory_space<vmem>>, vector<1x256xf32>
    %c4_84 = arith.constant 4 : index
    %c0_85 = arith.constant 0 : index
    %126 = vector.load %arg8[%c4_84, %c0_85] : memref<7x256xf32, #tpu.memory_space<vmem>>, vector<1x256xf32>
    %127 = arith.mulf %125, %126 : vector<1x256xf32>
    %128 = arith.addf %124, %127 : vector<1x256xf32>
    %c26 = arith.constant 26 : index
    %c53 = arith.constant 53 : index
    %129 = vector.load %arg19[%c26, %c53] : memref<49x358xf32, #tpu.memory_space<vmem>>, vector<1x256xf32>
    %c5_86 = arith.constant 5 : index
    %c0_87 = arith.constant 0 : index
    %130 = vector.load %arg8[%c5_86, %c0_87] : memref<7x256xf32, #tpu.memory_space<vmem>>, vector<1x256xf32>
    %131 = arith.mulf %129, %130 : vector<1x256xf32>
    %132 = arith.addf %128, %131 : vector<1x256xf32>
    %c27 = arith.constant 27 : index
    %c54 = arith.constant 54 : index
    %133 = vector.load %arg19[%c27, %c54] : memref<49x358xf32, #tpu.memory_space<vmem>>, vector<1x256xf32>
    %c6_88 = arith.constant 6 : index
    %c0_89 = arith.constant 0 : index
    %134 = vector.load %arg8[%c6_88, %c0_89] : memref<7x256xf32, #tpu.memory_space<vmem>>, vector<1x256xf32>
    %135 = arith.mulf %133, %134 : vector<1x256xf32>
    %136 = arith.addf %132, %135 : vector<1x256xf32>
    %c28 = arith.constant 28 : index
    %c64 = arith.constant 64 : index
    %137 = vector.load %arg19[%c28, %c64] : memref<49x358xf32, #tpu.memory_space<vmem>>, vector<1x256xf32>
    %c0_90 = arith.constant 0 : index
    %c0_91 = arith.constant 0 : index
    %138 = vector.load %arg8[%c0_90, %c0_91] : memref<7x256xf32, #tpu.memory_space<vmem>>, vector<1x256xf32>
    %139 = arith.mulf %137, %138 : vector<1x256xf32>
    %140 = arith.addf %136, %139 : vector<1x256xf32>
    %c29 = arith.constant 29 : index
    %c65 = arith.constant 65 : index
    %141 = vector.load %arg19[%c29, %c65] : memref<49x358xf32, #tpu.memory_space<vmem>>, vector<1x256xf32>
    %c1_92 = arith.constant 1 : index
    %c0_93 = arith.constant 0 : index
    %142 = vector.load %arg8[%c1_92, %c0_93] : memref<7x256xf32, #tpu.memory_space<vmem>>, vector<1x256xf32>
    %143 = arith.mulf %141, %142 : vector<1x256xf32>
    %144 = arith.addf %140, %143 : vector<1x256xf32>
    %c30 = arith.constant 30 : index
    %c66 = arith.constant 66 : index
    %145 = vector.load %arg19[%c30, %c66] : memref<49x358xf32, #tpu.memory_space<vmem>>, vector<1x256xf32>
    %c2_94 = arith.constant 2 : index
    %c0_95 = arith.constant 0 : index
    %146 = vector.load %arg8[%c2_94, %c0_95] : memref<7x256xf32, #tpu.memory_space<vmem>>, vector<1x256xf32>
    %147 = arith.mulf %145, %146 : vector<1x256xf32>
    %148 = arith.addf %144, %147 : vector<1x256xf32>
    %c31 = arith.constant 31 : index
    %c67 = arith.constant 67 : index
    %149 = vector.load %arg19[%c31, %c67] : memref<49x358xf32, #tpu.memory_space<vmem>>, vector<1x256xf32>
    %150 = arith.addf %148, %149 : vector<1x256xf32>
    %c32_96 = arith.constant 32 : index
    %c68 = arith.constant 68 : index
    %151 = vector.load %arg19[%c32_96, %c68] : memref<49x358xf32, #tpu.memory_space<vmem>>, vector<1x256xf32>
    %c4_97 = arith.constant 4 : index
    %c0_98 = arith.constant 0 : index
    %152 = vector.load %arg8[%c4_97, %c0_98] : memref<7x256xf32, #tpu.memory_space<vmem>>, vector<1x256xf32>
    %153 = arith.mulf %151, %152 : vector<1x256xf32>
    %154 = arith.addf %150, %153 : vector<1x256xf32>
    %c33_99 = arith.constant 33 : index
    %c69 = arith.constant 69 : index
    %155 = vector.load %arg19[%c33_99, %c69] : memref<49x358xf32, #tpu.memory_space<vmem>>, vector<1x256xf32>
    %c5_100 = arith.constant 5 : index
    %c0_101 = arith.constant 0 : index
    %156 = vector.load %arg8[%c5_100, %c0_101] : memref<7x256xf32, #tpu.memory_space<vmem>>, vector<1x256xf32>
    %157 = arith.mulf %155, %156 : vector<1x256xf32>
    %158 = arith.addf %154, %157 : vector<1x256xf32>
    %c34_102 = arith.constant 34 : index
    %c70 = arith.constant 70 : index
    %159 = vector.load %arg19[%c34_102, %c70] : memref<49x358xf32, #tpu.memory_space<vmem>>, vector<1x256xf32>
    %c6_103 = arith.constant 6 : index
    %c0_104 = arith.constant 0 : index
    %160 = vector.load %arg8[%c6_103, %c0_104] : memref<7x256xf32, #tpu.memory_space<vmem>>, vector<1x256xf32>
    %161 = arith.mulf %159, %160 : vector<1x256xf32>
    %162 = arith.addf %158, %161 : vector<1x256xf32>
    %c35_105 = arith.constant 35 : index
    %c80 = arith.constant 80 : index
    %163 = vector.load %arg19[%c35_105, %c80] : memref<49x358xf32, #tpu.memory_space<vmem>>, vector<1x256xf32>
    %c0_106 = arith.constant 0 : index
    %c0_107 = arith.constant 0 : index
    %164 = vector.load %arg8[%c0_106, %c0_107] : memref<7x256xf32, #tpu.memory_space<vmem>>, vector<1x256xf32>
    %165 = arith.mulf %163, %164 : vector<1x256xf32>
    %166 = arith.addf %162, %165 : vector<1x256xf32>
    %c36_108 = arith.constant 36 : index
    %c81 = arith.constant 81 : index
    %167 = vector.load %arg19[%c36_108, %c81] : memref<49x358xf32, #tpu.memory_space<vmem>>, vector<1x256xf32>
    %c1_109 = arith.constant 1 : index
    %c0_110 = arith.constant 0 : index
    %168 = vector.load %arg8[%c1_109, %c0_110] : memref<7x256xf32, #tpu.memory_space<vmem>>, vector<1x256xf32>
    %169 = arith.mulf %167, %168 : vector<1x256xf32>
    %170 = arith.addf %166, %169 : vector<1x256xf32>
    %c37_111 = arith.constant 37 : index
    %c82 = arith.constant 82 : index
    %171 = vector.load %arg19[%c37_111, %c82] : memref<49x358xf32, #tpu.memory_space<vmem>>, vector<1x256xf32>
    %c2_112 = arith.constant 2 : index
    %c0_113 = arith.constant 0 : index
    %172 = vector.load %arg8[%c2_112, %c0_113] : memref<7x256xf32, #tpu.memory_space<vmem>>, vector<1x256xf32>
    %173 = arith.mulf %171, %172 : vector<1x256xf32>
    %174 = arith.addf %170, %173 : vector<1x256xf32>
    %c38_114 = arith.constant 38 : index
    %c83 = arith.constant 83 : index
    %175 = vector.load %arg19[%c38_114, %c83] : memref<49x358xf32, #tpu.memory_space<vmem>>, vector<1x256xf32>
    %176 = arith.addf %174, %175 : vector<1x256xf32>
    %c39 = arith.constant 39 : index
    %c84 = arith.constant 84 : index
    %177 = vector.load %arg19[%c39, %c84] : memref<49x358xf32, #tpu.memory_space<vmem>>, vector<1x256xf32>
    %c4_115 = arith.constant 4 : index
    %c0_116 = arith.constant 0 : index
    %178 = vector.load %arg8[%c4_115, %c0_116] : memref<7x256xf32, #tpu.memory_space<vmem>>, vector<1x256xf32>
    %179 = arith.mulf %177, %178 : vector<1x256xf32>
    %180 = arith.addf %176, %179 : vector<1x256xf32>
    %c40 = arith.constant 40 : index
    %c85 = arith.constant 85 : index
    %181 = vector.load %arg19[%c40, %c85] : memref<49x358xf32, #tpu.memory_space<vmem>>, vector<1x256xf32>
    %c5_117 = arith.constant 5 : index
    %c0_118 = arith.constant 0 : index
    %182 = vector.load %arg8[%c5_117, %c0_118] : memref<7x256xf32, #tpu.memory_space<vmem>>, vector<1x256xf32>
    %183 = arith.mulf %181, %182 : vector<1x256xf32>
    %184 = arith.addf %180, %183 : vector<1x256xf32>
    %c41 = arith.constant 41 : index
    %c86 = arith.constant 86 : index
    %185 = vector.load %arg19[%c41, %c86] : memref<49x358xf32, #tpu.memory_space<vmem>>, vector<1x256xf32>
    %c6_119 = arith.constant 6 : index
    %c0_120 = arith.constant 0 : index
    %186 = vector.load %arg8[%c6_119, %c0_120] : memref<7x256xf32, #tpu.memory_space<vmem>>, vector<1x256xf32>
    %187 = arith.mulf %185, %186 : vector<1x256xf32>
    %188 = arith.addf %184, %187 : vector<1x256xf32>
    %c42 = arith.constant 42 : index
    %c96 = arith.constant 96 : index
    %189 = vector.load %arg19[%c42, %c96] : memref<49x358xf32, #tpu.memory_space<vmem>>, vector<1x256xf32>
    %c0_121 = arith.constant 0 : index
    %c0_122 = arith.constant 0 : index
    %190 = vector.load %arg8[%c0_121, %c0_122] : memref<7x256xf32, #tpu.memory_space<vmem>>, vector<1x256xf32>
    %191 = arith.mulf %189, %190 : vector<1x256xf32>
    %192 = arith.addf %188, %191 : vector<1x256xf32>
    %c43 = arith.constant 43 : index
    %c97 = arith.constant 97 : index
    %193 = vector.load %arg19[%c43, %c97] : memref<49x358xf32, #tpu.memory_space<vmem>>, vector<1x256xf32>
    %c1_123 = arith.constant 1 : index
    %c0_124 = arith.constant 0 : index
    %194 = vector.load %arg8[%c1_123, %c0_124] : memref<7x256xf32, #tpu.memory_space<vmem>>, vector<1x256xf32>
    %195 = arith.mulf %193, %194 : vector<1x256xf32>
    %196 = arith.addf %192, %195 : vector<1x256xf32>
    %c44 = arith.constant 44 : index
    %c98 = arith.constant 98 : index
    %197 = vector.load %arg19[%c44, %c98] : memref<49x358xf32, #tpu.memory_space<vmem>>, vector<1x256xf32>
    %c2_125 = arith.constant 2 : index
    %c0_126 = arith.constant 0 : index
    %198 = vector.load %arg8[%c2_125, %c0_126] : memref<7x256xf32, #tpu.memory_space<vmem>>, vector<1x256xf32>
    %199 = arith.mulf %197, %198 : vector<1x256xf32>
    %200 = arith.addf %196, %199 : vector<1x256xf32>
    %c45 = arith.constant 45 : index
    %c99 = arith.constant 99 : index
    %201 = vector.load %arg19[%c45, %c99] : memref<49x358xf32, #tpu.memory_space<vmem>>, vector<1x256xf32>
    %202 = arith.addf %200, %201 : vector<1x256xf32>
    %c46 = arith.constant 46 : index
    %c100 = arith.constant 100 : index
    %203 = vector.load %arg19[%c46, %c100] : memref<49x358xf32, #tpu.memory_space<vmem>>, vector<1x256xf32>
    %c4_127 = arith.constant 4 : index
    %c0_128 = arith.constant 0 : index
    %204 = vector.load %arg8[%c4_127, %c0_128] : memref<7x256xf32, #tpu.memory_space<vmem>>, vector<1x256xf32>
    %205 = arith.mulf %203, %204 : vector<1x256xf32>
    %206 = arith.addf %202, %205 : vector<1x256xf32>
    %c47 = arith.constant 47 : index
    %c101 = arith.constant 101 : index
    %207 = vector.load %arg19[%c47, %c101] : memref<49x358xf32, #tpu.memory_space<vmem>>, vector<1x256xf32>
    %c5_129 = arith.constant 5 : index
    %c0_130 = arith.constant 0 : index
    %208 = vector.load %arg8[%c5_129, %c0_130] : memref<7x256xf32, #tpu.memory_space<vmem>>, vector<1x256xf32>
    %209 = arith.mulf %207, %208 : vector<1x256xf32>
    %210 = arith.addf %206, %209 : vector<1x256xf32>
    %c48_131 = arith.constant 48 : index
    %c102 = arith.constant 102 : index
    %211 = vector.load %arg19[%c48_131, %c102] : memref<49x358xf32, #tpu.memory_space<vmem>>, vector<1x256xf32>
    %c6_132 = arith.constant 6 : index
    %c0_133 = arith.constant 0 : index
    %212 = vector.load %arg8[%c6_132, %c0_133] : memref<7x256xf32, #tpu.memory_space<vmem>>, vector<1x256xf32>
    %213 = arith.mulf %211, %212 : vector<1x256xf32>
    %214 = arith.addf %210, %213 : vector<1x256xf32>
    %215 = arith.negf %214 : vector<1x256xf32>
    %216 = math.exp %215 : vector<1x256xf32>
    %cst_134 = arith.constant 1.000000e+00 : f32
    %217 = vector.broadcast %cst_134 : f32 to vector<1x256xf32>
    %218 = arith.addf %217, %216 : vector<1x256xf32>
    %219 = arith.divf %217, %218 : vector<1x256xf32>
    %220 = vector.broadcast %219 : vector<1x256xf32> to vector<16x256xf32>
    %221 = arith.mulf %22, %220 : vector<16x256xf32>
    %cst_135 = arith.constant 0.000000e+00 : f32
    %222 = vector.broadcast %cst_135 : f32 to vector<16x17xf32>
    %c0_136 = arith.constant 0 : index
    %c0_137 = arith.constant 0 : index
    %223 = vector.load %arg20[%c0_136, %c0_137] : memref<16x290xf32, #tpu.memory_space<vmem>>, vector<16x17xf32>
    tpu.vector_store %arg20[%c0_136, %c0_137], %222 {strides = array<i32>} : memref<16x290xf32, #tpu.memory_space<vmem>>, vector<16x17xf32>,
    %cst_138 = arith.constant 0.000000e+00 : f32
    %224 = vector.broadcast %cst_138 : f32 to vector<16x17xf32>
    %c0_139 = arith.constant 0 : index
    %c273 = arith.constant 273 : index
    %225 = vector.load %arg20[%c0_139, %c273] : memref<16x290xf32, #tpu.memory_space<vmem>>, vector<16x17xf32>
    tpu.vector_store %arg20[%c0_139, %c273], %224 {strides = array<i32>} : memref<16x290xf32, #tpu.memory_space<vmem>>, vector<16x17xf32>,
    %c0_140 = arith.constant 0 : index
    %c17_141 = arith.constant 17 : index
    %226 = vector.load %arg20[%c0_140, %c17_141] : memref<16x290xf32, #tpu.memory_space<vmem>>, vector<16x256xf32>
    tpu.vector_store %arg20[%c0_140, %c17_141], %221 {strides = array<i32>} : memref<16x290xf32, #tpu.memory_space<vmem>>, vector<16x256xf32>,
    %c0_142 = arith.constant 0 : index
    %c0_143 = arith.constant 0 : index
    %227 = vector.load %arg9[%c0_142, %c0_143] : memref<16x9xf32, #tpu.memory_space<vmem>>, vector<16x9xf32>
    %c0_144 = arith.constant 0 : index
    %c0_145 = arith.constant 0 : index
    %228 = vector.load %arg10[%c0_144, %c0_145] : memref<16x1xf32, #tpu.memory_space<vmem>>, vector<16x1xf32>
    %229 = vector.shape_cast %228 : vector<16x1xf32> to vector<16x1xf32>
    %230 = vector.broadcast %229 : vector<16x1xf32> to vector<16x256xf32>
    %c0_146 = arith.constant 0 : index
    %c0_147 = arith.constant 0 : index
    %231 = vector.load %arg20[%c0_146, %c0_147] : memref<16x290xf32, #tpu.memory_space<vmem>>, vector<16x256xf32>
    %c0_148 = arith.constant 0 : index
    %c0_149 = arith.constant 0 : index
    %232 = vector.load %arg11[%c0_148, %c0_149] : memref<3x256xf32, #tpu.memory_space<vmem>>, vector<1x256xf32>
    %233 = vector.broadcast %232 : vector<1x256xf32> to vector<16x256xf32>
    %234 = arith.mulf %231, %233 : vector<16x256xf32>
    %235 = vector.extract_strided_slice %227 {offsets = [0, 0], sizes = [16, 1], strides = [1, 1]} : vector<16x9xf32> to vector<16x1xf32>
    %236 = vector.broadcast %235 : vector<16x1xf32> to vector<16x256xf32>
    %237 = arith.mulf %236, %234 : vector<16x256xf32>
    %238 = arith.addf %230, %237 : vector<16x256xf32>
    %c0_150 = arith.constant 0 : index
    %c1_151 = arith.constant 1 : index
    %239 = vector.load %arg20[%c0_150, %c1_151] : memref<16x290xf32, #tpu.memory_space<vmem>>, vector<16x256xf32>
    %240 = vector.extract_strided_slice %227 {offsets = [0, 1], sizes = [16, 1], strides = [1, 1]} : vector<16x9xf32> to vector<16x1xf32>
    %241 = vector.broadcast %240 : vector<16x1xf32> to vector<16x256xf32>
    %242 = arith.mulf %241, %239 : vector<16x256xf32>
    %243 = arith.addf %238, %242 : vector<16x256xf32>
    %c0_152 = arith.constant 0 : index
    %c2_153 = arith.constant 2 : index
    %244 = vector.load %arg20[%c0_152, %c2_153] : memref<16x290xf32, #tpu.memory_space<vmem>>, vector<16x256xf32>
    %c2_154 = arith.constant 2 : index
    %c0_155 = arith.constant 0 : index
    %245 = vector.load %arg11[%c2_154, %c0_155] : memref<3x256xf32, #tpu.memory_space<vmem>>, vector<1x256xf32>
    %246 = vector.broadcast %245 : vector<1x256xf32> to vector<16x256xf32>
    %247 = arith.mulf %244, %246 : vector<16x256xf32>
    %248 = vector.extract_strided_slice %227 {offsets = [0, 2], sizes = [16, 1], strides = [1, 1]} : vector<16x9xf32> to vector<16x1xf32>
    %249 = vector.broadcast %248 : vector<16x1xf32> to vector<16x256xf32>
    %250 = arith.mulf %249, %247 : vector<16x256xf32>
    %251 = arith.addf %243, %250 : vector<16x256xf32>
    %c0_156 = arith.constant 0 : index
    %c16_157 = arith.constant 16 : index
    %252 = vector.load %arg20[%c0_156, %c16_157] : memref<16x290xf32, #tpu.memory_space<vmem>>, vector<16x256xf32>
    %c0_158 = arith.constant 0 : index
    %c0_159 = arith.constant 0 : index
    %253 = vector.load %arg11[%c0_158, %c0_159] : memref<3x256xf32, #tpu.memory_space<vmem>>, vector<1x256xf32>
    %254 = vector.broadcast %253 : vector<1x256xf32> to vector<16x256xf32>
    %255 = arith.mulf %252, %254 : vector<16x256xf32>
    %256 = vector.extract_strided_slice %227 {offsets = [0, 3], sizes = [16, 1], strides = [1, 1]} : vector<16x9xf32> to vector<16x1xf32>
    %257 = vector.broadcast %256 : vector<16x1xf32> to vector<16x256xf32>
    %258 = arith.mulf %257, %255 : vector<16x256xf32>
    %259 = arith.addf %251, %258 : vector<16x256xf32>
    %c0_160 = arith.constant 0 : index
    %c17_161 = arith.constant 17 : index
    %260 = vector.load %arg20[%c0_160, %c17_161] : memref<16x290xf32, #tpu.memory_space<vmem>>, vector<16x256xf32>
    %261 = vector.extract_strided_slice %227 {offsets = [0, 4], sizes = [16, 1], strides = [1, 1]} : vector<16x9xf32> to vector<16x1xf32>
    %262 = vector.broadcast %261 : vector<16x1xf32> to vector<16x256xf32>
    %263 = arith.mulf %262, %260 : vector<16x256xf32>
    %264 = arith.addf %259, %263 : vector<16x256xf32>
    %c0_162 = arith.constant 0 : index
    %c18_163 = arith.constant 18 : index
    %265 = vector.load %arg20[%c0_162, %c18_163] : memref<16x290xf32, #tpu.memory_space<vmem>>, vector<16x256xf32>
    %c2_164 = arith.constant 2 : index
    %c0_165 = arith.constant 0 : index
    %266 = vector.load %arg11[%c2_164, %c0_165] : memref<3x256xf32, #tpu.memory_space<vmem>>, vector<1x256xf32>
    %267 = vector.broadcast %266 : vector<1x256xf32> to vector<16x256xf32>
    %268 = arith.mulf %265, %267 : vector<16x256xf32>
    %269 = vector.extract_strided_slice %227 {offsets = [0, 5], sizes = [16, 1], strides = [1, 1]} : vector<16x9xf32> to vector<16x1xf32>
    %270 = vector.broadcast %269 : vector<16x1xf32> to vector<16x256xf32>
    %271 = arith.mulf %270, %268 : vector<16x256xf32>
    %272 = arith.addf %264, %271 : vector<16x256xf32>
    %c0_166 = arith.constant 0 : index
    %c32_167 = arith.constant 32 : index
    %273 = vector.load %arg20[%c0_166, %c32_167] : memref<16x290xf32, #tpu.memory_space<vmem>>, vector<16x256xf32>
    %c0_168 = arith.constant 0 : index
    %c0_169 = arith.constant 0 : index
    %274 = vector.load %arg11[%c0_168, %c0_169] : memref<3x256xf32, #tpu.memory_space<vmem>>, vector<1x256xf32>
    %275 = vector.broadcast %274 : vector<1x256xf32> to vector<16x256xf32>
    %276 = arith.mulf %273, %275 : vector<16x256xf32>
    %277 = vector.extract_strided_slice %227 {offsets = [0, 6], sizes = [16, 1], strides = [1, 1]} : vector<16x9xf32> to vector<16x1xf32>
    %278 = vector.broadcast %277 : vector<16x1xf32> to vector<16x256xf32>
    %279 = arith.mulf %278, %276 : vector<16x256xf32>
    %280 = arith.addf %272, %279 : vector<16x256xf32>
    %c0_170 = arith.constant 0 : index
    %c33_171 = arith.constant 33 : index
    %281 = vector.load %arg20[%c0_170, %c33_171] : memref<16x290xf32, #tpu.memory_space<vmem>>, vector<16x256xf32>
    %282 = vector.extract_strided_slice %227 {offsets = [0, 7], sizes = [16, 1], strides = [1, 1]} : vector<16x9xf32> to vector<16x1xf32>
    %283 = vector.broadcast %282 : vector<16x1xf32> to vector<16x256xf32>
    %284 = arith.mulf %283, %281 : vector<16x256xf32>
    %285 = arith.addf %280, %284 : vector<16x256xf32>
    %c0_172 = arith.constant 0 : index
    %c34_173 = arith.constant 34 : index
    %286 = vector.load %arg20[%c0_172, %c34_173] : memref<16x290xf32, #tpu.memory_space<vmem>>, vector<16x256xf32>
    %c2_174 = arith.constant 2 : index
    %c0_175 = arith.constant 0 : index
    %287 = vector.load %arg11[%c2_174, %c0_175] : memref<3x256xf32, #tpu.memory_space<vmem>>, vector<1x256xf32>
    %288 = vector.broadcast %287 : vector<1x256xf32> to vector<16x256xf32>
    %289 = arith.mulf %286, %288 : vector<16x256xf32>
    %290 = vector.extract_strided_slice %227 {offsets = [0, 8], sizes = [16, 1], strides = [1, 1]} : vector<16x9xf32> to vector<16x1xf32>
    %291 = vector.broadcast %290 : vector<16x1xf32> to vector<16x256xf32>
    %292 = arith.mulf %291, %289 : vector<16x256xf32>
    %293 = arith.addf %285, %292 : vector<16x256xf32>
    %cst_176 = arith.constant 0.000000e+00 : f32
    %294 = vector.broadcast %cst_176 : f32 to vector<16x256xf32>
    %295 = arith.maximumf %293, %294 : vector<16x256xf32>
    %c0_177 = arith.constant 0 : index
    %c0_178 = arith.constant 0 : index
    %296 = vector.load %arg12[%c0_177, %c0_178] : memref<32x16xf32, #tpu.memory_space<vmem>>, vector<32x16xf32>
    %cst_179 = arith.constant dense<0.000000e+00> : vector<32x256xf32>
    %297 = tpu.matmul %296, %295, %cst_179 {dimension_numbers = #tpu.dot_dimension_numbers<[1], [0], [0], [1], [0, 0, 1, 1], [], []>} : vector<32x16xf32>, vector<16x256xf32>, vector<32x256xf32> -> vector<32x256xf32>
    %c0_180 = arith.constant 0 : index
    %c0_181 = arith.constant 0 : index
    %298 = vector.load %arg13[%c0_180, %c0_181] : memref<32x1xf32, #tpu.memory_space<vmem>>, vector<32x1xf32>
    %299 = vector.broadcast %298 : vector<32x1xf32> to vector<32x256xf32>
    %300 = arith.addf %297, %299 : vector<32x256xf32>
    %cst_182 = arith.constant 0.000000e+00 : f32
    %301 = vector.broadcast %cst_182 : f32 to vector<32x256xf32>
    %302 = arith.maximumf %300, %301 : vector<32x256xf32>
    %c0_183 = arith.constant 0 : index
    %c0_184 = arith.constant 0 : index
    %303 = vector.load %arg14[%c0_183, %c0_184] : memref<1x32xf32, #tpu.memory_space<vmem>>, vector<1x32xf32>
    %cst_185 = arith.constant dense<0.000000e+00> : vector<1x256xf32>
    %304 = tpu.matmul %303, %302, %cst_185 {dimension_numbers = #tpu.dot_dimension_numbers<[1], [0], [0], [1], [0, 0, 1, 1], [], []>} : vector<1x32xf32>, vector<32x256xf32>, vector<1x256xf32> -> vector<1x256xf32>
    %c0_186 = arith.constant 0 : index
    %c0_187 = arith.constant 0 : index
    %305 = vector.load %arg15[%c0_186, %c0_187] : memref<1x1xf32, #tpu.memory_space<vmem>>, vector<1x1xf32>
    %306 = vector.broadcast %305 : vector<1x1xf32> to vector<1x256xf32>
    %307 = arith.addf %304, %306 : vector<1x256xf32>
    %308 = vector.extract_strided_slice %307 {offsets = [0, 0], sizes = [1, 16], strides = [1, 1]} : vector<1x256xf32> to vector<1x16xf32>
    %c0_188 = arith.constant 0 : index
    %c0_189 = arith.constant 0 : index
    %309 = vector.load %arg21[%c0_188, %c0_189] : memref<16x16xf32, #tpu.memory_space<vmem>>, vector<1x16xf32>
    tpu.vector_store %arg21[%c0_188, %c0_189], %308 {strides = array<i32>} : memref<16x16xf32, #tpu.memory_space<vmem>>, vector<1x16xf32>,
    %310 = vector.extract_strided_slice %307 {offsets = [0, 16], sizes = [1, 16], strides = [1, 1]} : vector<1x256xf32> to vector<1x16xf32>
    %c1_190 = arith.constant 1 : index
    %c0_191 = arith.constant 0 : index
    %311 = vector.load %arg21[%c1_190, %c0_191] : memref<16x16xf32, #tpu.memory_space<vmem>>, vector<1x16xf32>
    tpu.vector_store %arg21[%c1_190, %c0_191], %310 {strides = array<i32>} : memref<16x16xf32, #tpu.memory_space<vmem>>, vector<1x16xf32>,
    %312 = vector.extract_strided_slice %307 {offsets = [0, 32], sizes = [1, 16], strides = [1, 1]} : vector<1x256xf32> to vector<1x16xf32>
    %c2_192 = arith.constant 2 : index
    %c0_193 = arith.constant 0 : index
    %313 = vector.load %arg21[%c2_192, %c0_193] : memref<16x16xf32, #tpu.memory_space<vmem>>, vector<1x16xf32>
    tpu.vector_store %arg21[%c2_192, %c0_193], %312 {strides = array<i32>} : memref<16x16xf32, #tpu.memory_space<vmem>>, vector<1x16xf32>,
    %314 = vector.extract_strided_slice %307 {offsets = [0, 48], sizes = [1, 16], strides = [1, 1]} : vector<1x256xf32> to vector<1x16xf32>
    %c3_194 = arith.constant 3 : index
    %c0_195 = arith.constant 0 : index
    %315 = vector.load %arg21[%c3_194, %c0_195] : memref<16x16xf32, #tpu.memory_space<vmem>>, vector<1x16xf32>
    tpu.vector_store %arg21[%c3_194, %c0_195], %314 {strides = array<i32>} : memref<16x16xf32, #tpu.memory_space<vmem>>, vector<1x16xf32>,
    %316 = vector.extract_strided_slice %307 {offsets = [0, 64], sizes = [1, 16], strides = [1, 1]} : vector<1x256xf32> to vector<1x16xf32>
    %c4_196 = arith.constant 4 : index
    %c0_197 = arith.constant 0 : index
    %317 = vector.load %arg21[%c4_196, %c0_197] : memref<16x16xf32, #tpu.memory_space<vmem>>, vector<1x16xf32>
    tpu.vector_store %arg21[%c4_196, %c0_197], %316 {strides = array<i32>} : memref<16x16xf32, #tpu.memory_space<vmem>>, vector<1x16xf32>,
    %318 = vector.extract_strided_slice %307 {offsets = [0, 80], sizes = [1, 16], strides = [1, 1]} : vector<1x256xf32> to vector<1x16xf32>
    %c5_198 = arith.constant 5 : index
    %c0_199 = arith.constant 0 : index
    %319 = vector.load %arg21[%c5_198, %c0_199] : memref<16x16xf32, #tpu.memory_space<vmem>>, vector<1x16xf32>
    tpu.vector_store %arg21[%c5_198, %c0_199], %318 {strides = array<i32>} : memref<16x16xf32, #tpu.memory_space<vmem>>, vector<1x16xf32>,
    %320 = vector.extract_strided_slice %307 {offsets = [0, 96], sizes = [1, 16], strides = [1, 1]} : vector<1x256xf32> to vector<1x16xf32>
    %c6_200 = arith.constant 6 : index
    %c0_201 = arith.constant 0 : index
    %321 = vector.load %arg21[%c6_200, %c0_201] : memref<16x16xf32, #tpu.memory_space<vmem>>, vector<1x16xf32>
    tpu.vector_store %arg21[%c6_200, %c0_201], %320 {strides = array<i32>} : memref<16x16xf32, #tpu.memory_space<vmem>>, vector<1x16xf32>,
    %322 = vector.extract_strided_slice %307 {offsets = [0, 112], sizes = [1, 16], strides = [1, 1]} : vector<1x256xf32> to vector<1x16xf32>
    %c7_202 = arith.constant 7 : index
    %c0_203 = arith.constant 0 : index
    %323 = vector.load %arg21[%c7_202, %c0_203] : memref<16x16xf32, #tpu.memory_space<vmem>>, vector<1x16xf32>
    tpu.vector_store %arg21[%c7_202, %c0_203], %322 {strides = array<i32>} : memref<16x16xf32, #tpu.memory_space<vmem>>, vector<1x16xf32>,
    %324 = vector.extract_strided_slice %307 {offsets = [0, 128], sizes = [1, 16], strides = [1, 1]} : vector<1x256xf32> to vector<1x16xf32>
    %c8_204 = arith.constant 8 : index
    %c0_205 = arith.constant 0 : index
    %325 = vector.load %arg21[%c8_204, %c0_205] : memref<16x16xf32, #tpu.memory_space<vmem>>, vector<1x16xf32>
    tpu.vector_store %arg21[%c8_204, %c0_205], %324 {strides = array<i32>} : memref<16x16xf32, #tpu.memory_space<vmem>>, vector<1x16xf32>,
    %326 = vector.extract_strided_slice %307 {offsets = [0, 144], sizes = [1, 16], strides = [1, 1]} : vector<1x256xf32> to vector<1x16xf32>
    %c9_206 = arith.constant 9 : index
    %c0_207 = arith.constant 0 : index
    %327 = vector.load %arg21[%c9_206, %c0_207] : memref<16x16xf32, #tpu.memory_space<vmem>>, vector<1x16xf32>
    tpu.vector_store %arg21[%c9_206, %c0_207], %326 {strides = array<i32>} : memref<16x16xf32, #tpu.memory_space<vmem>>, vector<1x16xf32>,
    %328 = vector.extract_strided_slice %307 {offsets = [0, 160], sizes = [1, 16], strides = [1, 1]} : vector<1x256xf32> to vector<1x16xf32>
    %c10_208 = arith.constant 10 : index
    %c0_209 = arith.constant 0 : index
    %329 = vector.load %arg21[%c10_208, %c0_209] : memref<16x16xf32, #tpu.memory_space<vmem>>, vector<1x16xf32>
    tpu.vector_store %arg21[%c10_208, %c0_209], %328 {strides = array<i32>} : memref<16x16xf32, #tpu.memory_space<vmem>>, vector<1x16xf32>,
    %330 = vector.extract_strided_slice %307 {offsets = [0, 176], sizes = [1, 16], strides = [1, 1]} : vector<1x256xf32> to vector<1x16xf32>
    %c11_210 = arith.constant 11 : index
    %c0_211 = arith.constant 0 : index
    %331 = vector.load %arg21[%c11_210, %c0_211] : memref<16x16xf32, #tpu.memory_space<vmem>>, vector<1x16xf32>
    tpu.vector_store %arg21[%c11_210, %c0_211], %330 {strides = array<i32>} : memref<16x16xf32, #tpu.memory_space<vmem>>, vector<1x16xf32>,
    %332 = vector.extract_strided_slice %307 {offsets = [0, 192], sizes = [1, 16], strides = [1, 1]} : vector<1x256xf32> to vector<1x16xf32>
    %c12_212 = arith.constant 12 : index
    %c0_213 = arith.constant 0 : index
    %333 = vector.load %arg21[%c12_212, %c0_213] : memref<16x16xf32, #tpu.memory_space<vmem>>, vector<1x16xf32>
    tpu.vector_store %arg21[%c12_212, %c0_213], %332 {strides = array<i32>} : memref<16x16xf32, #tpu.memory_space<vmem>>, vector<1x16xf32>,
    %334 = vector.extract_strided_slice %307 {offsets = [0, 208], sizes = [1, 16], strides = [1, 1]} : vector<1x256xf32> to vector<1x16xf32>
    %c13_214 = arith.constant 13 : index
    %c0_215 = arith.constant 0 : index
    %335 = vector.load %arg21[%c13_214, %c0_215] : memref<16x16xf32, #tpu.memory_space<vmem>>, vector<1x16xf32>
    tpu.vector_store %arg21[%c13_214, %c0_215], %334 {strides = array<i32>} : memref<16x16xf32, #tpu.memory_space<vmem>>, vector<1x16xf32>,
    %336 = vector.extract_strided_slice %307 {offsets = [0, 224], sizes = [1, 16], strides = [1, 1]} : vector<1x256xf32> to vector<1x16xf32>
    %c14_216 = arith.constant 14 : index
    %c0_217 = arith.constant 0 : index
    %337 = vector.load %arg21[%c14_216, %c0_217] : memref<16x16xf32, #tpu.memory_space<vmem>>, vector<1x16xf32>
    tpu.vector_store %arg21[%c14_216, %c0_217], %336 {strides = array<i32>} : memref<16x16xf32, #tpu.memory_space<vmem>>, vector<1x16xf32>,
    %338 = vector.extract_strided_slice %307 {offsets = [0, 240], sizes = [1, 16], strides = [1, 1]} : vector<1x256xf32> to vector<1x16xf32>
    %c15_218 = arith.constant 15 : index
    %c0_219 = arith.constant 0 : index
    %339 = vector.load %arg21[%c15_218, %c0_219] : memref<16x16xf32, #tpu.memory_space<vmem>>, vector<1x16xf32>
    tpu.vector_store %arg21[%c15_218, %c0_219], %338 {strides = array<i32>} : memref<16x16xf32, #tpu.memory_space<vmem>>, vector<1x16xf32>,
    %c0_220 = arith.constant 0 : index
    %c0_221 = arith.constant 0 : index
    %340 = vector.load %arg21[%c0_220, %c0_221] : memref<16x16xf32, #tpu.memory_space<vmem>>, vector<16x16xf32>
    %c0_222 = arith.constant 0 : index
    %c0_223 = arith.constant 0 : index
    %341 = vector.load %arg17[%c0_222, %c0_223] : memref<16x128xf32, #tpu.memory_space<vmem>>, vector<16x128xf32>
    %cst_224 = arith.constant dense<0.000000e+00> : vector<16x128xf32>
    %342 = tpu.matmul %340, %341, %cst_224 {dimension_numbers = #tpu.dot_dimension_numbers<[1], [0], [0], [1], [0, 0, 1, 1], [], []>} : vector<16x16xf32>, vector<16x128xf32>, vector<16x128xf32> -> vector<16x128xf32>
    %c0_225 = arith.constant 0 : index
    %c0_226 = arith.constant 0 : index
    %343 = vector.load %arg16[%c0_225, %c0_226] : memref<24x16xf32, #tpu.memory_space<vmem>>, vector<24x16xf32>
    %cst_227 = arith.constant dense<0.000000e+00> : vector<24x128xf32>
    %344 = tpu.matmul %343, %342, %cst_227 {dimension_numbers = #tpu.dot_dimension_numbers<[1], [0], [0], [1], [0, 0, 1, 1], [], []>} : vector<24x16xf32>, vector<16x128xf32>, vector<24x128xf32> -> vector<24x128xf32>
    %c0_228 = arith.constant 0 : index
    %c0_229 = arith.constant 0 : index
    %c0_230 = arith.constant 0 : index
    %c0_231 = arith.constant 0 : index
    %345 = vector.load %arg18[%c0_228, %c0_229, %c0_230, %c0_231] : memref<1x1x24x128xf32, #tpu.memory_space<vmem>>, vector<1x1x24x128xf32>
    %346 = vector.shape_cast %345 : vector<1x1x24x128xf32> to vector<24x128xf32>
    %347 = vector.shape_cast %344 : vector<24x128xf32> to vector<1x1x24x128xf32>
    tpu.vector_store %arg18[%c0_228, %c0_229, %c0_230, %c0_231], %347 {strides = array<i32>} : memref<1x1x24x128xf32, #tpu.memory_space<vmem>>, vector<1x1x24x128xf32>,
    return
  }
  func.func @transform_0(%arg0: i32) -> (i32, i32, i32) {
    %c0_i32 = arith.constant 0 : i32
    %c0_i32_0 = arith.constant 0 : i32
    %c0_i32_1 = arith.constant 0 : i32
    return %arg0, %c0_i32, %c0_i32_0 : i32, i32, i32
  }
  func.func @transform_1(%arg0: i32) -> (i32, i32) {
    %c0_i32 = arith.constant 0 : i32
    %c0_i32_0 = arith.constant 0 : i32
    %c0_i32_1 = arith.constant 0 : i32
    return %c0_i32, %c0_i32_0 : i32, i32
  }
  func.func @transform_2(%arg0: i32) -> (i32, i32) {
    %c0_i32 = arith.constant 0 : i32
    %c0_i32_0 = arith.constant 0 : i32
    %c0_i32_1 = arith.constant 0 : i32
    return %c0_i32, %c0_i32_0 : i32, i32
  }
  func.func @transform_3(%arg0: i32) -> (i32, i32) {
    %c0_i32 = arith.constant 0 : i32
    %c0_i32_0 = arith.constant 0 : i32
    %c0_i32_1 = arith.constant 0 : i32
    return %c0_i32, %c0_i32_0 : i32, i32
  }
  func.func @transform_4(%arg0: i32) -> (i32, i32) {
    %c0_i32 = arith.constant 0 : i32
    %c0_i32_0 = arith.constant 0 : i32
    %c0_i32_1 = arith.constant 0 : i32
    return %c0_i32, %c0_i32_0 : i32, i32
  }
  func.func @transform_5(%arg0: i32) -> (i32, i32) {
    %c0_i32 = arith.constant 0 : i32
    %c0_i32_0 = arith.constant 0 : i32
    %c0_i32_1 = arith.constant 0 : i32
    return %c0_i32, %c0_i32_0 : i32, i32
  }
  func.func @transform_6(%arg0: i32) -> (i32, i32) {
    %c0_i32 = arith.constant 0 : i32
    %c0_i32_0 = arith.constant 0 : i32
    %c0_i32_1 = arith.constant 0 : i32
    return %c0_i32, %c0_i32_0 : i32, i32
  }
  func.func @transform_7(%arg0: i32) -> (i32, i32) {
    %c0_i32 = arith.constant 0 : i32
    %c0_i32_0 = arith.constant 0 : i32
    %c0_i32_1 = arith.constant 0 : i32
    return %c0_i32, %c0_i32_0 : i32, i32
  }
  func.func @transform_8(%arg0: i32) -> (i32, i32) {
    %c0_i32 = arith.constant 0 : i32
    %c0_i32_0 = arith.constant 0 : i32
    %c0_i32_1 = arith.constant 0 : i32
    return %c0_i32, %c0_i32_0 : i32, i32
  }
  func.func @transform_9(%arg0: i32) -> (i32, i32) {
    %c0_i32 = arith.constant 0 : i32
    %c0_i32_0 = arith.constant 0 : i32
    %c0_i32_1 = arith.constant 0 : i32
    return %c0_i32, %c0_i32_0 : i32, i32
  }
  func.func @transform_10(%arg0: i32) -> (i32, i32) {
    %c0_i32 = arith.constant 0 : i32
    %c0_i32_0 = arith.constant 0 : i32
    %c0_i32_1 = arith.constant 0 : i32
    return %c0_i32, %c0_i32_0 : i32, i32
  }
  func.func @transform_11(%arg0: i32) -> (i32, i32) {
    %c0_i32 = arith.constant 0 : i32
    %c0_i32_0 = arith.constant 0 : i32
    %c0_i32_1 = arith.constant 0 : i32
    return %c0_i32, %c0_i32_0 : i32, i32
  }
  func.func @transform_12(%arg0: i32) -> (i32, i32) {
    %c0_i32 = arith.constant 0 : i32
    %c0_i32_0 = arith.constant 0 : i32
    %c0_i32_1 = arith.constant 0 : i32
    return %c0_i32, %c0_i32_0 : i32, i32
  }
  func.func @transform_13(%arg0: i32) -> (i32, i32) {
    %c0_i32 = arith.constant 0 : i32
    %c0_i32_0 = arith.constant 0 : i32
    %c0_i32_1 = arith.constant 0 : i32
    return %c0_i32, %c0_i32_0 : i32, i32
  }
  func.func @transform_14(%arg0: i32) -> (i32, i32) {
    %c0_i32 = arith.constant 0 : i32
    %c0_i32_0 = arith.constant 0 : i32
    %c0_i32_1 = arith.constant 0 : i32
    return %c0_i32, %c0_i32_0 : i32, i32
  }
  func.func @transform_15(%arg0: i32) -> (i32, i32) {
    %c0_i32 = arith.constant 0 : i32
    %c0_i32_0 = arith.constant 0 : i32
    %c0_i32_1 = arith.constant 0 : i32
    return %c0_i32, %c0_i32_0 : i32, i32
  }
  func.func @transform_16(%arg0: i32) -> (i32, i32) {
    %c0_i32 = arith.constant 0 : i32
    %c0_i32_0 = arith.constant 0 : i32
    %c0_i32_1 = arith.constant 0 : i32
    return %c0_i32, %c0_i32_0 : i32, i32
  }
  func.func @transform_17(%arg0: i32) -> (i32, i32, i32, i32) {
    %c0_i32 = arith.constant 0 : i32
    %c0_i32_0 = arith.constant 0 : i32
    %c0_i32_1 = arith.constant 0 : i32
    %c0_i32_2 = arith.constant 0 : i32
    return %arg0, %c0_i32, %c0_i32_0, %c0_i32_1 : i32, i32, i32, i32
  }
}

</mosaic_0001>

<llo_original>
// kernel: tpu_custom_call.1
$region0: #{tpu_custom_call.1}
  #allocation0 [shape = 'u32[]', space=smem, size = 0x4, offset = 0x4, fixed_abs, tag = 'smem constant byte address 0x4 - core index']
  #allocation1 [shape = 'u32[144,128]{1,0:T(1,128)}', space=vmem, size = 0x12000, scoped, tag = 'internal scratch']
  #allocation2 [shape = 'f32[49,358]{1,0:T(8,128)}', space=vmem, size = 0x15000, scoped, tag = 'scratch operand']
  #allocation3 [shape = 'f32[16,290]{1,0:T(8,128)}', space=vmem, size = 0x6000, scoped, tag = 'scratch operand']
  #allocation4 [shape = 'f32[16,16]{1,0:T(8,128)}', space=vmem, size = 0x2000, scoped, tag = 'scratch operand']
  #allocation5 [shape = 'f32[1,1]{1,0:T(1,128)S(1)}', space=vmem, size = 0x200, scoped, tag = 'scoped memory for tpu_custom_call.1']
  #allocation6 [shape = 'f32[1,1]{1,0:T(1,128)S(1)}', space=vmem, size = 0x200, scoped, tag = 'scoped memory for tpu_custom_call.1']
  %s0 = inlined_call_operand.vmem [shape: f32[2,16,256], index: 0, kind: input, shape index: {}]
  %s1 = inlined_call_operand.vmem [shape: f32[32,16], index: 1, kind: input, shape index: {}]
  %s2 = inlined_call_operand.vmem [shape: f32[32,1], index: 2, kind: input, shape index: {}]
  %s3 = inlined_call_operand.vmem [shape: f32[16,32], index: 3, kind: input, shape index: {}]
  %s4 = inlined_call_operand.vmem [shape: f32[16,1], index: 4, kind: input, shape index: {}]
  %s5 = inlined_call_operand.vmem [shape: f32[49,16], index: 5, kind: input, shape index: {}]
  %s6 = inlined_call_operand.<no memory space> [shape: f32[1,1], index: 6, kind: input, shape index: {}]
  %s7 = inlined_call_operand.vmem [shape: f32[7,256], index: 7, kind: input, shape index: {}]
  %s8 = inlined_call_operand.vmem [shape: f32[16,9], index: 8, kind: input, shape index: {}]
  %s9 = inlined_call_operand.vmem [shape: f32[16,1], index: 9, kind: input, shape index: {}]
  %s10 = inlined_call_operand.vmem [shape: f32[3,256], index: 10, kind: input, shape index: {}]
  %s11 = inlined_call_operand.vmem [shape: f32[32,16], index: 11, kind: input, shape index: {}]
  %s12 = inlined_call_operand.vmem [shape: f32[32,1], index: 12, kind: input, shape index: {}]
  %s13 = inlined_call_operand.vmem [shape: f32[1,32], index: 13, kind: input, shape index: {}]
  %s14 = inlined_call_operand.<no memory space> [shape: f32[1,1], index: 14, kind: input, shape index: {}]
  %s15 = inlined_call_operand.vmem [shape: f32[24,16], index: 15, kind: input, shape index: {}]
  %s16 = inlined_call_operand.vmem [shape: f32[16,128], index: 16, kind: input, shape index: {}]
  %s17 = inlined_call_operand.hbm [shape: f32[2,1,24,128], index: 17, kind: output, shape index: {}]
  %s18 = sld [smem:[#allocation0]]
  $region101: #{tpu_custom_call.1} parent=0
    _
  %s20 = ssub.s32 1, %s18
  %s21 = scalar_select 0, %s20, %s18
  %v22 = vstv %s6
  %23 = vst [vmem:[#allocation5] sm:$0x1] %v22
  %v24 = vstv %s14
  %25 = vst [vmem:[#allocation6] sm:$0x1] %v24
  $region1: #{tpu_custom_call.1} parent=0
    #allocation7 [shape = 'u8[24576]{0}', space=vmem, size = 0x6000, scoped, tag = 'output window, operand 0']
    #allocation8 [shape = 's32[2]{0}', space=sflag, size = 0x8, scoped, tag = 'scoped memory for tpu_custom_call.1']
    %26 = vsyncpa [#allocation8], 0
    %s27 = scalar_lea.sflag [#allocation8], 1
    %28 = vsyncpa %s27, 0
    loop: start=0, step=1, limit=4
    $region2: #{tpu_custom_call.1} parent=1 // loop_pre_header
      _
    $region3: #{tpu_custom_call.1} parent=1 // loop_header
      %s30 = sphi 0, %s34
      %p31 = scmp.ge.s32.totalorder %s30, 4
      %s40 = sphi 0, %s42
      %s43 = sphi 0, %s40
      %s44 = sphi 0, %s43
      %s60 = sphi 0, %s44
      %s64 = sphi 0, %s64
      %s66 = sphi 0, %s64
      %s67 = sphi 0, %s66
      %s81 = sphi 0, %s67
      %s85 = sphi 0, %s85
      %s87 = sphi 0, %s85
      %s88 = sphi 0, %s87
      %s102 = sphi 0, %s88
      %s106 = sphi 0, %s106
      %s108 = sphi 0, %s106
      %s109 = sphi 0, %s108
      %s123 = sphi 0, %s109
      %s127 = sphi 0, %s127
      %s129 = sphi 0, %s127
      %s130 = sphi 0, %s129
      %s144 = sphi 0, %s130
      %s148 = sphi 0, %s148
      %s150 = sphi 0, %s148
      %s151 = sphi 0, %s150
      %s165 = sphi 0, %s151
      %s169 = sphi 0, %s169
      %s171 = sphi 0, %s169
      %s172 = sphi 0, %s171
      %s186 = sphi 0, %s172
      %s190 = sphi 0, %s190
      %s192 = sphi 0, %s190
      %s193 = sphi 0, %s192
      %s207 = sphi 0, %s193
      %s211 = sphi 0, %s211
      %s213 = sphi 0, %s211
      %s214 = sphi 0, %s213
      %s228 = sphi 0, %s214
      %s232 = sphi 0, %s232
      %s234 = sphi 0, %s232
      %s235 = sphi 0, %s234
      %s249 = sphi 0, %s235
      %s253 = sphi 0, %s253
      %s255 = sphi 0, %s253
      %s256 = sphi 0, %s255
      %s270 = sphi 0, %s256
      %s274 = sphi 0, %s274
      %s276 = sphi 0, %s274
      %s277 = sphi 0, %s276
      %s291 = sphi 0, %s277
      %s295 = sphi 0, %s295
      %s297 = sphi 0, %s295
      %s298 = sphi 0, %s297
      %s312 = sphi 0, %s298
      %s316 = sphi 0, %s316
      %s318 = sphi 0, %s316
      %s319 = sphi 0, %s318
      %s333 = sphi 0, %s319
      %s337 = sphi 0, %s337
      %s339 = sphi 0, %s337
      %s340 = sphi 0, %s339
      %s354 = sphi 0, %s340
      %s358 = sphi 0, %s358
      %s360 = sphi 0, %s358
      %s361 = sphi 0, %s360
      %s375 = sphi 0, %s361
      %s379 = sphi 0, %s379
      %s381 = sphi 0, %s379
      %s382 = sphi 0, %s381
      %s396 = sphi 0, %s382
      %s402 = sphi 0, %s404
      %s405 = sphi 0, %s402
      %s406 = sphi 0, %s405
      %s422 = sphi 0, %s406
    $region4: #{tpu_custom_call.1} parent=1 // loop_header_branch
      %33 = sbr.rel (%p31) target = $region8
    $region5: #{tpu_custom_call.1} parent=1 // loop_body
      %s35 = ssub.s32 %s30, 1
      %s36 = ssub.s32 %s30, 2
      %s37 = sadd.s32 %s30, 1
      %s38 = ssub.s32 %s30, %s37
      %p39 = scmp.eq.s32.totalorder %s38, 0
      %s41 = sadd.s32 %s40, 1
      %s42 = scalar_select %p39, %s40, %s41
      %p45 = pneg %p39
      %p46 = scmp.eq.s32.totalorder %s30, 1
      %p47 = por %p45, %p46
      %p48 = scmp.ne.s32.totalorder %s40, %s43
      %p49 = scmp.eq.s32.totalorder %s30, 0
      %p50 = por %p48, %p49
      %p51 = scmp.ne.s32.totalorder %s40, %s43
      %p52 = scmp.eq.s32.totalorder %s35, 1
      %p53 = por %p51, %p52
      %p54 = scmp.ne.s32.totalorder %s43, %s44
      %p55 = scmp.eq.s32.totalorder %s35, 0
      %p56 = por %p54, %p55
      %p57 = scmp.ne.s32.totalorder %s43, %s44
      %p58 = scmp.eq.s32.totalorder %s36, 1
      %p59 = por %p57, %p58
      %p61 = scmp.ne.s32.totalorder %s44, %s60
      %p62 = scmp.eq.s32.totalorder %s36, 0
      %p63 = por %p61, %p62
      %s65 = sadd.s32 %s64, 1
      %p68 = scmp.eq.s32.totalorder %s30, 1
      %p69 = scmp.ne.s32.totalorder %s64, %s66
      %p70 = scmp.eq.s32.totalorder %s30, 0
      %p71 = por %p69, %p70
      %p72 = scmp.ne.s32.totalorder %s64, %s66
      %p73 = scmp.eq.s32.totalorder %s35, 1
      %p74 = por %p72, %p73
      %p75 = scmp.ne.s32.totalorder %s66, %s67
      %p76 = scmp.eq.s32.totalorder %s35, 0
      %p77 = por %p75, %p76
      %p78 = scmp.ne.s32.totalorder %s66, %s67
      %p79 = scmp.eq.s32.totalorder %s36, 1
      %p80 = por %p78, %p79
      %p82 = scmp.ne.s32.totalorder %s67, %s81
      %p83 = scmp.eq.s32.totalorder %s36, 0
      %p84 = por %p82, %p83
      %s86 = sadd.s32 %s85, 1
      %p89 = scmp.eq.s32.totalorder %s30, 1
      %p90 = scmp.ne.s32.totalorder %s85, %s87
      %p91 = scmp.eq.s32.totalorder %s30, 0
      %p92 = por %p90, %p91
      %p93 = scmp.ne.s32.totalorder %s85, %s87
      %p94 = scmp.eq.s32.totalorder %s35, 1
      %p95 = por %p93, %p94
      %p96 = scmp.ne.s32.totalorder %s87, %s88
      %p97 = scmp.eq.s32.totalorder %s35, 0
      %p98 = por %p96, %p97
      %p99 = scmp.ne.s32.totalorder %s87, %s88
      %p100 = scmp.eq.s32.totalorder %s36, 1
      %p101 = por %p99, %p100
      %p103 = scmp.ne.s32.totalorder %s88, %s102
      %p104 = scmp.eq.s32.totalorder %s36, 0
      %p105 = por %p103, %p104
      %s107 = sadd.s32 %s106, 1
      %p110 = scmp.eq.s32.totalorder %s30, 1
      %p111 = scmp.ne.s32.totalorder %s106, %s108
      %p112 = scmp.eq.s32.totalorder %s30, 0
      %p113 = por %p111, %p112
      %p114 = scmp.ne.s32.totalorder %s106, %s108
      %p115 = scmp.eq.s32.totalorder %s35, 1
      %p116 = por %p114, %p115
      %p117 = scmp.ne.s32.totalorder %s108, %s109
      %p118 = scmp.eq.s32.totalorder %s35, 0
      %p119 = por %p117, %p118
      %p120 = scmp.ne.s32.totalorder %s108, %s109
      %p121 = scmp.eq.s32.totalorder %s36, 1
      %p122 = por %p120, %p121
      %p124 = scmp.ne.s32.totalorder %s109, %s123
      %p125 = scmp.eq.s32.totalorder %s36, 0
      %p126 = por %p124, %p125
      %s128 = sadd.s32 %s127, 1
      %p131 = scmp.eq.s32.totalorder %s30, 1
      %p132 = scmp.ne.s32.totalorder %s127, %s129
      %p133 = scmp.eq.s32.totalorder %s30, 0
      %p134 = por %p132, %p133
      %p135 = scmp.ne.s32.totalorder %s127, %s129
      %p136 = scmp.eq.s32.totalorder %s35, 1
      %p137 = por %p135, %p136
      %p138 = scmp.ne.s32.totalorder %s129, %s130
      %p139 = scmp.eq.s32.totalorder %s35, 0
      %p140 = por %p138, %p139
      %p141 = scmp.ne.s32.totalorder %s129, %s130
      %p142 = scmp.eq.s32.totalorder %s36, 1
      %p143 = por %p141, %p142
      %p145 = scmp.ne.s32.totalorder %s130, %s144
      %p146 = scmp.eq.s32.totalorder %s36, 0
      %p147 = por %p145, %p146
      %s149 = sadd.s32 %s148, 1
      %p152 = scmp.eq.s32.totalorder %s30, 1
      %p153 = scmp.ne.s32.totalorder %s148, %s150
      %p154 = scmp.eq.s32.totalorder %s30, 0
      %p155 = por %p153, %p154
      %p156 = scmp.ne.s32.totalorder %s148, %s150
      %p157 = scmp.eq.s32.totalorder %s35, 1
      %p158 = por %p156, %p157
      %p159 = scmp.ne.s32.totalorder %s150, %s151
      %p160 = scmp.eq.s32.totalorder %s35, 0
      %p161 = por %p159, %p160
      %p162 = scmp.ne.s32.totalorder %s150, %s151
      %p163 = scmp.eq.s32.totalorder %s36, 1
      %p164 = por %p162, %p163
      %p166 = scmp.ne.s32.totalorder %s151, %s165
      %p167 = scmp.eq.s32.totalorder %s36, 0
      %p168 = por %p166, %p167
      %s170 = sadd.s32 %s169, 1
      %p173 = scmp.eq.s32.totalorder %s30, 1
      %p174 = scmp.ne.s32.totalorder %s169, %s171
      %p175 = scmp.eq.s32.totalorder %s30, 0
      %p176 = por %p174, %p175
      %p177 = scmp.ne.s32.totalorder %s169, %s171
      %p178 = scmp.eq.s32.totalorder %s35, 1
      %p179 = por %p177, %p178
      %p180 = scmp.ne.s32.totalorder %s171, %s172
      %p181 = scmp.eq.s32.totalorder %s35, 0
      %p182 = por %p180, %p181
      %p183 = scmp.ne.s32.totalorder %s171, %s172
      %p184 = scmp.eq.s32.totalorder %s36, 1
      %p185 = por %p183, %p184
      %p187 = scmp.ne.s32.totalorder %s172, %s186
      %p188 = scmp.eq.s32.totalorder %s36, 0
      %p189 = por %p187, %p188
      %s191 = sadd.s32 %s190, 1
      %p194 = scmp.eq.s32.totalorder %s30, 1
      %p195 = scmp.ne.s32.totalorder %s190, %s192
      %p196 = scmp.eq.s32.totalorder %s30, 0
      %p197 = por %p195, %p196
      %p198 = scmp.ne.s32.totalorder %s190, %s192
      %p199 = scmp.eq.s32.totalorder %s35, 1
      %p200 = por %p198, %p199
      %p201 = scmp.ne.s32.totalorder %s192, %s193
      %p202 = scmp.eq.s32.totalorder %s35, 0
      %p203 = por %p201, %p202
      %p204 = scmp.ne.s32.totalorder %s192, %s193
      %p205 = scmp.eq.s32.totalorder %s36, 1
      %p206 = por %p204, %p205
      %p208 = scmp.ne.s32.totalorder %s193, %s207
      %p209 = scmp.eq.s32.totalorder %s36, 0
      %p210 = por %p208, %p209
      %s212 = sadd.s32 %s211, 1
      %p215 = scmp.eq.s32.totalorder %s30, 1
      %p216 = scmp.ne.s32.totalorder %s211, %s213
      %p217 = scmp.eq.s32.totalorder %s30, 0
      %p218 = por %p216, %p217
      %p219 = scmp.ne.s32.totalorder %s211, %s213
      %p220 = scmp.eq.s32.totalorder %s35, 1
      %p221 = por %p219, %p220
      %p222 = scmp.ne.s32.totalorder %s213, %s214
      %p223 = scmp.eq.s32.totalorder %s35, 0
      %p224 = por %p222, %p223
      %p225 = scmp.ne.s32.totalorder %s213, %s214
      %p226 = scmp.eq.s32.totalorder %s36, 1
      %p227 = por %p225, %p226
      %p229 = scmp.ne.s32.totalorder %s214, %s228
      %p230 = scmp.eq.s32.totalorder %s36, 0
      %p231 = por %p229, %p230
      %s233 = sadd.s32 %s232, 1
      %p236 = scmp.eq.s32.totalorder %s30, 1
      %p237 = scmp.ne.s32.totalorder %s232, %s234
      %p238 = scmp.eq.s32.totalorder %s30, 0
      %p239 = por %p237, %p238
      %p240 = scmp.ne.s32.totalorder %s232, %s234
      %p241 = scmp.eq.s32.totalorder %s35, 1
      %p242 = por %p240, %p241
      %p243 = scmp.ne.s32.totalorder %s234, %s235
      %p244 = scmp.eq.s32.totalorder %s35, 0
      %p245 = por %p243, %p244
      %p246 = scmp.ne.s32.totalorder %s234, %s235
      %p247 = scmp.eq.s32.totalorder %s36, 1
      %p248 = por %p246, %p247
      %p250 = scmp.ne.s32.totalorder %s235, %s249
      %p251 = scmp.eq.s32.totalorder %s36, 0
      %p252 = por %p250, %p251
      %s254 = sadd.s32 %s253, 1
      %p257 = scmp.eq.s32.totalorder %s30, 1
      %p258 = scmp.ne.s32.totalorder %s253, %s255
      %p259 = scmp.eq.s32.totalorder %s30, 0
      %p260 = por %p258, %p259
      %p261 = scmp.ne.s32.totalorder %s253, %s255
      %p262 = scmp.eq.s32.totalorder %s35, 1
      %p263 = por %p261, %p262
      %p264 = scmp.ne.s32.totalorder %s255, %s256
      %p265 = scmp.eq.s32.totalorder %s35, 0
      %p266 = por %p264, %p265
      %p267 = scmp.ne.s32.totalorder %s255, %s256
      %p268 = scmp.eq.s32.totalorder %s36, 1
      %p269 = por %p267, %p268
      %p271 = scmp.ne.s32.totalorder %s256, %s270
      %p272 = scmp.eq.s32.totalorder %s36, 0
      %p273 = por %p271, %p272
      %s275 = sadd.s32 %s274, 1
      %p278 = scmp.eq.s32.totalorder %s30, 1
      %p279 = scmp.ne.s32.totalorder %s274, %s276
      %p280 = scmp.eq.s32.totalorder %s30, 0
      %p281 = por %p279, %p280
      %p282 = scmp.ne.s32.totalorder %s274, %s276
      %p283 = scmp.eq.s32.totalorder %s35, 1
      %p284 = por %p282, %p283
      %p285 = scmp.ne.s32.totalorder %s276, %s277
      %p286 = scmp.eq.s32.totalorder %s35, 0
      %p287 = por %p285, %p286
      %p288 = scmp.ne.s32.totalorder %s276, %s277
      %p289 = scmp.eq.s32.totalorder %s36, 1
      %p290 = por %p288, %p289
      %p292 = scmp.ne.s32.totalorder %s277, %s291
      %p293 = scmp.eq.s32.totalorder %s36, 0
      %p294 = por %p292, %p293
      %s296 = sadd.s32 %s295, 1
      %p299 = scmp.eq.s32.totalorder %s30, 1
      %p300 = scmp.ne.s32.totalorder %s295, %s297
      %p301 = scmp.eq.s32.totalorder %s30, 0
      %p302 = por %p300, %p301
      %p303 = scmp.ne.s32.totalorder %s295, %s297
      %p304 = scmp.eq.s32.totalorder %s35, 1
      %p305 = por %p303, %p304
      %p306 = scmp.ne.s32.totalorder %s297, %s298
      %p307 = scmp.eq.s32.totalorder %s35, 0
      %p308 = por %p306, %p307
      %p309 = scmp.ne.s32.totalorder %s297, %s298
      %p310 = scmp.eq.s32.totalorder %s36, 1
      %p311 = por %p309, %p310
      %p313 = scmp.ne.s32.totalorder %s298, %s312
      %p314 = scmp.eq.s32.totalorder %s36, 0
      %p315 = por %p313, %p314
      %s317 = sadd.s32 %s316, 1
      %p320 = scmp.eq.s32.totalorder %s30, 1
      %p321 = scmp.ne.s32.totalorder %s316, %s318
      %p322 = scmp.eq.s32.totalorder %s30, 0
      %p323 = por %p321, %p322
      %p324 = scmp.ne.s32.totalorder %s316, %s318
      %p325 = scmp.eq.s32.totalorder %s35, 1
      %p326 = por %p324, %p325
      %p327 = scmp.ne.s32.totalorder %s318, %s319
      %p328 = scmp.eq.s32.totalorder %s35, 0
      %p329 = por %p327, %p328
      %p330 = scmp.ne.s32.totalorder %s318, %s319
      %p331 = scmp.eq.s32.totalorder %s36, 1
      %p332 = por %p330, %p331
      %p334 = scmp.ne.s32.totalorder %s319, %s333
      %p335 = scmp.eq.s32.totalorder %s36, 0
      %p336 = por %p334, %p335
      %s338 = sadd.s32 %s337, 1
      %p341 = scmp.eq.s32.totalorder %s30, 1
      %p342 = scmp.ne.s32.totalorder %s337, %s339
      %p343 = scmp.eq.s32.totalorder %s30, 0
      %p344 = por %p342, %p343
      %p345 = scmp.ne.s32.totalorder %s337, %s339
      %p346 = scmp.eq.s32.totalorder %s35, 1
      %p347 = por %p345, %p346
      %p348 = scmp.ne.s32.totalorder %s339, %s340
      %p349 = scmp.eq.s32.totalorder %s35, 0
      %p350 = por %p348, %p349
      %p351 = scmp.ne.s32.totalorder %s339, %s340
      %p352 = scmp.eq.s32.totalorder %s36, 1
      %p353 = por %p351, %p352
      %p355 = scmp.ne.s32.totalorder %s340, %s354
      %p356 = scmp.eq.s32.totalorder %s36, 0
      %p357 = por %p355, %p356
      %s359 = sadd.s32 %s358, 1
      %p362 = scmp.eq.s32.totalorder %s30, 1
      %p363 = scmp.ne.s32.totalorder %s358, %s360
      %p364 = scmp.eq.s32.totalorder %s30, 0
      %p365 = por %p363, %p364
      %p366 = scmp.ne.s32.totalorder %s358, %s360
      %p367 = scmp.eq.s32.totalorder %s35, 1
      %p368 = por %p366, %p367
      %p369 = scmp.ne.s32.totalorder %s360, %s361
      %p370 = scmp.eq.s32.totalorder %s35, 0
      %p371 = por %p369, %p370
      %p372 = scmp.ne.s32.totalorder %s360, %s361
      %p373 = scmp.eq.s32.totalorder %s36, 1
      %p374 = por %p372, %p373
      %p376 = scmp.ne.s32.totalorder %s361, %s375
      %p377 = scmp.eq.s32.totalorder %s36, 0
      %p378 = por %p376, %p377
      %s380 = sadd.s32 %s379, 1
      %p383 = scmp.eq.s32.totalorder %s30, 1
      %p384 = scmp.ne.s32.totalorder %s379, %s381
      %p385 = scmp.eq.s32.totalorder %s30, 0
      %p386 = por %p384, %p385
      %p387 = scmp.ne.s32.totalorder %s379, %s381
      %p388 = scmp.eq.s32.totalorder %s35, 1
      %p389 = por %p387, %p388
      %p390 = scmp.ne.s32.totalorder %s381, %s382
      %p391 = scmp.eq.s32.totalorder %s35, 0
      %p392 = por %p390, %p391
      %p393 = scmp.ne.s32.totalorder %s381, %s382
      %p394 = scmp.eq.s32.totalorder %s36, 1
      %p395 = por %p393, %p394
      %p397 = scmp.ne.s32.totalorder %s382, %s396
      %p398 = scmp.eq.s32.totalorder %s36, 0
      %p399 = por %p397, %p398
      %s400 = ssub.s32 %s30, %s37
      %p401 = scmp.eq.s32.totalorder %s400, 0
      %s403 = sadd.s32 %s402, 1
      %s404 = scalar_select %p401, %s402, %s403
      %p407 = pneg %p401
      %p408 = scmp.eq.s32.totalorder %s30, 1
      %p409 = por %p407, %p408
      %p410 = scmp.ne.s32.totalorder %s402, %s405
      %p411 = scmp.eq.s32.totalorder %s30, 0
      %p412 = por %p410, %p411
      %p413 = scmp.ne.s32.totalorder %s402, %s405
      %p414 = scmp.eq.s32.totalorder %s35, 1
      %p415 = por %p413, %p414
      %p416 = scmp.ne.s32.totalorder %s405, %s406
      %p417 = scmp.eq.s32.totalorder %s35, 0
      %p418 = por %p416, %p417
      %p419 = scmp.ne.s32.totalorder %s405, %s406
      %p420 = scmp.eq.s32.totalorder %s36, 1
      %p421 = por %p419, %p420
      %p423 = scmp.ne.s32.totalorder %s406, %s422
      %p424 = scmp.eq.s32.totalorder %s36, 0
      %p425 = por %p423, %p424
      %p426 = scmp.le.s32.totalorder 1, %s30
      %p427 = scmp.lt.s32.totalorder %s30, 3
      %p428 = pnand %p426, %p427
      %p429 = pneg %p428
      // Predicated region
      $region9: #{tpu_custom_call.1} parent=5 // pred_check
        _
      $region10: #{tpu_custom_call.1} parent=5 // pred_check_branch
        %431 = sbr.rel (%p428) target = $region12
      $region11: #{tpu_custom_call.1} parent=5 // pred_region
        %s432 = ssub.s32 %s30, 1
        // Predicated region
        $region13: #{tpu_custom_call.1} parent=11 // pred_check
          %p433 = pneg %p77
        $region14: #{tpu_custom_call.1} parent=11 // pred_check_branch
          %435 = sbr.rel (%p433) target = $region16
        $region15: #{tpu_custom_call.1} parent=11 // pred_region
          _
        $region16: #{tpu_custom_call.1} parent=11 // pred_fallthru
          _
        // Predicated region
        $region17: #{tpu_custom_call.1} parent=11 // pred_check
          %p436 = pneg %p98
        $region18: #{tpu_custom_call.1} parent=11 // pred_check_branch
          %438 = sbr.rel (%p436) target = $region20
        $region19: #{tpu_custom_call.1} parent=11 // pred_region
          _
        $region20: #{tpu_custom_call.1} parent=11 // pred_fallthru
          _
        // Predicated region
        $region21: #{tpu_custom_call.1} parent=11 // pred_check
          %p439 = pneg %p119
        $region22: #{tpu_custom_call.1} parent=11 // pred_check_branch
          %441 = sbr.rel (%p439) target = $region24
        $region23: #{tpu_custom_call.1} parent=11 // pred_region
          _
        $region24: #{tpu_custom_call.1} parent=11 // pred_fallthru
          _
        // Predicated region
        $region25: #{tpu_custom_call.1} parent=11 // pred_check
          %p442 = pneg %p140
        $region26: #{tpu_custom_call.1} parent=11 // pred_check_branch
          %444 = sbr.rel (%p442) target = $region28
        $region27: #{tpu_custom_call.1} parent=11 // pred_region
          _
        $region28: #{tpu_custom_call.1} parent=11 // pred_fallthru
          _
        // Predicated region
        $region29: #{tpu_custom_call.1} parent=11 // pred_check
          %p445 = pneg %p161
        $region30: #{tpu_custom_call.1} parent=11 // pred_check_branch
          %447 = sbr.rel (%p445) target = $region32
        $region31: #{tpu_custom_call.1} parent=11 // pred_region
          _
        $region32: #{tpu_custom_call.1} parent=11 // pred_fallthru
          _
        // Predicated region
        $region33: #{tpu_custom_call.1} parent=11 // pred_check
          %p448 = pneg %p182
        $region34: #{tpu_custom_call.1} parent=11 // pred_check_branch
          %450 = sbr.rel (%p448) target = $region36
        $region35: #{tpu_custom_call.1} parent=11 // pred_region
          _
        $region36: #{tpu_custom_call.1} parent=11 // pred_fallthru
          _
        // Predicated region
        $region37: #{tpu_custom_call.1} parent=11 // pred_check
          %p451 = pneg %p203
        $region38: #{tpu_custom_call.1} parent=11 // pred_check_branch
          %453 = sbr.rel (%p451) target = $region40
        $region39: #{tpu_custom_call.1} parent=11 // pred_region
          _
        $region40: #{tpu_custom_call.1} parent=11 // pred_fallthru
          _
        // Predicated region
        $region41: #{tpu_custom_call.1} parent=11 // pred_check
          %p454 = pneg %p224
        $region42: #{tpu_custom_call.1} parent=11 // pred_check_branch
          %456 = sbr.rel (%p454) target = $region44
        $region43: #{tpu_custom_call.1} parent=11 // pred_region
          _
        $region44: #{tpu_custom_call.1} parent=11 // pred_fallthru
          _
        // Predicated region
        $region45: #{tpu_custom_call.1} parent=11 // pred_check
          %p457 = pneg %p245
        $region46: #{tpu_custom_call.1} parent=11 // pred_check_branch
          %459 = sbr.rel (%p457) target = $region48
        $region47: #{tpu_custom_call.1} parent=11 // pred_region
          _
        $region48: #{tpu_custom_call.1} parent=11 // pred_fallthru
          _
        // Predicated region
        $region49: #{tpu_custom_call.1} parent=11 // pred_check
          %p460 = pneg %p266
        $region50: #{tpu_custom_call.1} parent=11 // pred_check_branch
          %462 = sbr.rel (%p460) target = $region52
        $region51: #{tpu_custom_call.1} parent=11 // pred_region
          _
        $region52: #{tpu_custom_call.1} parent=11 // pred_fallthru
          _
        // Predicated region
        $region53: #{tpu_custom_call.1} parent=11 // pred_check
          %p463 = pneg %p287
        $region54: #{tpu_custom_call.1} parent=11 // pred_check_branch
          %465 = sbr.rel (%p463) target = $region56
        $region55: #{tpu_custom_call.1} parent=11 // pred_region
          _
        $region56: #{tpu_custom_call.1} parent=11 // pred_fallthru
          _
        // Predicated region
        $region57: #{tpu_custom_call.1} parent=11 // pred_check
          %p466 = pneg %p308
        $region58: #{tpu_custom_call.1} parent=11 // pred_check_branch
          %468 = sbr.rel (%p466) target = $region60
        $region59: #{tpu_custom_call.1} parent=11 // pred_region
          _
        $region60: #{tpu_custom_call.1} parent=11 // pred_fallthru
          _
        // Predicated region
        $region61: #{tpu_custom_call.1} parent=11 // pred_check
          %p469 = pneg %p329
        $region62: #{tpu_custom_call.1} parent=11 // pred_check_branch
          %471 = sbr.rel (%p469) target = $region64
        $region63: #{tpu_custom_call.1} parent=11 // pred_region
          _
        $region64: #{tpu_custom_call.1} parent=11 // pred_fallthru
          _
        // Predicated region
        $region65: #{tpu_custom_call.1} parent=11 // pred_check
          %p472 = pneg %p350
        $region66: #{tpu_custom_call.1} parent=11 // pred_check_branch
          %474 = sbr.rel (%p472) target = $region68
        $region67: #{tpu_custom_call.1} parent=11 // pred_region
          _
        $region68: #{tpu_custom_call.1} parent=11 // pred_fallthru
          _
        // Predicated region
        $region69: #{tpu_custom_call.1} parent=11 // pred_check
          %p475 = pneg %p371
        $region70: #{tpu_custom_call.1} parent=11 // pred_check_branch
          %477 = sbr.rel (%p475) target = $region72
        $region71: #{tpu_custom_call.1} parent=11 // pred_region
          _
        $region72: #{tpu_custom_call.1} parent=11 // pred_fallthru
          _
        // Predicated region
        $region73: #{tpu_custom_call.1} parent=11 // pred_check
          %p478 = pneg %p392
        $region74: #{tpu_custom_call.1} parent=11 // pred_check_branch
          %480 = sbr.rel (%p478) target = $region76
        $region75: #{tpu_custom_call.1} parent=11 // pred_region
          _
        $region76: #{tpu_custom_call.1} parent=11 // pred_fallthru
          _
      $region12: #{tpu_custom_call.1} parent=5 // pred_fallthru
        _
      %p481 = scmp.lt.s32.totalorder %s30, 2
      // Predicated region
      $region77: #{tpu_custom_call.1} parent=5 // pred_check
        %p482 = pneg %p481
      $region78: #{tpu_custom_call.1} parent=5 // pred_check_branch
        %484 = sbr.rel (%p482) target = $region80
      $region79: #{tpu_custom_call.1} parent=5 // pred_region
        // Predicated region
        $region81: #{tpu_custom_call.1} parent=79 // pred_check
          %p485 = pneg %p50
        $region82: #{tpu_custom_call.1} parent=79 // pred_check_branch
          %487 = sbr.rel (%p485) target = $region84
        $region83: #{tpu_custom_call.1} parent=79 // pred_region
          %p488 = scmp.lt.s32.totalorder %s30, 1
          %s489 = scalar_select %p488, %s30, 1
          %s490 = smul.addr %s489, 4
          %s491 = smul.addr %s490, 8
          %s492 = scalar_lea.vmem %s0, %s491
        $region84: #{tpu_custom_call.1} parent=79 // pred_fallthru
          _
      $region80: #{tpu_custom_call.1} parent=5 // pred_fallthru
        _
      %p493 = scmp.le.s32.totalorder 1, %s30
      %p494 = scmp.lt.s32.totalorder %s30, 3
      %p495 = pnand %p493, %p494
      %p496 = pneg %p495
      // Predicated region
      $region85: #{tpu_custom_call.1} parent=5 // pred_check
        _
      $region86: #{tpu_custom_call.1} parent=5 // pred_check_branch
        %498 = sbr.rel (%p495) target = $region88
      $region87: #{tpu_custom_call.1} parent=5 // pred_region
        %s499 = ssub.s32 %s30, 1
        %p500 = scmp.lt.s32.totalorder %s35, 1
        %s501 = scalar_select %p500, %s35, 1
        %s502 = smul.addr %s501, 4
        %s503 = smul.addr %s502, 8
        %s504 = scalar_lea.vmem %s0, %s503
        %p505 = pneg %p56
        %p506 = pneg %p53
        %p507 = pneg %p77
        %p508 = pneg %p74
        %p509 = pneg %p98
        %p510 = pneg %p95
        %p511 = pneg %p119
        %p512 = pneg %p116
        %p513 = pneg %p140
        %p514 = pneg %p137
        %p515 = pneg %p161
        %p516 = pneg %p158
        %p517 = pneg %p182
        %p518 = pneg %p179
        %p519 = pneg %p203
        %p520 = pneg %p200
        %p521 = pneg %p224
        %p522 = pneg %p221
        %p523 = pneg %p245
        %p524 = pneg %p242
        %p525 = pneg %p266
        %p526 = pneg %p263
        %p527 = pneg %p287
        %p528 = pneg %p284
        %p529 = pneg %p308
        %p530 = pneg %p305
        %p531 = pneg %p329
        %p532 = pneg %p326
        %p533 = pneg %p350
        %p534 = pneg %p347
        %p535 = pneg %p371
        %p536 = pneg %p368
        %p537 = pneg %p392
        %p538 = pneg %p389
        %p539 = pneg %p418
        %p540 = pneg %p415
        %s541 = sand.u32 %s405, 1
        %s542 = scalar_lea.sflag [#allocation8], %s541
        %s543 = sand.u32 %s405, 1
        %s544 = smul.addr %s543, 24
        %s545 = scalar_lea.vmem [#allocation7], %s544
        %p546 = scmp.lt.s32.totalorder %s35, 1
        %s547 = scalar_select %p546, %s35, 1
        %s548 = smul.addr %s547, 4
        %s549 = smul.addr %s548, 8
        %s550 = scalar_lea.vmem %s0, %s549
        %v551 = vld [vmem:[%s550] sm:$0xff]
        %v552 = vld [vmem:[%s550 + $0x8] sm:$0xff]
        %v553 = vld [vmem:[%s550 + $0x10] sm:$0xff]
        %v554 = vld [vmem:[%s550 + $0x18] sm:$0xff]
        %v555 = vadd.f32 %v551, %v552
        %556 = vadd.xlane.f32.xlu0 %v555
        %v557 = vpop.xlane.xlu0 %556
        %v558 = vadd.f32 %v553, %v554
        %559 = vadd.xlane.f32.xlu0 %v558
        %v560 = vpop.xlane.xlu0 %559
        %v561 = vmul.f32 %v557, 0.00390625
        %v562 = vmul.f32 %v560, 0.00390625
        %v563 = vld [vmem:[%s1] sm:$0xff]
        %v564 = vld [vmem:[%s1 + $0x8] sm:$0xff]
        %v565 = vld [vmem:[%s1 + $0x10] sm:$0xff]
        %v566 = vld [vmem:[%s1 + $0x18] sm:$0xff]
        %v567 = vld [vmem:[%s2] sm:$0xff]
        %v568 = vld [vmem:[%s2 + $0x8] sm:$0xff]
        %v569 = vld [vmem:[%s2 + $0x10] sm:$0xff]
        %v570 = vld [vmem:[%s2 + $0x18] sm:$0xff]
        %vm571 = vcmask 130048
        %v573 = vsel %vm571, %v563, 0
        %v576 = vsel %vm571, %v564, 0
        %v579 = vsel %vm571, %v565, 0
        %v582 = vsel %vm571, %v566, 0
        %584 = vmatprep.subr.mxu0 0.0
        %585 = vmatpush1.msra.mxu0 0.0
        %586 = vmatprep.subr.mxu0 0.0
        %587 = vmatpush1.msra.mxu0 0.0
        %588 = vmatprep.subr.mxu0 0.0
        %589 = vmatpush1.msra.mxu0 0.0
        %590 = vmatprep.subr.mxu0 0.0
        %591 = vmatpush1.msra.mxu0 0.0
        %592 = vmatprep.subr.mxu0 0.0
        %593 = vmatpush1.msra.mxu0 0.0
        %594 = vmatprep.subr.mxu0 0.0
        %595 = vmatpush1.msra.mxu0 0.0
        %596 = vmatprep.subr.mxu0 0.0
        %597 = vmatpush1.msra.mxu0 0.0
        %598 = vmatprep.subr.mxu0 0.0
        %599 = vmatpush1.msra.mxu0 0.0
        %600 = vmatprep.subr.mxu0 0.0
        %601 = vmatpush1.msra.mxu0 0.0
        %602 = vmatprep.subr.mxu0 0.0
        %603 = vmatpush1.msra.mxu0 0.0
        %604 = vmatprep.subr.mxu0 0.0
        %605 = vmatpush1.msra.mxu0 0.0
        %606 = vmatprep.subr.mxu0 0.0
        %607 = vmatpush1.msra.mxu0 0.0
        %608 = vmatprep.subr.mxu0 0.0
        %609 = vmatpush1.msra.mxu0 0.0
        %610 = vmatprep.subr.mxu0 0.0
        %611 = vmatpush1.msra.mxu0 0.0
        %612 = vmatprep.subr.mxu0 0.0
        %613 = vmatpush1.msra.mxu0 %v562
        %614 = vmatprep.subr.mxu0 0.0
        %615 = vmatpush1.msra.mxu0 %v561
        %616 = vmatprep.subr.mxu0 0.0
        %617 = vmatpush2.msra.mxu0 0.0
        %618 = vmatprep.subr.mxu0 0.0
        %619 = vmatpush2.msra.mxu0 0.0
        %620 = vmatprep.subr.mxu0 0.0
        %621 = vmatpush2.msra.mxu0 0.0
        %622 = vmatprep.subr.mxu0 0.0
        %623 = vmatpush2.msra.mxu0 0.0
        %624 = vmatprep.subr.mxu0 0.0
        %625 = vmatpush2.msra.mxu0 0.0
        %626 = vmatprep.subr.mxu0 0.0
        %627 = vmatpush2.msra.mxu0 0.0
        %628 = vmatprep.subr.mxu0 0.0
        %629 = vmatpush2.msra.mxu0 0.0
        %630 = vmatprep.subr.mxu0 0.0
        %631 = vmatpush2.msra.mxu0 0.0
        %632 = vmatprep.subr.mxu0 0.0
        %633 = vmatpush2.msra.mxu0 0.0
        %634 = vmatprep.subr.mxu0 0.0
        %635 = vmatpush2.msra.mxu0 0.0
        %636 = vmatprep.subr.mxu0 0.0
        %637 = vmatpush2.msra.mxu0 0.0
        %638 = vmatprep.subr.mxu0 0.0
        %639 = vmatpush2.msra.mxu0 0.0
        %640 = vmatprep.subr.mxu0 0.0
        %641 = vmatpush2.msra.mxu0 0.0
        %642 = vmatprep.subr.mxu0 0.0
        %643 = vmatpush2.msra.mxu0 0.0
        %644 = vmatprep.subr.mxu0 0.0
        %645 = vmatpush2.msra.mxu0 0.0
        %646 = vmatprep.subr.mxu0 0.0
        %647 = vmatpush2.msra.mxu0 0.0
        %648 = vmatprep.mubr.f32.mxu0 0.0
        %649 = vmatmul.mubr.f32.gmra.mxu0 %v573
        %v650 = vpop.f32.mrf.mxu0
        %v651 = vadd.f32 %v567, %v650
        %v652 = vpop.f32.mrf.mxu0
        %653 = vmatprep.mubr.f32.mxu0 0.0
        %654 = vmatmul.mubr.f32.gmra.mxu0 %v576
        %v655 = vpop.f32.mrf.mxu0
        %v656 = vadd.f32 %v568, %v655
        %v657 = vpop.f32.mrf.mxu0
        %658 = vmatprep.mubr.f32.mxu0 0.0
        %659 = vmatmul.mubr.f32.gmra.mxu0 %v579
        %v660 = vpop.f32.mrf.mxu0
        %v661 = vadd.f32 %v569, %v660
        %v662 = vpop.f32.mrf.mxu0
        %663 = vmatprep.mubr.f32.mxu0 0.0
        %664 = vmatmul.mubr.f32.gmra.mxu0 %v582
        %v665 = vpop.f32.mrf.mxu0
        %v666 = vadd.f32 %v570, %v665
        %v667 = vpop.f32.mrf.mxu0
        %668 = vdwg.mxu0
        %v669 = vmax.f32 %v651, 0.0
        %v670 = vmax.f32 %v656, 0.0
        %v671 = vmax.f32 %v661, 0.0
        %v672 = vmax.f32 %v666, 0.0
        %v673 = vld [vmem:[%s3] sm:$0xff]
        %v674 = vld [vmem:[%s3 + $0x8] sm:$0xff]
        %v675 = vld [vmem:[%s4] sm:$0xff]
        %v676 = vld [vmem:[%s4 + $0x8] sm:$0xff]
        %vm677 = vcmask 261120
        %v679 = vsel %vm677, %v673, 0
        %v682 = vsel %vm677, %v674, 0
        %684 = vmatprep.subr.mxu0 0.0
        %685 = vmatpush1.msra.mxu0 0.0
        %686 = vmatprep.subr.mxu0 0.0
        %687 = vmatpush1.msra.mxu0 0.0
        %688 = vmatprep.subr.mxu0 0.0
        %689 = vmatpush1.msra.mxu0 0.0
        %690 = vmatprep.subr.mxu0 0.0
        %691 = vmatpush1.msra.mxu0 0.0
        %692 = vmatprep.subr.mxu0 0.0
        %693 = vmatpush1.msra.mxu0 0.0
        %694 = vmatprep.subr.mxu0 0.0
        %695 = vmatpush1.msra.mxu0 0.0
        %696 = vmatprep.subr.mxu0 0.0
        %697 = vmatpush1.msra.mxu0 0.0
        %698 = vmatprep.subr.mxu0 0.0
        %699 = vmatpush1.msra.mxu0 0.0
        %700 = vmatprep.subr.mxu0 0.0
        %701 = vmatpush1.msra.mxu0 0.0
        %702 = vmatprep.subr.mxu0 0.0
        %703 = vmatpush1.msra.mxu0 0.0
        %704 = vmatprep.subr.mxu0 0.0
        %705 = vmatpush1.msra.mxu0 0.0
        %706 = vmatprep.subr.mxu0 0.0
        %707 = vmatpush1.msra.mxu0 0.0
        %708 = vmatprep.subr.mxu0 0.0
        %709 = vmatpush1.msra.mxu0 %v672
        %710 = vmatprep.subr.mxu0 0.0
        %711 = vmatpush1.msra.mxu0 %v671
        %712 = vmatprep.subr.mxu0 0.0
        %713 = vmatpush1.msra.mxu0 %v670
        %714 = vmatprep.subr.mxu0 0.0
        %715 = vmatpush1.msra.mxu0 %v669
        %716 = vmatprep.subr.mxu0 0.0
        %717 = vmatpush2.msra.mxu0 0.0
        %718 = vmatprep.subr.mxu0 0.0
        %719 = vmatpush2.msra.mxu0 0.0
        %720 = vmatprep.subr.mxu0 0.0
        %721 = vmatpush2.msra.mxu0 0.0
        %722 = vmatprep.subr.mxu0 0.0
        %723 = vmatpush2.msra.mxu0 0.0
        %724 = vmatprep.subr.mxu0 0.0
        %725 = vmatpush2.msra.mxu0 0.0
        %726 = vmatprep.subr.mxu0 0.0
        %727 = vmatpush2.msra.mxu0 0.0
        %728 = vmatprep.subr.mxu0 0.0
        %729 = vmatpush2.msra.mxu0 0.0
        %730 = vmatprep.subr.mxu0 0.0
        %731 = vmatpush2.msra.mxu0 0.0
        %732 = vmatprep.subr.mxu0 0.0
        %733 = vmatpush2.msra.mxu0 0.0
        %734 = vmatprep.subr.mxu0 0.0
        %735 = vmatpush2.msra.mxu0 0.0
        %736 = vmatprep.subr.mxu0 0.0
        %737 = vmatpush2.msra.mxu0 0.0
        %738 = vmatprep.subr.mxu0 0.0
        %739 = vmatpush2.msra.mxu0 0.0
        %740 = vmatprep.subr.mxu0 0.0
        %741 = vmatpush2.msra.mxu0 0.0
        %742 = vmatprep.subr.mxu0 0.0
        %743 = vmatpush2.msra.mxu0 0.0
        %744 = vmatprep.subr.mxu0 0.0
        %745 = vmatpush2.msra.mxu0 0.0
        %746 = vmatprep.subr.mxu0 0.0
        %747 = vmatpush2.msra.mxu0 0.0
        %748 = vmatprep.mubr.f32.mxu0 0.0
        %749 = vmatmul.mubr.f32.gmra.mxu0 %v679
        %v750 = vpop.f32.mrf.mxu0
        %v751 = vadd.f32 %v675, %v750
        %v752 = vpop.f32.mrf.mxu0
        %753 = vmatprep.mubr.f32.mxu0 0.0
        %754 = vmatmul.mubr.f32.gmra.mxu0 %v682
        %v755 = vpop.f32.mrf.mxu0
        %v756 = vadd.f32 %v676, %v755
        %v757 = vpop.f32.mrf.mxu0
        %758 = vdwg.mxu0
        %v759 = vxor.u32 %v751, 2147483648
        %v760 = vxor.u32 %v756, 2147483648
        %v761 = vmul.f32 %v759, 1.442695
        %v762 = vpow.pop %v761
        %v763 = vmul.f32 %v760, 1.442695
        %v764 = vpow.pop %v763
        %v765 = vadd.f32 %v762, 1.0
        %v766 = vadd.f32 %v764, 1.0
        %v767 = vrcp.pop %v765
        %v768 = vmul.f32 1.0, %v767
        %v769 = vrcp.pop %v766
        %v770 = vmul.f32 1.0, %v769
        %772 = vset.pattern.permute.xlu0 0
        %773 = vperm.xlu0 %772, %v768
        %v774 = vpop.permute.xlu0 %773
        %777 = vset.pattern.permute.xlu0 0
        %778 = vperm.xlu0 %777, %v770
        %v779 = vpop.permute.xlu0 %778
        %v781 = vmul.f32 %v551, %v774
        %v782 = vmul.f32 %v552, %v774
        %v783 = vmul.f32 %v553, %v779
        %v784 = vmul.f32 %v554, %v779
        %v785 = vld [vmem:[%s5] sm:$0xff]
        %v786 = vld [vmem:[%s5 + $0x8] sm:$0xff]
        %v787 = vld [vmem:[%s5 + $0x10] sm:$0xff]
        %v788 = vld [vmem:[%s5 + $0x18] sm:$0xff]
        %v789 = vld [vmem:[%s5 + $0x20] sm:$0xff]
        %v790 = vld [vmem:[%s5 + $0x28] sm:$0xff]
        %v791 = vld [vmem:[%s5 + $0x30] sm:$0x1]
        %v793 = vsel %vm571, %v785, 0
        %v796 = vsel %vm571, %v786, 0
        %v799 = vsel %vm571, %v787, 0
        %v802 = vsel %vm571, %v788, 0
        %v805 = vsel %vm571, %v789, 0
        %v808 = vsel %vm571, %v790, 0
        %v811 = vsel %vm571, %v791, 0
        %813 = vmatprep.subr.mxu0 0.0
        %814 = vmatpush1.msra.mxu0 0.0
        %815 = vmatprep.subr.mxu0 0.0
        %816 = vmatpush1.msra.mxu0 0.0
        %817 = vmatprep.subr.mxu0 0.0
        %818 = vmatpush1.msra.mxu0 0.0
        %819 = vmatprep.subr.mxu0 0.0
        %820 = vmatpush1.msra.mxu0 0.0
        %821 = vmatprep.subr.mxu0 0.0
        %822 = vmatpush1.msra.mxu0 0.0
        %823 = vmatprep.subr.mxu0 0.0
        %824 = vmatpush1.msra.mxu0 0.0
        %825 = vmatprep.subr.mxu0 0.0
        %826 = vmatpush1.msra.mxu0 0.0
        %827 = vmatprep.subr.mxu0 0.0
        %828 = vmatpush1.msra.mxu0 0.0
        %829 = vmatprep.subr.mxu0 0.0
        %830 = vmatpush1.msra.mxu0 0.0
        %831 = vmatprep.subr.mxu0 0.0
        %832 = vmatpush1.msra.mxu0 0.0
        %833 = vmatprep.subr.mxu0 0.0
        %834 = vmatpush1.msra.mxu0 0.0
        %835 = vmatprep.subr.mxu0 0.0
        %836 = vmatpush1.msra.mxu0 0.0
        %837 = vmatprep.subr.mxu0 0.0
        %838 = vmatpush1.msra.mxu0 0.0
        %839 = vmatprep.subr.mxu0 0.0
        %840 = vmatpush1.msra.mxu0 0.0
        %841 = vmatprep.subr.mxu0 %v784
        %842 = vmatpush1.msra.mxu0 %v783
        %843 = vmatprep.subr.mxu0 %v782
        %844 = vmatpush1.msra.mxu0 %v781
        %845 = vmatprep.subr.mxu0 0.0
        %846 = vmatpush2.msra.mxu0 0.0
        %847 = vmatprep.subr.mxu0 0.0
        %848 = vmatpush2.msra.mxu0 0.0
        %849 = vmatprep.subr.mxu0 0.0
        %850 = vmatpush2.msra.mxu0 0.0
        %851 = vmatprep.subr.mxu0 0.0
        %852 = vmatpush2.msra.mxu0 0.0
        %853 = vmatprep.subr.mxu0 0.0
        %854 = vmatpush2.msra.mxu0 0.0
        %855 = vmatprep.subr.mxu0 0.0
        %856 = vmatpush2.msra.mxu0 0.0
        %857 = vmatprep.subr.mxu0 0.0
        %858 = vmatpush2.msra.mxu0 0.0
        %859 = vmatprep.subr.mxu0 0.0
        %860 = vmatpush2.msra.mxu0 0.0
        %861 = vmatprep.subr.mxu0 0.0
        %862 = vmatpush2.msra.mxu0 0.0
        %863 = vmatprep.subr.mxu0 0.0
        %864 = vmatpush2.msra.mxu0 0.0
        %865 = vmatprep.subr.mxu0 0.0
        %866 = vmatpush2.msra.mxu0 0.0
        %867 = vmatprep.subr.mxu0 0.0
        %868 = vmatpush2.msra.mxu0 0.0
        %869 = vmatprep.subr.mxu0 0.0
        %870 = vmatpush2.msra.mxu0 0.0
        %871 = vmatprep.subr.mxu0 0.0
        %872 = vmatpush2.msra.mxu0 0.0
        %873 = vmatprep.subr.mxu0 0.0
        %874 = vmatpush2.msra.mxu0 0.0
        %875 = vmatprep.subr.mxu0 0.0
        %876 = vmatpush2.msra.mxu0 0.0
        %877 = vmatprep.mubr.f32.mxu0 0.0
        %878 = vmatmul.mubr.f32.gmra.mxu0 %v793
        %v879 = vpop.f32.mrf.mxu0
        %v880 = vadd.f32 0.0, %v879
        %v881 = vpop.f32.mrf.mxu0
        %v882 = vadd.f32 0.0, %v881
        %883 = vmatprep.mubr.f32.mxu0 0.0
        %884 = vmatmul.mubr.f32.gmra.mxu0 %v796
        %v885 = vpop.f32.mrf.mxu0
        %v886 = vadd.f32 0.0, %v885
        %v887 = vpop.f32.mrf.mxu0
        %v888 = vadd.f32 0.0, %v887
        %889 = vmatprep.mubr.f32.mxu0 0.0
        %890 = vmatmul.mubr.f32.gmra.mxu0 %v799
        %v891 = vpop.f32.mrf.mxu0
        %v892 = vadd.f32 0.0, %v891
        %v893 = vpop.f32.mrf.mxu0
        %v894 = vadd.f32 0.0, %v893
        %895 = vmatprep.mubr.f32.mxu0 0.0
        %896 = vmatmul.mubr.f32.gmra.mxu0 %v802
        %v897 = vpop.f32.mrf.mxu0
        %v898 = vadd.f32 0.0, %v897
        %v899 = vpop.f32.mrf.mxu0
        %v900 = vadd.f32 0.0, %v899
        %901 = vmatprep.mubr.f32.mxu0 0.0
        %902 = vmatmul.mubr.f32.gmra.mxu0 %v805
        %v903 = vpop.f32.mrf.mxu0
        %v904 = vadd.f32 0.0, %v903
        %v905 = vpop.f32.mrf.mxu0
        %v906 = vadd.f32 0.0, %v905
        %907 = vmatprep.mubr.f32.mxu0 0.0
        %908 = vmatmul.mubr.f32.gmra.mxu0 %v808
        %v909 = vpop.f32.mrf.mxu0
        %v910 = vadd.f32 0.0, %v909
        %v911 = vpop.f32.mrf.mxu0
        %v912 = vadd.f32 0.0, %v911
        %913 = vmatprep.mubr.f32.mxu0 0.0
        %914 = vmatmul.mubr.f32.gmra.mxu0 %v811
        %v915 = vpop.f32.mrf.mxu0
        %v916 = vadd.f32 0.0, %v915
        %v917 = vpop.f32.mrf.mxu0
        %v918 = vadd.f32 0.0, %v917
        %919 = vdwg.mxu0
        %vm920 = vcmask 416768
        %921 = vst.msk [vmem:[#allocation2] sm:$0xff] %vm920, 0.0
        %922 = vst.msk [vmem:[#allocation2 + $0x18] sm:$0xff] %vm920, 0.0
        %923 = vst.msk [vmem:[#allocation2 + $0x30] sm:$0xff] %vm920, 0.0
        %924 = vst.msk [vmem:[#allocation2 + $0x48] sm:$0xff] %vm920, 0.0
        %925 = vst.msk [vmem:[#allocation2 + $0x60] sm:$0xff] %vm920, 0.0
        %926 = vst.msk [vmem:[#allocation2 + $0x78] sm:$0xff] %vm920, 0.0
        %vm927 = vcmask 409600
        %928 = vst.msk [vmem:[#allocation2 + $0x90] sm:$0x1] %vm927, 0.0
        %vm929 = vcmask 834968
        %930 = vst.msk [vmem:[#allocation2 + $0x10] sm:$0xff] %vm929, 0.0
        %931 = vst.msk [vmem:[#allocation2 + $0x28] sm:$0xff] %vm929, 0.0
        %932 = vst.msk [vmem:[#allocation2 + $0x40] sm:$0xff] %vm929, 0.0
        %933 = vst.msk [vmem:[#allocation2 + $0x58] sm:$0xff] %vm929, 0.0
        %934 = vst.msk [vmem:[#allocation2 + $0x70] sm:$0xff] %vm929, 0.0
        %935 = vst.msk [vmem:[#allocation2 + $0x88] sm:$0xff] %vm929, 0.0
        %vm936 = vcmask 827800
        %937 = vst.msk [vmem:[#allocation2 + $0xa0] sm:$0x1] %vm936, 0.0
        %952 = vrot.lane.b32.xlu0 %v880, 51
        %v953 = vpop.permute.xlu0 %952
        %954 = vrot.lane.b32.xlu0 %v882, 51
        %v955 = vpop.permute.xlu0 %954
        %956 = vrot.lane.b32.xlu0 %v886, 51
        %v957 = vpop.permute.xlu0 %956
        %958 = vrot.lane.b32.xlu0 %v888, 51
        %v959 = vpop.permute.xlu0 %958
        %960 = vrot.lane.b32.xlu0 %v892, 51
        %v961 = vpop.permute.xlu0 %960
        %962 = vrot.lane.b32.xlu0 %v894, 51
        %v963 = vpop.permute.xlu0 %962
        %964 = vrot.lane.b32.xlu0 %v898, 51
        %v965 = vpop.permute.xlu0 %964
        %966 = vrot.lane.b32.xlu0 %v900, 51
        %v967 = vpop.permute.xlu0 %966
        %968 = vrot.lane.b32.xlu0 %v904, 51
        %v969 = vpop.permute.xlu0 %968
        %970 = vrot.lane.b32.xlu0 %v906, 51
        %v971 = vpop.permute.xlu0 %970
        %972 = vrot.lane.b32.xlu0 %v910, 51
        %v973 = vpop.permute.xlu0 %972
        %974 = vrot.lane.b32.xlu0 %v912, 51
        %v975 = vpop.permute.xlu0 %974
        %976 = vrot.lane.b32.xlu0 %v916, 51
        %v977 = vpop.permute.xlu0 %976
        %978 = vrot.lane.b32.xlu0 %v918, 51
        %v979 = vpop.permute.xlu0 %978
        %v980 = vsel %vm920, %v953, %v955
        %v981 = vsel %vm920, %v957, %v959
        %v982 = vsel %vm920, %v961, %v963
        %v983 = vsel %vm920, %v965, %v967
        %v984 = vsel %vm920, %v969, %v971
        %v985 = vsel %vm920, %v973, %v975
        %v986 = vsel %vm920, %v977, %v979
        %vm1008 = vcmask 1047960
        %1009 = vst.msk [vmem:[#allocation2] sm:$0xff] %vm1008, %v953
        %1010 = vst [vmem:[#allocation2 + $0x8] sm:$0xff] %v980
        %1011 = vst.msk [vmem:[#allocation2 + $0x10] sm:$0xff] %vm920, %v955
        %1012 = vst.msk [vmem:[#allocation2 + $0x18] sm:$0xff] %vm1008, %v957
        %1013 = vst [vmem:[#allocation2 + $0x20] sm:$0xff] %v981
        %1014 = vst.msk [vmem:[#allocation2 + $0x28] sm:$0xff] %vm920, %v959
        %1015 = vst.msk [vmem:[#allocation2 + $0x30] sm:$0xff] %vm1008, %v961
        %1016 = vst [vmem:[#allocation2 + $0x38] sm:$0xff] %v982
        %1017 = vst.msk [vmem:[#allocation2 + $0x40] sm:$0xff] %vm920, %v963
        %1018 = vst.msk [vmem:[#allocation2 + $0x48] sm:$0xff] %vm1008, %v965
        %1019 = vst [vmem:[#allocation2 + $0x50] sm:$0xff] %v983
        %1020 = vst.msk [vmem:[#allocation2 + $0x58] sm:$0xff] %vm920, %v967
        %1021 = vst.msk [vmem:[#allocation2 + $0x60] sm:$0xff] %vm1008, %v969
        %1022 = vst [vmem:[#allocation2 + $0x68] sm:$0xff] %v984
        %1023 = vst.msk [vmem:[#allocation2 + $0x70] sm:$0xff] %vm920, %v971
        %1024 = vst.msk [vmem:[#allocation2 + $0x78] sm:$0xff] %vm1008, %v973
        %1025 = vst [vmem:[#allocation2 + $0x80] sm:$0xff] %v985
        %1026 = vst.msk [vmem:[#allocation2 + $0x88] sm:$0xff] %vm920, %v975
        %vm1027 = vcmask 1040792
        %1028 = vst.msk [vmem:[#allocation2 + $0x90] sm:$0x1] %vm1027, %v977
        %1029 = vst [vmem:[#allocation2 + $0x98] sm:$0x1] %v986
        %1030 = vst.msk [vmem:[#allocation2 + $0xa0] sm:$0x1] %vm927, %v979
        %v1031 = vld [vmem:[#allocation5] sm:$0x1]
        %1033 = vset.pattern.permute.xlu0 0
        %1034 = vperm.xlu0 %1033, %v1031
        %v1035 = vpop.permute.xlu0 %1034
        %v1037 = vlaneseq
        %v1038 = vshrl.u32 %v1037, 7
        %v1039 = vsub.s32 0, %v1038
        %v1040 = vrot.slane %v1035, %v1039
        %v1041 = vld [vmem:[#allocation2] ss:$8 sm:$0x3]
        %v1042 = vld [vmem:[%s7] ss:$8 sm:$0x3]
        %v1043 = vmul.f32 %v1041, %v1042
        %v1044 = vadd.f32 %v1040, %v1043
        %s1045 = scalar_lea.vmem [#allocation2], 1
        %v1046 = vld [vmem:[%s1045] ss:$8 sm:$0x7]
        %s1047 = scalar_lea.vmem %s7, 1
        %v1048 = vld [vmem:[%s1047] ss:$8 sm:$0x3]
        %1050 = vrot.lane.b32.xlu0 %v1048, 1
        %v1051 = vpop.permute.xlu0 %1050
        %v1052 = vrot.slane %v1051, 7
        %vm1053 = vcmask 7168
        %v1054 = vsel %vm1053, %v1052, %v1051
        %v1056 = vmul.f32 %v1046, %v1054
        %1058 = vrot.lane.b32.xlu0 %v1056, 127
        %v1059 = vpop.permute.xlu0 %1058
        %v1060 = vrot.slane %v1059, 1
        %vm1061 = vcmask 1039360
        %v1062 = vsel %vm1061, %v1059, %v1060
        %v1064 = vadd.f32 %v1044, %v1062
        %s1065 = scalar_lea.vmem [#allocation2], 2
        %v1066 = vld [vmem:[%s1065] ss:$8 sm:$0x7]
        %s1067 = scalar_lea.vmem %s7, 2
        %v1068 = vld [vmem:[%s1067] ss:$8 sm:$0x3]
        %1070 = vrot.lane.b32.xlu0 %v1068, 2
        %v1071 = vpop.permute.xlu0 %1070
        %v1072 = vrot.slane %v1071, 7
        %vm1073 = vcmask 15360
        %v1074 = vsel %vm1073, %v1072, %v1071
        %v1076 = vmul.f32 %v1066, %v1074
        %1078 = vrot.lane.b32.xlu0 %v1076, 126
        %v1079 = vpop.permute.xlu0 %1078
        %v1080 = vrot.slane %v1079, 1
        %vm1081 = vcmask 1031168
        %v1082 = vsel %vm1081, %v1079, %v1080
        %v1084 = vadd.f32 %v1064, %v1082
        %s1085 = scalar_lea.vmem [#allocation2], 3
        %v1086 = vld [vmem:[%s1085] ss:$8 sm:$0x7]
        %1088 = vrot.lane.b32.xlu0 %v1086, 125
        %v1089 = vpop.permute.xlu0 %1088
        %v1090 = vrot.slane %v1089, 1
        %vm1091 = vcmask 1022976
        %v1092 = vsel %vm1091, %v1089, %v1090
        %v1094 = vadd.f32 %v1084, %v1092
        %s1095 = scalar_lea.vmem [#allocation2], 4
        %v1096 = vld [vmem:[%s1095] ss:$8 sm:$0x7]
        %s1097 = scalar_lea.vmem %s7, 4
        %v1098 = vld [vmem:[%s1097] ss:$8 sm:$0x3]
        %1100 = vrot.lane.b32.xlu0 %v1098, 4
        %v1101 = vpop.permute.xlu0 %1100
        %v1102 = vrot.slane %v1101, 7
        %vm1103 = vcmask 31744
        %v1104 = vsel %vm1103, %v1102, %v1101
        %v1106 = vmul.f32 %v1096, %v1104
        %1108 = vrot.lane.b32.xlu0 %v1106, 124
        %v1109 = vpop.permute.xlu0 %1108
        %v1110 = vrot.slane %v1109, 1
        %vm1111 = vcmask 1014784
        %v1112 = vsel %vm1111, %v1109, %v1110
        %v1114 = vadd.f32 %v1094, %v1112
        %s1115 = scalar_lea.vmem [#allocation2], 5
        %v1116 = vld [vmem:[%s1115] ss:$8 sm:$0x7]
        %s1117 = scalar_lea.vmem %s7, 5
        %v1118 = vld [vmem:[%s1117] ss:$8 sm:$0x3]
        %1120 = vrot.lane.b32.xlu0 %v1118, 5
        %v1121 = vpop.permute.xlu0 %1120
        %v1122 = vrot.slane %v1121, 7
        %vm1123 = vcmask 39936
        %v1124 = vsel %vm1123, %v1122, %v1121
        %v1126 = vmul.f32 %v1116, %v1124
        %1128 = vrot.lane.b32.xlu0 %v1126, 123
        %v1129 = vpop.permute.xlu0 %1128
        %v1130 = vrot.slane %v1129, 1
        %vm1131 = vcmask 1006592
        %v1132 = vsel %vm1131, %v1129, %v1130
        %v1134 = vadd.f32 %v1114, %v1132
        %s1135 = scalar_lea.vmem [#allocation2], 6
        %v1136 = vld [vmem:[%s1135] ss:$8 sm:$0x7]
        %s1137 = scalar_lea.vmem %s7, 6
        %v1138 = vld [vmem:[%s1137] ss:$8 sm:$0x3]
        %1140 = vrot.lane.b32.xlu0 %v1138, 6
        %v1141 = vpop.permute.xlu0 %1140
        %v1142 = vrot.slane %v1141, 7
        %vm1143 = vcmask 48128
        %v1144 = vsel %vm1143, %v1142, %v1141
        %v1146 = vmul.f32 %v1136, %v1144
        %1148 = vrot.lane.b32.xlu0 %v1146, 122
        %v1149 = vpop.permute.xlu0 %1148
        %v1150 = vrot.slane %v1149, 1
        %vm1151 = vcmask 998400
        %v1152 = vsel %vm1151, %v1149, %v1150
        %v1154 = vadd.f32 %v1134, %v1152
        %s1155 = scalar_lea.vmem [#allocation2], 7
        %v1156 = vld [vmem:[%s1155] ss:$8 sm:$0x7]
        %1158 = vrot.lane.b32.xlu0 %v1042, 16
        %v1159 = vpop.permute.xlu0 %1158
        %v1160 = vrot.slane %v1159, 7
        %v1161 = vsel %vm571, %v1160, %v1159
        %v1163 = vmul.f32 %v1156, %v1161
        %1165 = vrot.lane.b32.xlu0 %v1163, 112
        %v1166 = vpop.permute.xlu0 %1165
        %v1167 = vrot.slane %v1166, 1
        %vm1168 = vcmask 916480
        %v1169 = vsel %vm1168, %v1166, %v1167
        %v1171 = vadd.f32 %v1154, %v1169
        %s1172 = scalar_lea.vmem [#allocation2], 24
        %v1173 = vld [vmem:[%s1172] ss:$8 sm:$0x7]
        %1174 = vrot.lane.b32.xlu0 %v1048, 17
        %v1175 = vpop.permute.xlu0 %1174
        %v1176 = vrot.slane %v1175, 7
        %vm1177 = vcmask 138240
        %v1178 = vsel %vm1177, %v1176, %v1175
        %v1180 = vmul.f32 %v1173, %v1178
        %1182 = vrot.lane.b32.xlu0 %v1180, 111
        %v1183 = vpop.permute.xlu0 %1182
        %v1184 = vrot.slane %v1183, 1
        %vm1185 = vcmask 908288
        %v1186 = vsel %vm1185, %v1183, %v1184
        %v1188 = vadd.f32 %v1171, %v1186
        %s1189 = scalar_lea.vmem [#allocation2], 25
        %v1190 = vld [vmem:[%s1189] ss:$8 sm:$0x7]
        %1191 = vrot.lane.b32.xlu0 %v1068, 18
        %v1192 = vpop.permute.xlu0 %1191
        %v1193 = vrot.slane %v1192, 7
        %vm1194 = vcmask 146432
        %v1195 = vsel %vm1194, %v1193, %v1192
        %v1197 = vmul.f32 %v1190, %v1195
        %1199 = vrot.lane.b32.xlu0 %v1197, 110
        %v1200 = vpop.permute.xlu0 %1199
        %v1201 = vrot.slane %v1200, 1
        %vm1202 = vcmask 900096
        %v1203 = vsel %vm1202, %v1200, %v1201
        %v1205 = vadd.f32 %v1188, %v1203
        %s1206 = scalar_lea.vmem [#allocation2], 26
        %v1207 = vld [vmem:[%s1206] ss:$8 sm:$0x7]
        %1209 = vrot.lane.b32.xlu0 %v1207, 109
        %v1210 = vpop.permute.xlu0 %1209
        %v1211 = vrot.slane %v1210, 1
        %vm1212 = vcmask 891904
        %v1213 = vsel %vm1212, %v1210, %v1211
        %v1215 = vadd.f32 %v1205, %v1213
        %s1216 = scalar_lea.vmem [#allocation2], 27
        %v1217 = vld [vmem:[%s1216] ss:$8 sm:$0x7]
        %1218 = vrot.lane.b32.xlu0 %v1098, 20
        %v1219 = vpop.permute.xlu0 %1218
        %v1220 = vrot.slane %v1219, 7
        %vm1221 = vcmask 162816
        %v1222 = vsel %vm1221, %v1220, %v1219
        %v1224 = vmul.f32 %v1217, %v1222
        %1226 = vrot.lane.b32.xlu0 %v1224, 108
        %v1227 = vpop.permute.xlu0 %1226
        %v1228 = vrot.slane %v1227, 1
        %vm1229 = vcmask 883712
        %v1230 = vsel %vm1229, %v1227, %v1228
        %v1232 = vadd.f32 %v1215, %v1230
        %s1233 = scalar_lea.vmem [#allocation2], 28
        %v1234 = vld [vmem:[%s1233] ss:$8 sm:$0x7]
        %1235 = vrot.lane.b32.xlu0 %v1118, 21
        %v1236 = vpop.permute.xlu0 %1235
        %v1237 = vrot.slane %v1236, 7
        %vm1238 = vcmask 171008
        %v1239 = vsel %vm1238, %v1237, %v1236
        %v1241 = vmul.f32 %v1234, %v1239
        %1243 = vrot.lane.b32.xlu0 %v1241, 107
        %v1244 = vpop.permute.xlu0 %1243
        %v1245 = vrot.slane %v1244, 1
        %vm1246 = vcmask 875520
        %v1247 = vsel %vm1246, %v1244, %v1245
        %v1249 = vadd.f32 %v1232, %v1247
        %s1250 = scalar_lea.vmem [#allocation2], 29
        %v1251 = vld [vmem:[%s1250] ss:$8 sm:$0x7]
        %1252 = vrot.lane.b32.xlu0 %v1138, 22
        %v1253 = vpop.permute.xlu0 %1252
        %v1254 = vrot.slane %v1253, 7
        %vm1255 = vcmask 179200
        %v1256 = vsel %vm1255, %v1254, %v1253
        %v1258 = vmul.f32 %v1251, %v1256
        %1260 = vrot.lane.b32.xlu0 %v1258, 106
        %v1261 = vpop.permute.xlu0 %1260
        %v1262 = vrot.slane %v1261, 1
        %vm1263 = vcmask 867328
        %v1264 = vsel %vm1263, %v1261, %v1262
        %v1266 = vadd.f32 %v1249, %v1264
        %s1267 = scalar_lea.vmem [#allocation2], 30
        %v1268 = vld [vmem:[%s1267] ss:$8 sm:$0x7]
        %1269 = vrot.lane.b32.xlu0 %v1042, 32
        %v1270 = vpop.permute.xlu0 %1269
        %v1271 = vrot.slane %v1270, 7
        %v1272 = vsel %vm677, %v1271, %v1270
        %v1274 = vmul.f32 %v1268, %v1272
        %1276 = vrot.lane.b32.xlu0 %v1274, 96
        %v1277 = vpop.permute.xlu0 %1276
        %v1278 = vrot.slane %v1277, 1
        %vm1279 = vcmask 785408
        %v1280 = vsel %vm1279, %v1277, %v1278
        %v1282 = vadd.f32 %v1266, %v1280
        %s1283 = scalar_lea.vmem [#allocation2], 31
        %v1284 = vld [vmem:[%s1283] ss:$8 sm:$0x7]
        %1285 = vrot.lane.b32.xlu0 %v1048, 33
        %v1286 = vpop.permute.xlu0 %1285
        %v1287 = vrot.slane %v1286, 7
        %vm1288 = vcmask 269312
        %v1289 = vsel %vm1288, %v1287, %v1286
        %v1291 = vmul.f32 %v1284, %v1289
        %1293 = vrot.lane.b32.xlu0 %v1291, 95
        %v1294 = vpop.permute.xlu0 %1293
        %v1295 = vrot.slane %v1294, 1
        %vm1296 = vcmask 777216
        %v1297 = vsel %vm1296, %v1294, %v1295
        %v1299 = vadd.f32 %v1282, %v1297
        %s1300 = scalar_lea.vmem [#allocation2], 48
        %v1301 = vld [vmem:[%s1300] ss:$8 sm:$0x7]
        %1302 = vrot.lane.b32.xlu0 %v1068, 34
        %v1303 = vpop.permute.xlu0 %1302
        %v1304 = vrot.slane %v1303, 7
        %vm1305 = vcmask 277504
        %v1306 = vsel %vm1305, %v1304, %v1303
        %v1308 = vmul.f32 %v1301, %v1306
        %1310 = vrot.lane.b32.xlu0 %v1308, 94
        %v1311 = vpop.permute.xlu0 %1310
        %v1312 = vrot.slane %v1311, 1
        %vm1313 = vcmask 769024
        %v1314 = vsel %vm1313, %v1311, %v1312
        %v1316 = vadd.f32 %v1299, %v1314
        %s1317 = scalar_lea.vmem [#allocation2], 49
        %v1318 = vld [vmem:[%s1317] ss:$8 sm:$0x7]
        %1320 = vrot.lane.b32.xlu0 %v1318, 93
        %v1321 = vpop.permute.xlu0 %1320
        %v1322 = vrot.slane %v1321, 1
        %vm1323 = vcmask 760832
        %v1324 = vsel %vm1323, %v1321, %v1322
        %v1326 = vadd.f32 %v1316, %v1324
        %s1327 = scalar_lea.vmem [#allocation2], 50
        %v1328 = vld [vmem:[%s1327] ss:$8 sm:$0x7]
        %1329 = vrot.lane.b32.xlu0 %v1098, 36
        %v1330 = vpop.permute.xlu0 %1329
        %v1331 = vrot.slane %v1330, 7
        %vm1332 = vcmask 293888
        %v1333 = vsel %vm1332, %v1331, %v1330
        %v1335 = vmul.f32 %v1328, %v1333
        %1337 = vrot.lane.b32.xlu0 %v1335, 92
        %v1338 = vpop.permute.xlu0 %1337
        %v1339 = vrot.slane %v1338, 1
        %vm1340 = vcmask 752640
        %v1341 = vsel %vm1340, %v1338, %v1339
        %v1343 = vadd.f32 %v1326, %v1341
        %s1344 = scalar_lea.vmem [#allocation2], 51
        %v1345 = vld [vmem:[%s1344] ss:$8 sm:$0x7]
        %1346 = vrot.lane.b32.xlu0 %v1118, 37
        %v1347 = vpop.permute.xlu0 %1346
        %v1348 = vrot.slane %v1347, 7
        %vm1349 = vcmask 302080
        %v1350 = vsel %vm1349, %v1348, %v1347
        %v1352 = vmul.f32 %v1345, %v1350
        %1354 = vrot.lane.b32.xlu0 %v1352, 91
        %v1355 = vpop.permute.xlu0 %1354
        %v1356 = vrot.slane %v1355, 1
        %vm1357 = vcmask 744448
        %v1358 = vsel %vm1357, %v1355, %v1356
        %v1360 = vadd.f32 %v1343, %v1358
        %s1361 = scalar_lea.vmem [#allocation2], 52
        %v1362 = vld [vmem:[%s1361] ss:$8 sm:$0x7]
        %1363 = vrot.lane.b32.xlu0 %v1138, 38
        %v1364 = vpop.permute.xlu0 %1363
        %v1365 = vrot.slane %v1364, 7
        %vm1366 = vcmask 310272
        %v1367 = vsel %vm1366, %v1365, %v1364
        %v1369 = vmul.f32 %v1362, %v1367
        %1371 = vrot.lane.b32.xlu0 %v1369, 90
        %v1372 = vpop.permute.xlu0 %1371
        %v1373 = vrot.slane %v1372, 1
        %vm1374 = vcmask 736256
        %v1375 = vsel %vm1374, %v1372, %v1373
        %v1377 = vadd.f32 %v1360, %v1375
        %s1378 = scalar_lea.vmem [#allocation2], 53
        %v1379 = vld [vmem:[%s1378] ss:$8 sm:$0x7]
        %1380 = vrot.lane.b32.xlu0 %v1042, 48
        %v1381 = vpop.permute.xlu0 %1380
        %v1382 = vrot.slane %v1381, 7
        %vm1383 = vcmask 392192
        %v1384 = vsel %vm1383, %v1382, %v1381
        %v1386 = vmul.f32 %v1379, %v1384
        %1388 = vrot.lane.b32.xlu0 %v1386, 80
        %v1389 = vpop.permute.xlu0 %1388
        %v1390 = vrot.slane %v1389, 1
        %vm1391 = vcmask 654336
        %v1392 = vsel %vm1391, %v1389, %v1390
        %v1394 = vadd.f32 %v1377, %v1392
        %s1395 = scalar_lea.vmem [#allocation2], 54
        %v1396 = vld [vmem:[%s1395] ss:$8 sm:$0x7]
        %1397 = vrot.lane.b32.xlu0 %v1048, 49
        %v1398 = vpop.permute.xlu0 %1397
        %v1399 = vrot.slane %v1398, 7
        %vm1400 = vcmask 400384
        %v1401 = vsel %vm1400, %v1399, %v1398
        %v1403 = vmul.f32 %v1396, %v1401
        %1405 = vrot.lane.b32.xlu0 %v1403, 79
        %v1406 = vpop.permute.xlu0 %1405
        %v1407 = vrot.slane %v1406, 1
        %vm1408 = vcmask 646144
        %v1409 = vsel %vm1408, %v1406, %v1407
        %v1411 = vadd.f32 %v1394, %v1409
        %s1412 = scalar_lea.vmem [#allocation2], 55
        %v1413 = vld [vmem:[%s1412] ss:$8 sm:$0x7]
        %1414 = vrot.lane.b32.xlu0 %v1068, 50
        %v1415 = vpop.permute.xlu0 %1414
        %v1416 = vrot.slane %v1415, 7
        %vm1417 = vcmask 408576
        %v1418 = vsel %vm1417, %v1416, %v1415
        %v1420 = vmul.f32 %v1413, %v1418
        %1422 = vrot.lane.b32.xlu0 %v1420, 78
        %v1423 = vpop.permute.xlu0 %1422
        %v1424 = vrot.slane %v1423, 1
        %vm1425 = vcmask 637952
        %v1426 = vsel %vm1425, %v1423, %v1424
        %v1428 = vadd.f32 %v1411, %v1426
        %s1429 = scalar_lea.vmem [#allocation2], 72
        %v1430 = vld [vmem:[%s1429] ss:$8 sm:$0x7]
        %1432 = vrot.lane.b32.xlu0 %v1430, 77
        %v1433 = vpop.permute.xlu0 %1432
        %v1434 = vrot.slane %v1433, 1
        %vm1435 = vcmask 629760
        %v1436 = vsel %vm1435, %v1433, %v1434
        %v1438 = vadd.f32 %v1428, %v1436
        %s1439 = scalar_lea.vmem [#allocation2], 73
        %v1440 = vld [vmem:[%s1439] ss:$8 sm:$0x7]
        %1441 = vrot.lane.b32.xlu0 %v1098, 52
        %v1442 = vpop.permute.xlu0 %1441
        %v1443 = vrot.slane %v1442, 7
        %vm1444 = vcmask 424960
        %v1445 = vsel %vm1444, %v1443, %v1442
        %v1447 = vmul.f32 %v1440, %v1445
        %1449 = vrot.lane.b32.xlu0 %v1447, 76
        %v1450 = vpop.permute.xlu0 %1449
        %v1451 = vrot.slane %v1450, 1
        %vm1452 = vcmask 621568
        %v1453 = vsel %vm1452, %v1450, %v1451
        %v1455 = vadd.f32 %v1438, %v1453
        %s1456 = scalar_lea.vmem [#allocation2], 74
        %v1457 = vld [vmem:[%s1456] ss:$8 sm:$0x7]
        %1458 = vrot.lane.b32.xlu0 %v1118, 53
        %v1459 = vpop.permute.xlu0 %1458
        %v1460 = vrot.slane %v1459, 7
        %vm1461 = vcmask 433152
        %v1462 = vsel %vm1461, %v1460, %v1459
        %v1464 = vmul.f32 %v1457, %v1462
        %1466 = vrot.lane.b32.xlu0 %v1464, 75
        %v1467 = vpop.permute.xlu0 %1466
        %v1468 = vrot.slane %v1467, 1
        %vm1469 = vcmask 613376
        %v1470 = vsel %vm1469, %v1467, %v1468
        %v1472 = vadd.f32 %v1455, %v1470
        %s1473 = scalar_lea.vmem [#allocation2], 75
        %v1474 = vld [vmem:[%s1473] ss:$8 sm:$0x7]
        %1475 = vrot.lane.b32.xlu0 %v1138, 54
        %v1476 = vpop.permute.xlu0 %1475
        %v1477 = vrot.slane %v1476, 7
        %vm1478 = vcmask 441344
        %v1479 = vsel %vm1478, %v1477, %v1476
        %v1481 = vmul.f32 %v1474, %v1479
        %1483 = vrot.lane.b32.xlu0 %v1481, 74
        %v1484 = vpop.permute.xlu0 %1483
        %v1485 = vrot.slane %v1484, 1
        %vm1486 = vcmask 605184
        %v1487 = vsel %vm1486, %v1484, %v1485
        %v1489 = vadd.f32 %v1472, %v1487
        %s1490 = scalar_lea.vmem [#allocation2], 76
        %v1491 = vld [vmem:[%s1490] ss:$8 sm:$0x7]
        %1492 = vrot.lane.b32.xlu0 %v1042, 64
        %v1493 = vpop.permute.xlu0 %1492
        %v1494 = vrot.slane %v1493, 7
        %vm1495 = vcmask 523264
        %v1496 = vsel %vm1495, %v1494, %v1493
        %v1498 = vmul.f32 %v1491, %v1496
        %1500 = vrot.lane.b32.xlu0 %v1498, 64
        %v1501 = vpop.permute.xlu0 %1500
        %v1502 = vrot.slane %v1501, 1
        %v1503 = vsel %vm1495, %v1501, %v1502
        %v1505 = vadd.f32 %v1489, %v1503
        %s1506 = scalar_lea.vmem [#allocation2], 77
        %v1507 = vld [vmem:[%s1506] ss:$8 sm:$0x7]
        %1508 = vrot.lane.b32.xlu0 %v1048, 65
        %v1509 = vpop.permute.xlu0 %1508
        %v1510 = vrot.slane %v1509, 7
        %vm1511 = vcmask 531456
        %v1512 = vsel %vm1511, %v1510, %v1509
        %v1514 = vmul.f32 %v1507, %v1512
        %1516 = vrot.lane.b32.xlu0 %v1514, 63
        %v1517 = vpop.permute.xlu0 %1516
        %v1518 = vrot.slane %v1517, 1
        %vm1519 = vcmask 515072
        %v1520 = vsel %vm1519, %v1517, %v1518
        %v1522 = vadd.f32 %v1505, %v1520
        %s1523 = scalar_lea.vmem [#allocation2], 78
        %v1524 = vld [vmem:[%s1523] ss:$8 sm:$0x7]
        %1525 = vrot.lane.b32.xlu0 %v1068, 66
        %v1526 = vpop.permute.xlu0 %1525
        %v1527 = vrot.slane %v1526, 7
        %vm1528 = vcmask 539648
        %v1529 = vsel %vm1528, %v1527, %v1526
        %v1531 = vmul.f32 %v1524, %v1529
        %1533 = vrot.lane.b32.xlu0 %v1531, 62
        %v1534 = vpop.permute.xlu0 %1533
        %v1535 = vrot.slane %v1534, 1
        %vm1536 = vcmask 506880
        %v1537 = vsel %vm1536, %v1534, %v1535
        %v1539 = vadd.f32 %v1522, %v1537
        %s1540 = scalar_lea.vmem [#allocation2], 79
        %v1541 = vld [vmem:[%s1540] ss:$8 sm:$0x7]
        %1543 = vrot.lane.b32.xlu0 %v1541, 61
        %v1544 = vpop.permute.xlu0 %1543
        %v1545 = vrot.slane %v1544, 1
        %vm1546 = vcmask 498688
        %v1547 = vsel %vm1546, %v1544, %v1545
        %v1549 = vadd.f32 %v1539, %v1547
        %s1550 = scalar_lea.vmem [#allocation2], 96
        %v1551 = vld [vmem:[%s1550] ss:$8 sm:$0x7]
        %1552 = vrot.lane.b32.xlu0 %v1098, 68
        %v1553 = vpop.permute.xlu0 %1552
        %v1554 = vrot.slane %v1553, 7
        %vm1555 = vcmask 556032
        %v1556 = vsel %vm1555, %v1554, %v1553
        %v1558 = vmul.f32 %v1551, %v1556
        %1560 = vrot.lane.b32.xlu0 %v1558, 60
        %v1561 = vpop.permute.xlu0 %1560
        %v1562 = vrot.slane %v1561, 1
        %vm1563 = vcmask 490496
        %v1564 = vsel %vm1563, %v1561, %v1562
        %v1566 = vadd.f32 %v1549, %v1564
        %s1567 = scalar_lea.vmem [#allocation2], 97
        %v1568 = vld [vmem:[%s1567] ss:$8 sm:$0x7]
        %1569 = vrot.lane.b32.xlu0 %v1118, 69
        %v1570 = vpop.permute.xlu0 %1569
        %v1571 = vrot.slane %v1570, 7
        %vm1572 = vcmask 564224
        %v1573 = vsel %vm1572, %v1571, %v1570
        %v1575 = vmul.f32 %v1568, %v1573
        %1577 = vrot.lane.b32.xlu0 %v1575, 59
        %v1578 = vpop.permute.xlu0 %1577
        %v1579 = vrot.slane %v1578, 1
        %vm1580 = vcmask 482304
        %v1581 = vsel %vm1580, %v1578, %v1579
        %v1583 = vadd.f32 %v1566, %v1581
        %s1584 = scalar_lea.vmem [#allocation2], 98
        %v1585 = vld [vmem:[%s1584] ss:$8 sm:$0x7]
        %1586 = vrot.lane.b32.xlu0 %v1138, 70
        %v1587 = vpop.permute.xlu0 %1586
        %v1588 = vrot.slane %v1587, 7
        %vm1589 = vcmask 572416
        %v1590 = vsel %vm1589, %v1588, %v1587
        %v1592 = vmul.f32 %v1585, %v1590
        %1594 = vrot.lane.b32.xlu0 %v1592, 58
        %v1595 = vpop.permute.xlu0 %1594
        %v1596 = vrot.slane %v1595, 1
        %vm1597 = vcmask 474112
        %v1598 = vsel %vm1597, %v1595, %v1596
        %v1600 = vadd.f32 %v1583, %v1598
        %s1601 = scalar_lea.vmem [#allocation2], 99
        %v1602 = vld [vmem:[%s1601] ss:$8 sm:$0x7]
        %1603 = vrot.lane.b32.xlu0 %v1042, 80
        %v1604 = vpop.permute.xlu0 %1603
        %v1605 = vrot.slane %v1604, 7
        %v1606 = vsel %vm1391, %v1605, %v1604
        %v1608 = vmul.f32 %v1602, %v1606
        %1610 = vrot.lane.b32.xlu0 %v1608, 48
        %v1611 = vpop.permute.xlu0 %1610
        %v1612 = vrot.slane %v1611, 1
        %v1613 = vsel %vm1383, %v1611, %v1612
        %v1615 = vadd.f32 %v1600, %v1613
        %s1616 = scalar_lea.vmem [#allocation2], 100
        %v1617 = vld [vmem:[%s1616] ss:$8 sm:$0x7]
        %1618 = vrot.lane.b32.xlu0 %v1048, 81
        %v1619 = vpop.permute.xlu0 %1618
        %v1620 = vrot.slane %v1619, 7
        %vm1621 = vcmask 662528
        %v1622 = vsel %vm1621, %v1620, %v1619
        %v1624 = vmul.f32 %v1617, %v1622
        %1626 = vrot.lane.b32.xlu0 %v1624, 47
        %v1627 = vpop.permute.xlu0 %1626
        %v1628 = vrot.slane %v1627, 1
        %vm1629 = vcmask 384000
        %v1630 = vsel %vm1629, %v1627, %v1628
        %v1632 = vadd.f32 %v1615, %v1630
        %s1633 = scalar_lea.vmem [#allocation2], 101
        %v1634 = vld [vmem:[%s1633] ss:$8 sm:$0x7]
        %1635 = vrot.lane.b32.xlu0 %v1068, 82
        %v1636 = vpop.permute.xlu0 %1635
        %v1637 = vrot.slane %v1636, 7
        %vm1638 = vcmask 670720
        %v1639 = vsel %vm1638, %v1637, %v1636
        %v1641 = vmul.f32 %v1634, %v1639
        %1643 = vrot.lane.b32.xlu0 %v1641, 46
        %v1644 = vpop.permute.xlu0 %1643
        %v1645 = vrot.slane %v1644, 1
        %vm1646 = vcmask 375808
        %v1647 = vsel %vm1646, %v1644, %v1645
        %v1649 = vadd.f32 %v1632, %v1647
        %s1650 = scalar_lea.vmem [#allocation2], 102
        %v1651 = vld [vmem:[%s1650] ss:$8 sm:$0x7]
        %1653 = vrot.lane.b32.xlu0 %v1651, 45
        %v1654 = vpop.permute.xlu0 %1653
        %v1655 = vrot.slane %v1654, 1
        %vm1656 = vcmask 367616
        %v1657 = vsel %vm1656, %v1654, %v1655
        %v1659 = vadd.f32 %v1649, %v1657
        %s1660 = scalar_lea.vmem [#allocation2], 103
        %v1661 = vld [vmem:[%s1660] ss:$8 sm:$0x7]
        %1662 = vrot.lane.b32.xlu0 %v1098, 84
        %v1663 = vpop.permute.xlu0 %1662
        %v1664 = vrot.slane %v1663, 7
        %vm1665 = vcmask 687104
        %v1666 = vsel %vm1665, %v1664, %v1663
        %v1668 = vmul.f32 %v1661, %v1666
        %1670 = vrot.lane.b32.xlu0 %v1668, 44
        %v1671 = vpop.permute.xlu0 %1670
        %v1672 = vrot.slane %v1671, 1
        %vm1673 = vcmask 359424
        %v1674 = vsel %vm1673, %v1671, %v1672
        %v1676 = vadd.f32 %v1659, %v1674
        %s1677 = scalar_lea.vmem [#allocation2], 120
        %v1678 = vld [vmem:[%s1677] ss:$8 sm:$0x7]
        %1679 = vrot.lane.b32.xlu0 %v1118, 85
        %v1680 = vpop.permute.xlu0 %1679
        %v1681 = vrot.slane %v1680, 7
        %vm1682 = vcmask 695296
        %v1683 = vsel %vm1682, %v1681, %v1680
        %v1685 = vmul.f32 %v1678, %v1683
        %1687 = vrot.lane.b32.xlu0 %v1685, 43
        %v1688 = vpop.permute.xlu0 %1687
        %v1689 = vrot.slane %v1688, 1
        %vm1690 = vcmask 351232
        %v1691 = vsel %vm1690, %v1688, %v1689
        %v1693 = vadd.f32 %v1676, %v1691
        %s1694 = scalar_lea.vmem [#allocation2], 121
        %v1695 = vld [vmem:[%s1694] ss:$8 sm:$0x7]
        %1696 = vrot.lane.b32.xlu0 %v1138, 86
        %v1697 = vpop.permute.xlu0 %1696
        %v1698 = vrot.slane %v1697, 7
        %vm1699 = vcmask 703488
        %v1700 = vsel %vm1699, %v1698, %v1697
        %v1702 = vmul.f32 %v1695, %v1700
        %1704 = vrot.lane.b32.xlu0 %v1702, 42
        %v1705 = vpop.permute.xlu0 %1704
        %v1706 = vrot.slane %v1705, 1
        %vm1707 = vcmask 343040
        %v1708 = vsel %vm1707, %v1705, %v1706
        %v1710 = vadd.f32 %v1693, %v1708
        %s1711 = scalar_lea.vmem [#allocation2], 122
        %v1712 = vld [vmem:[%s1711] ss:$8 sm:$0x7]
        %1713 = vrot.lane.b32.xlu0 %v1042, 96
        %v1714 = vpop.permute.xlu0 %1713
        %v1715 = vrot.slane %v1714, 7
        %v1716 = vsel %vm1279, %v1715, %v1714
        %v1718 = vmul.f32 %v1712, %v1716
        %1720 = vrot.lane.b32.xlu0 %v1718, 32
        %v1721 = vpop.permute.xlu0 %1720
        %v1722 = vrot.slane %v1721, 1
        %v1723 = vsel %vm677, %v1721, %v1722
        %v1725 = vadd.f32 %v1710, %v1723
        %s1726 = scalar_lea.vmem [#allocation2], 123
        %v1727 = vld [vmem:[%s1726] ss:$8 sm:$0x7]
        %1728 = vrot.lane.b32.xlu0 %v1048, 97
        %v1729 = vpop.permute.xlu0 %1728
        %v1730 = vrot.slane %v1729, 7
        %vm1731 = vcmask 793600
        %v1732 = vsel %vm1731, %v1730, %v1729
        %v1734 = vmul.f32 %v1727, %v1732
        %1736 = vrot.lane.b32.xlu0 %v1734, 31
        %v1737 = vpop.permute.xlu0 %1736
        %v1738 = vrot.slane %v1737, 1
        %vm1739 = vcmask 252928
        %v1740 = vsel %vm1739, %v1737, %v1738
        %v1742 = vadd.f32 %v1725, %v1740
        %s1743 = scalar_lea.vmem [#allocation2], 124
        %v1744 = vld [vmem:[%s1743] ss:$8 sm:$0x7]
        %1745 = vrot.lane.b32.xlu0 %v1068, 98
        %v1746 = vpop.permute.xlu0 %1745
        %v1747 = vrot.slane %v1746, 7
        %vm1748 = vcmask 801792
        %v1749 = vsel %vm1748, %v1747, %v1746
        %v1751 = vmul.f32 %v1744, %v1749
        %1753 = vrot.lane.b32.xlu0 %v1751, 30
        %v1754 = vpop.permute.xlu0 %1753
        %v1755 = vrot.slane %v1754, 1
        %vm1756 = vcmask 244736
        %v1757 = vsel %vm1756, %v1754, %v1755
        %v1759 = vadd.f32 %v1742, %v1757
        %s1760 = scalar_lea.vmem [#allocation2], 125
        %v1761 = vld [vmem:[%s1760] ss:$8 sm:$0x7]
        %1763 = vrot.lane.b32.xlu0 %v1761, 29
        %v1764 = vpop.permute.xlu0 %1763
        %v1765 = vrot.slane %v1764, 1
        %vm1766 = vcmask 236544
        %v1767 = vsel %vm1766, %v1764, %v1765
        %v1769 = vadd.f32 %v1759, %v1767
        %s1770 = scalar_lea.vmem [#allocation2], 126
        %v1771 = vld [vmem:[%s1770] ss:$8 sm:$0x7]
        %1772 = vrot.lane.b32.xlu0 %v1098, 100
        %v1773 = vpop.permute.xlu0 %1772
        %v1774 = vrot.slane %v1773, 7
        %vm1775 = vcmask 818176
        %v1776 = vsel %vm1775, %v1774, %v1773
        %v1778 = vmul.f32 %v1771, %v1776
        %1780 = vrot.lane.b32.xlu0 %v1778, 28
        %v1781 = vpop.permute.xlu0 %1780
        %v1782 = vrot.slane %v1781, 1
        %vm1783 = vcmask 228352
        %v1784 = vsel %vm1783, %v1781, %v1782
        %v1786 = vadd.f32 %v1769, %v1784
        %s1787 = scalar_lea.vmem [#allocation2], 127
        %v1788 = vld [vmem:[%s1787] ss:$8 sm:$0x7]
        %1789 = vrot.lane.b32.xlu0 %v1118, 101
        %v1790 = vpop.permute.xlu0 %1789
        %v1791 = vrot.slane %v1790, 7
        %vm1792 = vcmask 826368
        %v1793 = vsel %vm1792, %v1791, %v1790
        %v1795 = vmul.f32 %v1788, %v1793
        %1797 = vrot.lane.b32.xlu0 %v1795, 27
        %v1798 = vpop.permute.xlu0 %1797
        %v1799 = vrot.slane %v1798, 1
        %vm1800 = vcmask 220160
        %v1801 = vsel %vm1800, %v1798, %v1799
        %v1803 = vadd.f32 %v1786, %v1801
        %s1804 = scalar_lea.vmem [#allocation2], 144
        %v1805 = vld [vmem:[%s1804] ss:$8 sm:$0x7]
        %1806 = vrot.lane.b32.xlu0 %v1138, 102
        %v1807 = vpop.permute.xlu0 %1806
        %v1808 = vrot.slane %v1807, 7
        %vm1809 = vcmask 834560
        %v1810 = vsel %vm1809, %v1808, %v1807
        %v1812 = vmul.f32 %v1805, %v1810
        %1814 = vrot.lane.b32.xlu0 %v1812, 26
        %v1815 = vpop.permute.xlu0 %1814
        %v1816 = vrot.slane %v1815, 1
        %vm1817 = vcmask 211968
        %v1818 = vsel %vm1817, %v1815, %v1816
        %v1820 = vadd.f32 %v1803, %v1818
        %v1821 = vxor.u32 %v1820, 2147483648
        %v1822 = vmul.f32 %v1821, 1.442695
        %v1823 = vpow.pop %v1822
        %v1824 = vadd.f32 %v1823, 1.0
        %v1825 = vrcp.pop %v1824
        %v1826 = vmul.f32 1.0, %v1825
        %v1828 = vlaneseq
        %v1829 = vshrl.u32 %v1828, 7
        %v1830 = vsub.s32 0, %v1829
        %v1831 = vrot.slane %v1826, %v1830
        %v1832 = vlaneseq
        %v1833 = vshrl.u32 %v1832, 7
        %v1834 = vsub.s32 1, %v1833
        %v1835 = vrot.slane %v1826, %v1834
        %v1838 = vmul.f32 %v781, %v1831
        %v1839 = vmul.f32 %v782, %v1835
        %v1840 = vmul.f32 %v783, %v1831
        %v1841 = vmul.f32 %v784, %v1835
        %1842 = vst.msk [vmem:[#allocation3] sm:$0xff] %vm1177, 0.0
        %1843 = vst.msk [vmem:[#allocation3 + $0x18] sm:$0xff] %vm1177, 0.0
        %vm1844 = vcmask 277640
        %1845 = vst.msk [vmem:[#allocation3 + $0x10] sm:$0xff] %vm1844, 0.0
        %1846 = vst.msk [vmem:[#allocation3 + $0x28] sm:$0xff] %vm1844, 0.0
        %1851 = vrot.lane.b32.xlu0 %v1838, 17
        %v1852 = vpop.permute.xlu0 %1851
        %1853 = vrot.lane.b32.xlu0 %v1839, 17
        %v1854 = vpop.permute.xlu0 %1853
        %1855 = vrot.lane.b32.xlu0 %v1840, 17
        %v1856 = vpop.permute.xlu0 %1855
        %1857 = vrot.lane.b32.xlu0 %v1841, 17
        %v1858 = vpop.permute.xlu0 %1857
        %v1859 = vsel %vm1177, %v1852, %v1854
        %v1860 = vsel %vm1177, %v1856, %v1858
        %vm1867 = vcmask 1047688
        %1868 = vst.msk [vmem:[#allocation3] sm:$0xff] %vm1867, %v1852
        %1869 = vst [vmem:[#allocation3 + $0x8] sm:$0xff] %v1859
        %1870 = vst.msk [vmem:[#allocation3 + $0x10] sm:$0xff] %vm1177, %v1854
        %1871 = vst.msk [vmem:[#allocation3 + $0x18] sm:$0xff] %vm1867, %v1856
        %1872 = vst [vmem:[#allocation3 + $0x20] sm:$0xff] %v1860
        %1873 = vst.msk [vmem:[#allocation3 + $0x28] sm:$0xff] %vm1177, %v1858
        %v1874 = vld [vmem:[%s8] sm:$0xff]
        %v1875 = vld [vmem:[%s8 + $0x8] sm:$0xff]
        %v1876 = vld [vmem:[%s9] sm:$0xff]
        %v1877 = vld [vmem:[%s9 + $0x8] sm:$0xff]
        %1879 = vset.pattern.permute.xlu0 0
        %1880 = vperm.xlu0 %1879, %v1876
        %v1881 = vpop.permute.xlu0 %1880
        %1884 = vset.pattern.permute.xlu0 0
        %1885 = vperm.xlu0 %1884, %v1877
        %v1886 = vpop.permute.xlu0 %1885
        %v1888 = vld [vmem:[#allocation3] sm:$0xff]
        %v1889 = vld [vmem:[#allocation3 + $0x8] sm:$0xff]
        %v1890 = vld [vmem:[#allocation3 + $0x18] sm:$0xff]
        %v1891 = vld [vmem:[#allocation3 + $0x20] sm:$0xff]
        %v1892 = vld [vmem:[%s10] ss:$4 sm:$0x3]
        %v1894 = vlaneseq
        %v1895 = vshrl.u32 %v1894, 7
        %v1896 = vsub.s32 0, %v1895
        %v1897 = vrot.slane %v1892, %v1896
        %v1898 = vlaneseq
        %v1899 = vshrl.u32 %v1898, 7
        %v1900 = vsub.s32 1, %v1899
        %v1901 = vrot.slane %v1892, %v1900
        %v1904 = vmul.f32 %v1888, %v1897
        %v1905 = vmul.f32 %v1889, %v1901
        %v1906 = vmul.f32 %v1890, %v1897
        %v1907 = vmul.f32 %v1891, %v1901
        %1909 = vset.pattern.permute.xlu0 0
        %1910 = vperm.xlu0 %1909, %v1874
        %v1911 = vpop.permute.xlu0 %1910
        %1914 = vset.pattern.permute.xlu0 0
        %1915 = vperm.xlu0 %1914, %v1875
        %v1916 = vpop.permute.xlu0 %1915
        %v1918 = vmul.f32 %v1911, %v1904
        %v1919 = vmul.f32 %v1911, %v1905
        %v1920 = vmul.f32 %v1916, %v1906
        %v1921 = vmul.f32 %v1916, %v1907
        %v1922 = vadd.f32 %v1881, %v1918
        %v1923 = vadd.f32 %v1881, %v1919
        %v1924 = vadd.f32 %v1886, %v1920
        %v1925 = vadd.f32 %v1886, %v1921
        %v1926 = vld [vmem:[#allocation3] sm:$0xff]
        %v1927 = vld [vmem:[#allocation3 + $0x8] sm:$0xff]
        %v1928 = vld [vmem:[#allocation3 + $0x10] sm:$0xff]
        %v1929 = vld [vmem:[#allocation3 + $0x18] sm:$0xff]
        %v1930 = vld [vmem:[#allocation3 + $0x20] sm:$0xff]
        %v1931 = vld [vmem:[#allocation3 + $0x28] sm:$0xff]
        %1932 = vset.pattern.permute.xlu0 1
        %1933 = vperm.xlu0 %1932, %v1874
        %v1934 = vpop.permute.xlu0 %1933
        %1936 = vset.pattern.permute.xlu0 1
        %1937 = vperm.xlu0 %1936, %v1875
        %v1938 = vpop.permute.xlu0 %1937
        %v1940 = vmul.f32 %v1934, %v1926
        %v1941 = vmul.f32 %v1934, %v1927
        %v1942 = vmul.f32 %v1934, %v1928
        %v1943 = vmul.f32 %v1938, %v1929
        %v1944 = vmul.f32 %v1938, %v1930
        %v1945 = vmul.f32 %v1938, %v1931
        %1952 = vrot.lane.b32.xlu0 %v1940, 127
        %v1953 = vpop.permute.xlu0 %1952
        %1954 = vrot.lane.b32.xlu0 %v1941, 127
        %v1955 = vpop.permute.xlu0 %1954
        %1956 = vrot.lane.b32.xlu0 %v1942, 127
        %v1957 = vpop.permute.xlu0 %1956
        %1958 = vrot.lane.b32.xlu0 %v1943, 127
        %v1959 = vpop.permute.xlu0 %1958
        %1960 = vrot.lane.b32.xlu0 %v1944, 127
        %v1961 = vpop.permute.xlu0 %1960
        %1962 = vrot.lane.b32.xlu0 %v1945, 127
        %v1963 = vpop.permute.xlu0 %1962
        %v1964 = vsel %vm1061, %v1953, %v1955
        %v1965 = vsel %vm1061, %v1955, %v1957
        %v1966 = vsel %vm1061, %v1959, %v1961
        %v1967 = vsel %vm1061, %v1961, %v1963
        %v1972 = vadd.f32 %v1922, %v1964
        %v1973 = vadd.f32 %v1923, %v1965
        %v1974 = vadd.f32 %v1924, %v1966
        %v1975 = vadd.f32 %v1925, %v1967
        %s1976 = scalar_lea.vmem %s10, 2
        %v1977 = vld [vmem:[%s1976] ss:$4 sm:$0x3]
        %v1979 = vlaneseq
        %v1980 = vshrl.u32 %v1979, 7
        %v1981 = vsub.s32 0, %v1980
        %v1982 = vrot.slane %v1977, %v1981
        %v1983 = vlaneseq
        %v1984 = vshrl.u32 %v1983, 7
        %v1985 = vsub.s32 1, %v1984
        %v1986 = vrot.slane %v1977, %v1985
        %1987 = vrot.lane.b32.xlu0 %v1982, 2
        %v1988 = vpop.permute.xlu0 %1987
        %1989 = vrot.lane.b32.xlu0 %v1986, 2
        %v1990 = vpop.permute.xlu0 %1989
        %v1991 = vsel %vm1073, %v1988, %v1990
        %v1995 = vmul.f32 %v1926, %v1988
        %v1996 = vmul.f32 %v1927, %v1991
        %v1997 = vmul.f32 %v1928, %v1990
        %v1998 = vmul.f32 %v1929, %v1988
        %v1999 = vmul.f32 %v1930, %v1991
        %v2000 = vmul.f32 %v1931, %v1990
        %2001 = vset.pattern.permute.xlu0 2
        %2002 = vperm.xlu0 %2001, %v1874
        %v2003 = vpop.permute.xlu0 %2002
        %2005 = vset.pattern.permute.xlu0 2
        %2006 = vperm.xlu0 %2005, %v1875
        %v2007 = vpop.permute.xlu0 %2006
        %v2009 = vmul.f32 %v2003, %v1995
        %v2010 = vmul.f32 %v2003, %v1996
        %v2011 = vmul.f32 %v2003, %v1997
        %v2012 = vmul.f32 %v2007, %v1998
        %v2013 = vmul.f32 %v2007, %v1999
        %v2014 = vmul.f32 %v2007, %v2000
        %2021 = vrot.lane.b32.xlu0 %v2009, 126
        %v2022 = vpop.permute.xlu0 %2021
        %2023 = vrot.lane.b32.xlu0 %v2010, 126
        %v2024 = vpop.permute.xlu0 %2023
        %2025 = vrot.lane.b32.xlu0 %v2011, 126
        %v2026 = vpop.permute.xlu0 %2025
        %2027 = vrot.lane.b32.xlu0 %v2012, 126
        %v2028 = vpop.permute.xlu0 %2027
        %2029 = vrot.lane.b32.xlu0 %v2013, 126
        %v2030 = vpop.permute.xlu0 %2029
        %2031 = vrot.lane.b32.xlu0 %v2014, 126
        %v2032 = vpop.permute.xlu0 %2031
        %v2033 = vsel %vm1081, %v2022, %v2024
        %v2034 = vsel %vm1081, %v2024, %v2026
        %v2035 = vsel %vm1081, %v2028, %v2030
        %v2036 = vsel %vm1081, %v2030, %v2032
        %v2041 = vadd.f32 %v1972, %v2033
        %v2042 = vadd.f32 %v1973, %v2034
        %v2043 = vadd.f32 %v1974, %v2035
        %v2044 = vadd.f32 %v1975, %v2036
        %2045 = vrot.lane.b32.xlu0 %v1897, 16
        %v2046 = vpop.permute.xlu0 %2045
        %2047 = vrot.lane.b32.xlu0 %v1901, 16
        %v2048 = vpop.permute.xlu0 %2047
        %v2049 = vsel %vm571, %v2046, %v2048
        %v2053 = vmul.f32 %v1926, %v2046
        %v2054 = vmul.f32 %v1927, %v2049
        %v2055 = vmul.f32 %v1928, %v2048
        %v2056 = vmul.f32 %v1929, %v2046
        %v2057 = vmul.f32 %v1930, %v2049
        %v2058 = vmul.f32 %v1931, %v2048
        %2059 = vset.pattern.permute.xlu0 3
        %2060 = vperm.xlu0 %2059, %v1874
        %v2061 = vpop.permute.xlu0 %2060
        %2063 = vset.pattern.permute.xlu0 3
        %2064 = vperm.xlu0 %2063, %v1875
        %v2065 = vpop.permute.xlu0 %2064
        %v2067 = vmul.f32 %v2061, %v2053
        %v2068 = vmul.f32 %v2061, %v2054
        %v2069 = vmul.f32 %v2061, %v2055
        %v2070 = vmul.f32 %v2065, %v2056
        %v2071 = vmul.f32 %v2065, %v2057
        %v2072 = vmul.f32 %v2065, %v2058
        %2079 = vrot.lane.b32.xlu0 %v2067, 112
        %v2080 = vpop.permute.xlu0 %2079
        %2081 = vrot.lane.b32.xlu0 %v2068, 112
        %v2082 = vpop.permute.xlu0 %2081
        %2083 = vrot.lane.b32.xlu0 %v2069, 112
        %v2084 = vpop.permute.xlu0 %2083
        %2085 = vrot.lane.b32.xlu0 %v2070, 112
        %v2086 = vpop.permute.xlu0 %2085
        %2087 = vrot.lane.b32.xlu0 %v2071, 112
        %v2088 = vpop.permute.xlu0 %2087
        %2089 = vrot.lane.b32.xlu0 %v2072, 112
        %v2090 = vpop.permute.xlu0 %2089
        %v2091 = vsel %vm1168, %v2080, %v2082
        %v2092 = vsel %vm1168, %v2082, %v2084
        %v2093 = vsel %vm1168, %v2086, %v2088
        %v2094 = vsel %vm1168, %v2088, %v2090
        %v2099 = vadd.f32 %v2041, %v2091
        %v2100 = vadd.f32 %v2042, %v2092
        %v2101 = vadd.f32 %v2043, %v2093
        %v2102 = vadd.f32 %v2044, %v2094
        %2103 = vset.pattern.permute.xlu0 4
        %2104 = vperm.xlu0 %2103, %v1874
        %v2105 = vpop.permute.xlu0 %2104
        %2107 = vset.pattern.permute.xlu0 4
        %2108 = vperm.xlu0 %2107, %v1875
        %v2109 = vpop.permute.xlu0 %2108
        %v2111 = vmul.f32 %v2105, %v1926
        %v2112 = vmul.f32 %v2105, %v1927
        %v2113 = vmul.f32 %v2105, %v1928
        %v2114 = vmul.f32 %v2109, %v1929
        %v2115 = vmul.f32 %v2109, %v1930
        %v2116 = vmul.f32 %v2109, %v1931
        %2123 = vrot.lane.b32.xlu0 %v2111, 111
        %v2124 = vpop.permute.xlu0 %2123
        %2125 = vrot.lane.b32.xlu0 %v2112, 111
        %v2126 = vpop.permute.xlu0 %2125
        %2127 = vrot.lane.b32.xlu0 %v2113, 111
        %v2128 = vpop.permute.xlu0 %2127
        %2129 = vrot.lane.b32.xlu0 %v2114, 111
        %v2130 = vpop.permute.xlu0 %2129
        %2131 = vrot.lane.b32.xlu0 %v2115, 111
        %v2132 = vpop.permute.xlu0 %2131
        %2133 = vrot.lane.b32.xlu0 %v2116, 111
        %v2134 = vpop.permute.xlu0 %2133
        %v2135 = vsel %vm1185, %v2124, %v2126
        %v2136 = vsel %vm1185, %v2126, %v2128
        %v2137 = vsel %vm1185, %v2130, %v2132
        %v2138 = vsel %vm1185, %v2132, %v2134
        %v2143 = vadd.f32 %v2099, %v2135
        %v2144 = vadd.f32 %v2100, %v2136
        %v2145 = vadd.f32 %v2101, %v2137
        %v2146 = vadd.f32 %v2102, %v2138
        %2147 = vrot.lane.b32.xlu0 %v1982, 18
        %v2148 = vpop.permute.xlu0 %2147
        %2149 = vrot.lane.b32.xlu0 %v1986, 18
        %v2150 = vpop.permute.xlu0 %2149
        %v2151 = vsel %vm1194, %v2148, %v2150
        %v2155 = vmul.f32 %v1926, %v2148
        %v2156 = vmul.f32 %v1927, %v2151
        %v2157 = vmul.f32 %v1928, %v2150
        %v2158 = vmul.f32 %v1929, %v2148
        %v2159 = vmul.f32 %v1930, %v2151
        %v2160 = vmul.f32 %v1931, %v2150
        %2161 = vset.pattern.permute.xlu0 5
        %2162 = vperm.xlu0 %2161, %v1874
        %v2163 = vpop.permute.xlu0 %2162
        %2165 = vset.pattern.permute.xlu0 5
        %2166 = vperm.xlu0 %2165, %v1875
        %v2167 = vpop.permute.xlu0 %2166
        %v2169 = vmul.f32 %v2163, %v2155
        %v2170 = vmul.f32 %v2163, %v2156
        %v2171 = vmul.f32 %v2163, %v2157
        %v2172 = vmul.f32 %v2167, %v2158
        %v2173 = vmul.f32 %v2167, %v2159
        %v2174 = vmul.f32 %v2167, %v2160
        %2181 = vrot.lane.b32.xlu0 %v2169, 110
        %v2182 = vpop.permute.xlu0 %2181
        %2183 = vrot.lane.b32.xlu0 %v2170, 110
        %v2184 = vpop.permute.xlu0 %2183
        %2185 = vrot.lane.b32.xlu0 %v2171, 110
        %v2186 = vpop.permute.xlu0 %2185
        %2187 = vrot.lane.b32.xlu0 %v2172, 110
        %v2188 = vpop.permute.xlu0 %2187
        %2189 = vrot.lane.b32.xlu0 %v2173, 110
        %v2190 = vpop.permute.xlu0 %2189
        %2191 = vrot.lane.b32.xlu0 %v2174, 110
        %v2192 = vpop.permute.xlu0 %2191
        %v2193 = vsel %vm1202, %v2182, %v2184
        %v2194 = vsel %vm1202, %v2184, %v2186
        %v2195 = vsel %vm1202, %v2188, %v2190
        %v2196 = vsel %vm1202, %v2190, %v2192
        %v2201 = vadd.f32 %v2143, %v2193
        %v2202 = vadd.f32 %v2144, %v2194
        %v2203 = vadd.f32 %v2145, %v2195
        %v2204 = vadd.f32 %v2146, %v2196
        %2205 = vrot.lane.b32.xlu0 %v1897, 32
        %v2206 = vpop.permute.xlu0 %2205
        %2207 = vrot.lane.b32.xlu0 %v1901, 32
        %v2208 = vpop.permute.xlu0 %2207
        %v2209 = vsel %vm677, %v2206, %v2208
        %v2213 = vmul.f32 %v1926, %v2206
        %v2214 = vmul.f32 %v1927, %v2209
        %v2215 = vmul.f32 %v1928, %v2208
        %v2216 = vmul.f32 %v1929, %v2206
        %v2217 = vmul.f32 %v1930, %v2209
        %v2218 = vmul.f32 %v1931, %v2208
        %2219 = vset.pattern.permute.xlu0 6
        %2220 = vperm.xlu0 %2219, %v1874
        %v2221 = vpop.permute.xlu0 %2220
        %2223 = vset.pattern.permute.xlu0 6
        %2224 = vperm.xlu0 %2223, %v1875
        %v2225 = vpop.permute.xlu0 %2224
        %v2227 = vmul.f32 %v2221, %v2213
        %v2228 = vmul.f32 %v2221, %v2214
        %v2229 = vmul.f32 %v2221, %v2215
        %v2230 = vmul.f32 %v2225, %v2216
        %v2231 = vmul.f32 %v2225, %v2217
        %v2232 = vmul.f32 %v2225, %v2218
        %2239 = vrot.lane.b32.xlu0 %v2227, 96
        %v2240 = vpop.permute.xlu0 %2239
        %2241 = vrot.lane.b32.xlu0 %v2228, 96
        %v2242 = vpop.permute.xlu0 %2241
        %2243 = vrot.lane.b32.xlu0 %v2229, 96
        %v2244 = vpop.permute.xlu0 %2243
        %2245 = vrot.lane.b32.xlu0 %v2230, 96
        %v2246 = vpop.permute.xlu0 %2245
        %2247 = vrot.lane.b32.xlu0 %v2231, 96
        %v2248 = vpop.permute.xlu0 %2247
        %2249 = vrot.lane.b32.xlu0 %v2232, 96
        %v2250 = vpop.permute.xlu0 %2249
        %v2251 = vsel %vm1279, %v2240, %v2242
        %v2252 = vsel %vm1279, %v2242, %v2244
        %v2253 = vsel %vm1279, %v2246, %v2248
        %v2254 = vsel %vm1279, %v2248, %v2250
        %v2259 = vadd.f32 %v2201, %v2251
        %v2260 = vadd.f32 %v2202, %v2252
        %v2261 = vadd.f32 %v2203, %v2253
        %v2262 = vadd.f32 %v2204, %v2254
        %2263 = vset.pattern.permute.xlu0 7
        %2264 = vperm.xlu0 %2263, %v1874
        %v2265 = vpop.permute.xlu0 %2264
        %2267 = vset.pattern.permute.xlu0 7
        %2268 = vperm.xlu0 %2267, %v1875
        %v2269 = vpop.permute.xlu0 %2268
        %v2271 = vmul.f32 %v2265, %v1926
        %v2272 = vmul.f32 %v2265, %v1927
        %v2273 = vmul.f32 %v2265, %v1928
        %v2274 = vmul.f32 %v2269, %v1929
        %v2275 = vmul.f32 %v2269, %v1930
        %v2276 = vmul.f32 %v2269, %v1931
        %2283 = vrot.lane.b32.xlu0 %v2271, 95
        %v2284 = vpop.permute.xlu0 %2283
        %2285 = vrot.lane.b32.xlu0 %v2272, 95
        %v2286 = vpop.permute.xlu0 %2285
        %2287 = vrot.lane.b32.xlu0 %v2273, 95
        %v2288 = vpop.permute.xlu0 %2287
        %2289 = vrot.lane.b32.xlu0 %v2274, 95
        %v2290 = vpop.permute.xlu0 %2289
        %2291 = vrot.lane.b32.xlu0 %v2275, 95
        %v2292 = vpop.permute.xlu0 %2291
        %2293 = vrot.lane.b32.xlu0 %v2276, 95
        %v2294 = vpop.permute.xlu0 %2293
        %v2295 = vsel %vm1296, %v2284, %v2286
        %v2296 = vsel %vm1296, %v2286, %v2288
        %v2297 = vsel %vm1296, %v2290, %v2292
        %v2298 = vsel %vm1296, %v2292, %v2294
        %v2303 = vadd.f32 %v2259, %v2295
        %v2304 = vadd.f32 %v2260, %v2296
        %v2305 = vadd.f32 %v2261, %v2297
        %v2306 = vadd.f32 %v2262, %v2298
        %2307 = vrot.lane.b32.xlu0 %v1982, 34
        %v2308 = vpop.permute.xlu0 %2307
        %2309 = vrot.lane.b32.xlu0 %v1986, 34
        %v2310 = vpop.permute.xlu0 %2309
        %v2311 = vsel %vm1305, %v2308, %v2310
        %v2315 = vmul.f32 %v1926, %v2308
        %v2316 = vmul.f32 %v1927, %v2311
        %v2317 = vmul.f32 %v1928, %v2310
        %v2318 = vmul.f32 %v1929, %v2308
        %v2319 = vmul.f32 %v1930, %v2311
        %v2320 = vmul.f32 %v1931, %v2310
        %2321 = vset.pattern.permute.xlu0 8
        %2322 = vperm.xlu0 %2321, %v1874
        %v2323 = vpop.permute.xlu0 %2322
        %2325 = vset.pattern.permute.xlu0 8
        %2326 = vperm.xlu0 %2325, %v1875
        %v2327 = vpop.permute.xlu0 %2326
        %v2329 = vmul.f32 %v2323, %v2315
        %v2330 = vmul.f32 %v2323, %v2316
        %v2331 = vmul.f32 %v2323, %v2317
        %v2332 = vmul.f32 %v2327, %v2318
        %v2333 = vmul.f32 %v2327, %v2319
        %v2334 = vmul.f32 %v2327, %v2320
        %2341 = vrot.lane.b32.xlu0 %v2329, 94
        %v2342 = vpop.permute.xlu0 %2341
        %2343 = vrot.lane.b32.xlu0 %v2330, 94
        %v2344 = vpop.permute.xlu0 %2343
        %2345 = vrot.lane.b32.xlu0 %v2331, 94
        %v2346 = vpop.permute.xlu0 %2345
        %2347 = vrot.lane.b32.xlu0 %v2332, 94
        %v2348 = vpop.permute.xlu0 %2347
        %2349 = vrot.lane.b32.xlu0 %v2333, 94
        %v2350 = vpop.permute.xlu0 %2349
        %2351 = vrot.lane.b32.xlu0 %v2334, 94
        %v2352 = vpop.permute.xlu0 %2351
        %v2353 = vsel %vm1313, %v2342, %v2344
        %v2354 = vsel %vm1313, %v2344, %v2346
        %v2355 = vsel %vm1313, %v2348, %v2350
        %v2356 = vsel %vm1313, %v2350, %v2352
        %v2361 = vadd.f32 %v2303, %v2353
        %v2362 = vadd.f32 %v2304, %v2354
        %v2363 = vadd.f32 %v2305, %v2355
        %v2364 = vadd.f32 %v2306, %v2356
        %v2365 = vmax.f32 %v2361, 0.0
        %v2366 = vmax.f32 %v2362, 0.0
        %v2367 = vmax.f32 %v2363, 0.0
        %v2368 = vmax.f32 %v2364, 0.0
        %v2369 = vld [vmem:[%s11] sm:$0xff]
        %v2370 = vld [vmem:[%s11 + $0x8] sm:$0xff]
        %v2371 = vld [vmem:[%s11 + $0x10] sm:$0xff]
        %v2372 = vld [vmem:[%s11 + $0x18] sm:$0xff]
        %v2373 = vld [vmem:[%s12] sm:$0xff]
        %v2374 = vld [vmem:[%s12 + $0x8] sm:$0xff]
        %v2375 = vld [vmem:[%s12 + $0x10] sm:$0xff]
        %v2376 = vld [vmem:[%s12 + $0x18] sm:$0xff]
        %2378 = vset.pattern.permute.xlu0 0
        %2379 = vperm.xlu0 %2378, %v2373
        %v2380 = vpop.permute.xlu0 %2379
        %2383 = vset.pattern.permute.xlu0 0
        %2384 = vperm.xlu0 %2383, %v2374
        %v2385 = vpop.permute.xlu0 %2384
        %2388 = vset.pattern.permute.xlu0 0
        %2389 = vperm.xlu0 %2388, %v2375
        %v2390 = vpop.permute.xlu0 %2389
        %2393 = vset.pattern.permute.xlu0 0
        %2394 = vperm.xlu0 %2393, %v2376
        %v2395 = vpop.permute.xlu0 %2394
        %v2398 = vsel %vm571, %v2369, 0
        %v2401 = vsel %vm571, %v2370, 0
        %v2404 = vsel %vm571, %v2371, 0
        %v2407 = vsel %vm571, %v2372, 0
        %2409 = vmatprep.subr.mxu0 0.0
        %2410 = vmatpush1.msra.mxu0 0.0
        %2411 = vmatprep.subr.mxu0 0.0
        %2412 = vmatpush1.msra.mxu0 0.0
        %2413 = vmatprep.subr.mxu0 0.0
        %2414 = vmatpush1.msra.mxu0 0.0
        %2415 = vmatprep.subr.mxu0 0.0
        %2416 = vmatpush1.msra.mxu0 0.0
        %2417 = vmatprep.subr.mxu0 0.0
        %2418 = vmatpush1.msra.mxu0 0.0
        %2419 = vmatprep.subr.mxu0 0.0
        %2420 = vmatpush1.msra.mxu0 0.0
        %2421 = vmatprep.subr.mxu0 0.0
        %2422 = vmatpush1.msra.mxu0 0.0
        %2423 = vmatprep.subr.mxu0 0.0
        %2424 = vmatpush1.msra.mxu0 0.0
        %2425 = vmatprep.subr.mxu0 0.0
        %2426 = vmatpush1.msra.mxu0 0.0
        %2427 = vmatprep.subr.mxu0 0.0
        %2428 = vmatpush1.msra.mxu0 0.0
        %2429 = vmatprep.subr.mxu0 0.0
        %2430 = vmatpush1.msra.mxu0 0.0
        %2431 = vmatprep.subr.mxu0 0.0
        %2432 = vmatpush1.msra.mxu0 0.0
        %2433 = vmatprep.subr.mxu0 0.0
        %2434 = vmatpush1.msra.mxu0 0.0
        %2435 = vmatprep.subr.mxu0 0.0
        %2436 = vmatpush1.msra.mxu0 0.0
        %2437 = vmatprep.subr.mxu0 %v2368
        %2438 = vmatpush1.msra.mxu0 %v2367
        %2439 = vmatprep.subr.mxu0 %v2366
        %2440 = vmatpush1.msra.mxu0 %v2365
        %2441 = vmatprep.subr.mxu0 0.0
        %2442 = vmatpush2.msra.mxu0 0.0
        %2443 = vmatprep.subr.mxu0 0.0
        %2444 = vmatpush2.msra.mxu0 0.0
        %2445 = vmatprep.subr.mxu0 0.0
        %2446 = vmatpush2.msra.mxu0 0.0
        %2447 = vmatprep.subr.mxu0 0.0
        %2448 = vmatpush2.msra.mxu0 0.0
        %2449 = vmatprep.subr.mxu0 0.0
        %2450 = vmatpush2.msra.mxu0 0.0
        %2451 = vmatprep.subr.mxu0 0.0
        %2452 = vmatpush2.msra.mxu0 0.0
        %2453 = vmatprep.subr.mxu0 0.0
        %2454 = vmatpush2.msra.mxu0 0.0
        %2455 = vmatprep.subr.mxu0 0.0
        %2456 = vmatpush2.msra.mxu0 0.0
        %2457 = vmatprep.subr.mxu0 0.0
        %2458 = vmatpush2.msra.mxu0 0.0
        %2459 = vmatprep.subr.mxu0 0.0
        %2460 = vmatpush2.msra.mxu0 0.0
        %2461 = vmatprep.subr.mxu0 0.0
        %2462 = vmatpush2.msra.mxu0 0.0
        %2463 = vmatprep.subr.mxu0 0.0
        %2464 = vmatpush2.msra.mxu0 0.0
        %2465 = vmatprep.subr.mxu0 0.0
        %2466 = vmatpush2.msra.mxu0 0.0
        %2467 = vmatprep.subr.mxu0 0.0
        %2468 = vmatpush2.msra.mxu0 0.0
        %2469 = vmatprep.subr.mxu0 0.0
        %2470 = vmatpush2.msra.mxu0 0.0
        %2471 = vmatprep.subr.mxu0 0.0
        %2472 = vmatpush2.msra.mxu0 0.0
        %2473 = vmatprep.mubr.f32.mxu0 0.0
        %2474 = vmatmul.mubr.f32.gmra.mxu0 %v2398
        %v2475 = vpop.f32.mrf.mxu0
        %v2476 = vadd.f32 %v2380, %v2475
        %v2477 = vpop.f32.mrf.mxu0
        %v2478 = vadd.f32 %v2380, %v2477
        %2479 = vmatprep.mubr.f32.mxu0 0.0
        %2480 = vmatmul.mubr.f32.gmra.mxu0 %v2401
        %v2481 = vpop.f32.mrf.mxu0
        %v2482 = vadd.f32 %v2385, %v2481
        %v2483 = vpop.f32.mrf.mxu0
        %v2484 = vadd.f32 %v2385, %v2483
        %2485 = vmatprep.mubr.f32.mxu0 0.0
        %2486 = vmatmul.mubr.f32.gmra.mxu0 %v2404
        %v2487 = vpop.f32.mrf.mxu0
        %v2488 = vadd.f32 %v2390, %v2487
        %v2489 = vpop.f32.mrf.mxu0
        %v2490 = vadd.f32 %v2390, %v2489
        %2491 = vmatprep.mubr.f32.mxu0 0.0
        %2492 = vmatmul.mubr.f32.gmra.mxu0 %v2407
        %v2493 = vpop.f32.mrf.mxu0
        %v2494 = vadd.f32 %v2395, %v2493
        %v2495 = vpop.f32.mrf.mxu0
        %v2496 = vadd.f32 %v2395, %v2495
        %2497 = vdwg.mxu0
        %v2498 = vmax.f32 %v2476, 0.0
        %v2499 = vmax.f32 %v2478, 0.0
        %v2500 = vmax.f32 %v2482, 0.0
        %v2501 = vmax.f32 %v2484, 0.0
        %v2502 = vmax.f32 %v2488, 0.0
        %v2503 = vmax.f32 %v2490, 0.0
        %v2504 = vmax.f32 %v2494, 0.0
        %v2505 = vmax.f32 %v2496, 0.0
        %v2506 = vld [vmem:[%s13] sm:$0x1]
        %v2507 = vld [vmem:[#allocation6] sm:$0x1]
        %2509 = vset.pattern.permute.xlu0 0
        %2510 = vperm.xlu0 %2509, %v2507
        %v2511 = vpop.permute.xlu0 %2510
        %v2513 = vlaneseq
        %v2514 = vshrl.u32 %v2513, 7
        %v2515 = vsub.s32 0, %v2514
        %v2516 = vrot.slane %v2511, %v2515
        %v2518 = vsel %vm677, %v2506, 0
        %2520 = vmatprep.subr.mxu0 0.0
        %2521 = vmatpush1.msra.mxu0 0.0
        %2522 = vmatprep.subr.mxu0 0.0
        %2523 = vmatpush1.msra.mxu0 0.0
        %2524 = vmatprep.subr.mxu0 0.0
        %2525 = vmatpush1.msra.mxu0 0.0
        %2526 = vmatprep.subr.mxu0 0.0
        %2527 = vmatpush1.msra.mxu0 0.0
        %2528 = vmatprep.subr.mxu0 0.0
        %2529 = vmatpush1.msra.mxu0 0.0
        %2530 = vmatprep.subr.mxu0 0.0
        %2531 = vmatpush1.msra.mxu0 0.0
        %2532 = vmatprep.subr.mxu0 0.0
        %2533 = vmatpush1.msra.mxu0 0.0
        %2534 = vmatprep.subr.mxu0 0.0
        %2535 = vmatpush1.msra.mxu0 0.0
        %2536 = vmatprep.subr.mxu0 0.0
        %2537 = vmatpush1.msra.mxu0 0.0
        %2538 = vmatprep.subr.mxu0 0.0
        %2539 = vmatpush1.msra.mxu0 0.0
        %2540 = vmatprep.subr.mxu0 0.0
        %2541 = vmatpush1.msra.mxu0 0.0
        %2542 = vmatprep.subr.mxu0 0.0
        %2543 = vmatpush1.msra.mxu0 0.0
        %2544 = vmatprep.subr.mxu0 %v2505
        %2545 = vmatpush1.msra.mxu0 %v2504
        %2546 = vmatprep.subr.mxu0 %v2503
        %2547 = vmatpush1.msra.mxu0 %v2502
        %2548 = vmatprep.subr.mxu0 %v2501
        %2549 = vmatpush1.msra.mxu0 %v2500
        %2550 = vmatprep.subr.mxu0 %v2499
        %2551 = vmatpush1.msra.mxu0 %v2498
        %2552 = vmatprep.subr.mxu0 0.0
        %2553 = vmatpush2.msra.mxu0 0.0
        %2554 = vmatprep.subr.mxu0 0.0
        %2555 = vmatpush2.msra.mxu0 0.0
        %2556 = vmatprep.subr.mxu0 0.0
        %2557 = vmatpush2.msra.mxu0 0.0
        %2558 = vmatprep.subr.mxu0 0.0
        %2559 = vmatpush2.msra.mxu0 0.0
        %2560 = vmatprep.subr.mxu0 0.0
        %2561 = vmatpush2.msra.mxu0 0.0
        %2562 = vmatprep.subr.mxu0 0.0
        %2563 = vmatpush2.msra.mxu0 0.0
        %2564 = vmatprep.subr.mxu0 0.0
        %2565 = vmatpush2.msra.mxu0 0.0
        %2566 = vmatprep.subr.mxu0 0.0
        %2567 = vmatpush2.msra.mxu0 0.0
        %2568 = vmatprep.subr.mxu0 0.0
        %2569 = vmatpush2.msra.mxu0 0.0
        %2570 = vmatprep.subr.mxu0 0.0
        %2571 = vmatpush2.msra.mxu0 0.0
        %2572 = vmatprep.subr.mxu0 0.0
        %2573 = vmatpush2.msra.mxu0 0.0
        %2574 = vmatprep.subr.mxu0 0.0
        %2575 = vmatpush2.msra.mxu0 0.0
        %2576 = vmatprep.subr.mxu0 0.0
        %2577 = vmatpush2.msra.mxu0 0.0
        %2578 = vmatprep.subr.mxu0 0.0
        %2579 = vmatpush2.msra.mxu0 0.0
        %2580 = vmatprep.subr.mxu0 0.0
        %2581 = vmatpush2.msra.mxu0 0.0
        %2582 = vmatprep.subr.mxu0 0.0
        %2583 = vmatpush2.msra.mxu0 0.0
        %2584 = vmatprep.mubr.f32.mxu0 0.0
        %2585 = vmatmul.mubr.f32.gmra.mxu0 %v2518
        %v2586 = vpop.f32.mrf.mxu0
        %v2587 = vadd.f32 %v2516, %v2586
        %v2588 = vpop.f32.mrf.mxu0
        %v2589 = vadd.f32 %v2516, %v2588
        %2590 = vdwg.mxu0
        %vm2591 = vcmask 122880
        %2592 = vst.msk [vmem:[#allocation4] sm:$0x1] %vm2591, %v2587
        %2594 = vrot.lane.b32.xlu0 %v2587, 112
        %v2595 = vpop.permute.xlu0 %2594
        %2597 = vst.msk [vmem:[#allocation4 + $0x1] sm:$0x1] %vm2591, %v2595
        %2598 = vrot.lane.b32.xlu0 %v2587, 96
        %v2599 = vpop.permute.xlu0 %2598
        %2601 = vst.msk [vmem:[#allocation4 + $0x2] sm:$0x1] %vm2591, %v2599
        %2602 = vrot.lane.b32.xlu0 %v2587, 80
        %v2603 = vpop.permute.xlu0 %2602
        %2605 = vst.msk [vmem:[#allocation4 + $0x3] sm:$0x1] %vm2591, %v2603
        %2606 = vrot.lane.b32.xlu0 %v2587, 64
        %v2607 = vpop.permute.xlu0 %2606
        %2609 = vst.msk [vmem:[#allocation4 + $0x4] sm:$0x1] %vm2591, %v2607
        %2610 = vrot.lane.b32.xlu0 %v2587, 48
        %v2611 = vpop.permute.xlu0 %2610
        %2613 = vst.msk [vmem:[#allocation4 + $0x5] sm:$0x1] %vm2591, %v2611
        %2614 = vrot.lane.b32.xlu0 %v2587, 32
        %v2615 = vpop.permute.xlu0 %2614
        %2617 = vst.msk [vmem:[#allocation4 + $0x6] sm:$0x1] %vm2591, %v2615
        %2618 = vrot.lane.b32.xlu0 %v2587, 16
        %v2619 = vpop.permute.xlu0 %2618
        %2621 = vst.msk [vmem:[#allocation4 + $0x7] sm:$0x1] %vm2591, %v2619
        %2622 = vst.msk [vmem:[#allocation4 + $0x8] sm:$0x1] %vm2591, %v2589
        %2624 = vrot.lane.b32.xlu0 %v2589, 112
        %v2625 = vpop.permute.xlu0 %2624
        %2627 = vst.msk [vmem:[#allocation4 + $0x9] sm:$0x1] %vm2591, %v2625
        %2628 = vrot.lane.b32.xlu0 %v2589, 96
        %v2629 = vpop.permute.xlu0 %2628
        %2631 = vst.msk [vmem:[#allocation4 + $0xa] sm:$0x1] %vm2591, %v2629
        %2632 = vrot.lane.b32.xlu0 %v2589, 80
        %v2633 = vpop.permute.xlu0 %2632
        %2635 = vst.msk [vmem:[#allocation4 + $0xb] sm:$0x1] %vm2591, %v2633
        %2636 = vrot.lane.b32.xlu0 %v2589, 64
        %v2637 = vpop.permute.xlu0 %2636
        %2639 = vst.msk [vmem:[#allocation4 + $0xc] sm:$0x1] %vm2591, %v2637
        %2640 = vrot.lane.b32.xlu0 %v2589, 48
        %v2641 = vpop.permute.xlu0 %2640
        %2643 = vst.msk [vmem:[#allocation4 + $0xd] sm:$0x1] %vm2591, %v2641
        %2644 = vrot.lane.b32.xlu0 %v2589, 32
        %v2645 = vpop.permute.xlu0 %2644
        %2647 = vst.msk [vmem:[#allocation4 + $0xe] sm:$0x1] %vm2591, %v2645
        %2648 = vrot.lane.b32.xlu0 %v2589, 16
        %v2649 = vpop.permute.xlu0 %2648
        %2651 = vst.msk [vmem:[#allocation4 + $0xf] sm:$0x1] %vm2591, %v2649
        %v2652 = vld [vmem:[#allocation4] sm:$0xff]
        %v2653 = vld [vmem:[#allocation4 + $0x8] sm:$0xff]
        %v2654 = vld [vmem:[%s16] sm:$0xff]
        %v2655 = vld [vmem:[%s16 + $0x8] sm:$0xff]
        %v2657 = vsel %vm571, %v2652, 0
        %v2660 = vsel %vm571, %v2653, 0
        %2662 = vmatprep.subr.mxu0 0.0
        %2663 = vmatpush1.msra.mxu0 0.0
        %2664 = vmatprep.subr.mxu0 0.0
        %2665 = vmatpush1.msra.mxu0 0.0
        %2666 = vmatprep.subr.mxu0 0.0
        %2667 = vmatpush1.msra.mxu0 0.0
        %2668 = vmatprep.subr.mxu0 0.0
        %2669 = vmatpush1.msra.mxu0 0.0
        %2670 = vmatprep.subr.mxu0 0.0
        %2671 = vmatpush1.msra.mxu0 0.0
        %2672 = vmatprep.subr.mxu0 0.0
        %2673 = vmatpush1.msra.mxu0 0.0
        %2674 = vmatprep.subr.mxu0 0.0
        %2675 = vmatpush1.msra.mxu0 0.0
        %2676 = vmatprep.subr.mxu0 0.0
        %2677 = vmatpush1.msra.mxu0 0.0
        %2678 = vmatprep.subr.mxu0 0.0
        %2679 = vmatpush1.msra.mxu0 0.0
        %2680 = vmatprep.subr.mxu0 0.0
        %2681 = vmatpush1.msra.mxu0 0.0
        %2682 = vmatprep.subr.mxu0 0.0
        %2683 = vmatpush1.msra.mxu0 0.0
        %2684 = vmatprep.subr.mxu0 0.0
        %2685 = vmatpush1.msra.mxu0 0.0
        %2686 = vmatprep.subr.mxu0 0.0
        %2687 = vmatpush1.msra.mxu0 0.0
        %2688 = vmatprep.subr.mxu0 0.0
        %2689 = vmatpush1.msra.mxu0 0.0
        %2690 = vmatprep.subr.mxu0 0.0
        %2691 = vmatpush1.msra.mxu0 %v2655
        %2692 = vmatprep.subr.mxu0 0.0
        %2693 = vmatpush1.msra.mxu0 %v2654
        %2694 = vmatprep.subr.mxu0 0.0
        %2695 = vmatpush2.msra.mxu0 0.0
        %2696 = vmatprep.subr.mxu0 0.0
        %2697 = vmatpush2.msra.mxu0 0.0
        %2698 = vmatprep.subr.mxu0 0.0
        %2699 = vmatpush2.msra.mxu0 0.0
        %2700 = vmatprep.subr.mxu0 0.0
        %2701 = vmatpush2.msra.mxu0 0.0
        %2702 = vmatprep.subr.mxu0 0.0
        %2703 = vmatpush2.msra.mxu0 0.0
        %2704 = vmatprep.subr.mxu0 0.0
        %2705 = vmatpush2.msra.mxu0 0.0
        %2706 = vmatprep.subr.mxu0 0.0
        %2707 = vmatpush2.msra.mxu0 0.0
        %2708 = vmatprep.subr.mxu0 0.0
        %2709 = vmatpush2.msra.mxu0 0.0
        %2710 = vmatprep.subr.mxu0 0.0
        %2711 = vmatpush2.msra.mxu0 0.0
        %2712 = vmatprep.subr.mxu0 0.0
        %2713 = vmatpush2.msra.mxu0 0.0
        %2714 = vmatprep.subr.mxu0 0.0
        %2715 = vmatpush2.msra.mxu0 0.0
        %2716 = vmatprep.subr.mxu0 0.0
        %2717 = vmatpush2.msra.mxu0 0.0
        %2718 = vmatprep.subr.mxu0 0.0
        %2719 = vmatpush2.msra.mxu0 0.0
        %2720 = vmatprep.subr.mxu0 0.0
        %2721 = vmatpush2.msra.mxu0 0.0
        %2722 = vmatprep.subr.mxu0 0.0
        %2723 = vmatpush2.msra.mxu0 0.0
        %2724 = vmatprep.subr.mxu0 0.0
        %2725 = vmatpush2.msra.mxu0 0.0
        %2726 = vmatprep.mubr.f32.mxu0 0.0
        %2727 = vmatmul.mubr.f32.gmra.mxu0 %v2657
        %v2728 = vpop.f32.mrf.mxu0
        %v2729 = vadd.f32 0.0, %v2728
        %v2730 = vpop.f32.mrf.mxu0
        %2731 = vmatprep.mubr.f32.mxu0 0.0
        %2732 = vmatmul.mubr.f32.gmra.mxu0 %v2660
        %v2733 = vpop.f32.mrf.mxu0
        %v2734 = vadd.f32 0.0, %v2733
        %v2735 = vpop.f32.mrf.mxu0
        %2736 = vdwg.mxu0
        %v2737 = vld [vmem:[%s15] sm:$0xff]
        %v2738 = vld [vmem:[%s15 + $0x8] sm:$0xff]
        %v2739 = vld [vmem:[%s15 + $0x10] sm:$0xff]
        %v2741 = vsel %vm571, %v2737, 0
        %v2744 = vsel %vm571, %v2738, 0
        %v2747 = vsel %vm571, %v2739, 0
        %2749 = vmatprep.subr.mxu0 0.0
        %2750 = vmatpush1.msra.mxu0 0.0
        %2751 = vmatprep.subr.mxu0 0.0
        %2752 = vmatpush1.msra.mxu0 0.0
        %2753 = vmatprep.subr.mxu0 0.0
        %2754 = vmatpush1.msra.mxu0 0.0
        %2755 = vmatprep.subr.mxu0 0.0
        %2756 = vmatpush1.msra.mxu0 0.0
        %2757 = vmatprep.subr.mxu0 0.0
        %2758 = vmatpush1.msra.mxu0 0.0
        %2759 = vmatprep.subr.mxu0 0.0
        %2760 = vmatpush1.msra.mxu0 0.0
        %2761 = vmatprep.subr.mxu0 0.0
        %2762 = vmatpush1.msra.mxu0 0.0
        %2763 = vmatprep.subr.mxu0 0.0
        %2764 = vmatpush1.msra.mxu0 0.0
        %2765 = vmatprep.subr.mxu0 0.0
        %2766 = vmatpush1.msra.mxu0 0.0
        %2767 = vmatprep.subr.mxu0 0.0
        %2768 = vmatpush1.msra.mxu0 0.0
        %2769 = vmatprep.subr.mxu0 0.0
        %2770 = vmatpush1.msra.mxu0 0.0
        %2771 = vmatprep.subr.mxu0 0.0
        %2772 = vmatpush1.msra.mxu0 0.0
        %2773 = vmatprep.subr.mxu0 0.0
        %2774 = vmatpush1.msra.mxu0 0.0
        %2775 = vmatprep.subr.mxu0 0.0
        %2776 = vmatpush1.msra.mxu0 0.0
        %2777 = vmatprep.subr.mxu0 0.0
        %2778 = vmatpush1.msra.mxu0 %v2734
        %2779 = vmatprep.subr.mxu0 0.0
        %2780 = vmatpush1.msra.mxu0 %v2729
        %2781 = vmatprep.subr.mxu0 0.0
        %2782 = vmatpush2.msra.mxu0 0.0
        %2783 = vmatprep.subr.mxu0 0.0
        %2784 = vmatpush2.msra.mxu0 0.0
        %2785 = vmatprep.subr.mxu0 0.0
        %2786 = vmatpush2.msra.mxu0 0.0
        %2787 = vmatprep.subr.mxu0 0.0
        %2788 = vmatpush2.msra.mxu0 0.0
        %2789 = vmatprep.subr.mxu0 0.0
        %2790 = vmatpush2.msra.mxu0 0.0
        %2791 = vmatprep.subr.mxu0 0.0
        %2792 = vmatpush2.msra.mxu0 0.0
        %2793 = vmatprep.subr.mxu0 0.0
        %2794 = vmatpush2.msra.mxu0 0.0
        %2795 = vmatprep.subr.mxu0 0.0
        %2796 = vmatpush2.msra.mxu0 0.0
        %2797 = vmatprep.subr.mxu0 0.0
        %2798 = vmatpush2.msra.mxu0 0.0
        %2799 = vmatprep.subr.mxu0 0.0
        %2800 = vmatpush2.msra.mxu0 0.0
        %2801 = vmatprep.subr.mxu0 0.0
        %2802 = vmatpush2.msra.mxu0 0.0
        %2803 = vmatprep.subr.mxu0 0.0
        %2804 = vmatpush2.msra.mxu0 0.0
        %2805 = vmatprep.subr.mxu0 0.0
        %2806 = vmatpush2.msra.mxu0 0.0
        %2807 = vmatprep.subr.mxu0 0.0
        %2808 = vmatpush2.msra.mxu0 0.0
        %2809 = vmatprep.subr.mxu0 0.0
        %2810 = vmatpush2.msra.mxu0 0.0
        %2811 = vmatprep.subr.mxu0 0.0
        %2812 = vmatpush2.msra.mxu0 0.0
        %2813 = vmatprep.mubr.f32.mxu0 0.0
        %2814 = vmatmul.mubr.f32.gmra.mxu0 %v2741
        %v2815 = vpop.f32.mrf.mxu0
        %v2816 = vadd.f32 0.0, %v2815
        %v2817 = vpop.f32.mrf.mxu0
        %2818 = vmatprep.mubr.f32.mxu0 0.0
        %2819 = vmatmul.mubr.f32.gmra.mxu0 %v2744
        %v2820 = vpop.f32.mrf.mxu0
        %v2821 = vadd.f32 0.0, %v2820
        %v2822 = vpop.f32.mrf.mxu0
        %2823 = vmatprep.mubr.f32.mxu0 0.0
        %2824 = vmatmul.mubr.f32.gmra.mxu0 %v2747
        %v2825 = vpop.f32.mrf.mxu0
        %v2826 = vadd.f32 0.0, %v2825
        %v2827 = vpop.f32.mrf.mxu0
        %2828 = vdwg.mxu0
        %2829 = vst [vmem:[%s545] sm:$0xff] %v2816
        %2830 = vst [vmem:[%s545 + $0x8] sm:$0xff] %v2821
        %2831 = vst [vmem:[%s545 + $0x10] sm:$0xff] %v2826
        %s2832 = sand.u32 %s405, 1
        %s2833 = scalar_lea.sflag [#allocation8], %s2832
        %s2834 = sand.u32 %s405, 1
        %s2835 = smul.addr %s2834, 24
        %s2836 = scalar_lea.vmem [#allocation7], %s2835
        // Predicated region
        $region89: #{tpu_custom_call.1} parent=87 // pred_check
          %p2837 = pneg %p415
        $region90: #{tpu_custom_call.1} parent=87 // pred_check_branch
          %2839 = sbr.rel (%p2837) target = $region92
        $region91: #{tpu_custom_call.1} parent=87 // pred_region
          %s2841 = ssub.s32 384, 384
          %2842 = vsyncadd %s2833, %s2841
          %s2843 = smul.addr %s35, 3
          %s2844 = smul.addr %s2843, 128
          %s2845 = scalar_lea.hbm %s17, %s2844
          %s2846 = sshll.u32 %s2836, 4
          %s2847 = int_to_ptr.vmem [resolvable:$true] %s2846
          %2852 = dma.vmem_to_hbm [thread:$0]  %s2847, 384, %s2845, %s2833, 128, 128, 8
        $region92: #{tpu_custom_call.1} parent=87 // pred_fallthru
          _
      $region88: #{tpu_custom_call.1} parent=5 // pred_fallthru
        _
      %p2853 = scmp.le.s32.totalorder 2, %s30
      // Predicated region
      $region93: #{tpu_custom_call.1} parent=5 // pred_check
        %p2854 = pneg %p2853
      $region94: #{tpu_custom_call.1} parent=5 // pred_check_branch
        %2856 = sbr.rel (%p2854) target = $region96
      $region95: #{tpu_custom_call.1} parent=5 // pred_region
        %s2857 = ssub.s32 %s30, 2
        // Predicated region
        $region97: #{tpu_custom_call.1} parent=95 // pred_check
          %p2858 = pneg %p421
        $region98: #{tpu_custom_call.1} parent=95 // pred_check_branch
          %2860 = sbr.rel (%p2858) target = $region100
        $region99: #{tpu_custom_call.1} parent=95 // pred_region
          %s2861 = sand.u32 %s406, 1
          %s2862 = scalar_lea.sflag [#allocation8], %s2861
          %s2863 = sand.u32 %s406, 1
          %s2864 = smul.addr %s2863, 24
          %s2865 = scalar_lea.vmem [#allocation7], %s2864
          %2866 = dma.done %s2862, 384
        $region100: #{tpu_custom_call.1} parent=95 // pred_fallthru
          _
      $region96: #{tpu_custom_call.1} parent=5 // pred_fallthru
        _
    $region6: #{tpu_custom_call.1} parent=1 // loop_footer
      %s34 = sadd.s32 1, %s30
    $region7: #{tpu_custom_call.1} parent=1 // loop_footer_branch
      %29 = sbr.rel target = $region3
    $region8: #{tpu_custom_call.1} parent=1 // loop_exit
      _
    %2867 = vsyncpa [#allocation8], 1
    %s2868 = scalar_lea.sflag [#allocation8], 1
    %2869 = vsyncpa %s2868, 1

</llo_original>
